<compile_context>
chip_gen: v7x
topology: tpu7x:2x2x1
jax: 0.10.0
libtpu: 0.0.40
codegen_flags: <defaults>
</compile_context>

<pallas_src>
import functools
import math

import jax
import jax.numpy as jnp
from jax.experimental import pallas as pl
from jax.experimental.pallas import tpu as pltpu


# ---------------------------------------------------------------------------
# Fused Pallas kernel
# ---------------------------------------------------------------------------
def _elu(z):
    # ELU(alpha=1).  exp(min(z,0)) keeps exp off large positive z (no inf).
    # TODO(synk): jnp.expm1 would add a little precision near 0 if preferred.
    return jnp.where(z > 0, z, jnp.exp(jnp.minimum(z, 0.0)) - 1.0)


def _pool_max4(y):
    # y: (M, 128) where the result of 2x2-pool tap p (p=0..3) for channel c
    # lives in lane 32*p + c.  Two lane rotations (XLU) + elementwise max give
    # the 4-way max over {c, c+32, c+64, c+96}, replicated into every lane.
    t = jnp.maximum(y, pltpu.roll(y, shift=64, axis=1))
    return jnp.maximum(t, pltpu.roll(t, shift=32, axis=1))


def _fused_kernel(r1_ref, w1_ref, s1_ref, t1_ref,
                  w2_ref, s2_ref, t2_ref,
                  wfc1_ref, bfc1_ref, wfc2_ref, bfc2_ref,
                  o_ref):
    # Per grid step (one batch tile of TB images):
    #   r1_ref : (36*TB, 49) bf16  7x7 receptive field of each pooled pixel,
    #                              rows ordered pixel-major / image-minor
    #   w1_ref : (49, 128)   bf16  conv1 taps embedded at the 4 pool offsets
    #   s1/t1  : (1, 128)    f32   folded BN1 scale / shift (+conv1 bias)
    #   w2_ref : (4608, 128) bf16  conv2 taps embedded at the 4 pool offsets
    #   s2/t2  : (1, 128)    f32   folded BN2 scale / shift (+conv2 bias)
    #   wfc1/bfc1, wfc2/bfc2 : f32, lane-padded fc1 / fc2
    #   o_ref  : (TB, 128)   f32   logits in columns 0..9
    tb = o_ref.shape[0]
    nq = r1_ref.shape[0] // tb          # 36 pooled pixels per image

    # -- layer 1: conv1 + 2x2 max-pool + BN1 + ELU as ONE MXU matmul ----------
    y1 = jnp.dot(r1_ref[...], w1_ref[...], preferred_element_type=jnp.float32)
    h1 = _elu(_pool_max4(y1) * s1_ref[...] + t1_ref[...])       # (36*TB, 128)
    h1 = h1.astype(jnp.bfloat16)                                # cols >=10 are 0

    # -- layer 2: conv2 + 2x2 max-pool + BN2 + ELU as ONE MXU matmul ----------
    # Gather the 36 pooled pixels of each image into one lane-dense row.
    # Rows are pixel-major / image-minor, so these are tile-aligned row
    # slices and the concatenation is 128-lane aligned (no masked shuffles).
    feat_rows = jnp.concatenate(
        [h1[q * tb:(q + 1) * tb, :] for q in range(nq)], axis=1)  # (TB, 4608)
    y2 = jnp.dot(feat_rows, w2_ref[...], preferred_element_type=jnp.float32)
    feat = _elu(_pool_max4(y2) * s2_ref[...] + t2_ref[...])       # (TB, 128)

    # -- head: fc1 -> ELU -> fc2 (f32, lane-padded to 128 output columns) -----
    h = _elu(jnp.dot(feat, wfc1_ref[...], preferred_element_type=jnp.float32)
             + bfc1_ref[...])
    o_ref[...] = (jnp.dot(h, wfc2_ref[...], preferred_element_type=jnp.float32)
                  + bfc2_ref[...])


# ---------------------------------------------------------------------------
# Wrapper: weight folding (once) + receptive-field gather + pallas_call
# ---------------------------------------------------------------------------
def _prep_weights(params):
    """Fold conv taps + pool offsets + BN into lane-dense matmul slabs."""
    eps = params['bn_eps']
    f32 = jnp.float32

    # conv1 (5x5, stride 2): embed into the 7x7 receptive-field frame of each
    # pooled pixel, once per 2x2-pool offset -> column layout [32*pos + c].
    w1 = params['conv1_w'][:, :, 0, :]                          # (5, 5, 10)
    w1cat = jnp.zeros((4, 7, 7, 32), f32)
    for pi in range(2):
        for pj in range(2):
            pos = 2 * pi + pj
            w1cat = w1cat.at[pos, 2 * pi:2 * pi + 5,
                             2 * pj:2 * pj + 5, :10].set(w1)
    w1cat = w1cat.reshape(4, 49, 32).transpose(1, 0, 2).reshape(49, 128)

    scale1 = params['bn1_gamma'] / jnp.sqrt(params['bn1_var'] + eps)
    shift1 = params['bn1_beta'] + (params['conv1_b'] - params['bn1_mean']) * scale1
    s1 = jnp.zeros((1, 128), f32).at[0, :10].set(scale1)
    t1 = jnp.zeros((1, 128), f32).at[0, :10].set(shift1)

    # conv2 (5x5, stride 1): embed into the full 6x6 x 128-channel pooled
    # feature frame, once per 2x2-pool offset -> row layout [128*(6i+j) + c1].
    w2 = params['conv2_w']                                      # (5, 5, 10, 20)
    w2cat = jnp.zeros((4, 6, 6, 128, 32), f32)
    for oh in range(2):
        for ow in range(2):
            pos = 2 * oh + ow
            w2cat = w2cat.at[pos, oh:oh + 5, ow:ow + 5, :10, :20].set(w2)
    w2cat = (w2cat.reshape(4, 36 * 128, 32)
             .transpose(1, 0, 2).reshape(36 * 128, 128))

    scale2 = params['bn2_gamma'] / jnp.sqrt(params['bn2_var'] + eps)
    shift2 = params['bn2_beta'] + (params['conv2_b'] - params['bn2_mean']) * scale2
    s2 = jnp.zeros((1, 128), f32).at[0, :20].set(scale2)
    t2 = jnp.zeros((1, 128), f32).at[0, :20].set(shift2)

    wfc1 = jnp.zeros((128, 128), f32).at[:20, :20].set(params['fc1_w'])
    bfc1 = jnp.zeros((1, 128), f32).at[0, :20].set(params['fc1_b'])
    wfc2 = jnp.zeros((128, 128), f32).at[:20, :10].set(params['fc2_w'])
    bfc2 = jnp.zeros((1, 128), f32).at[0, :10].set(params['fc2_b'])

    return (w1cat.astype(jnp.bfloat16), s1, t1,
            w2cat.astype(jnp.bfloat16), s2, t2,
            wfc1, bfc1, wfc2, bfc2)


def conv_forward(x_nchw, params, *, batch_tile=16):
    assert batch_tile % 8 == 0, "batch_tile must be a multiple of 8"
    N = x_nchw.shape[0]
    TB = batch_tile
    G = -(-N // TB)
    Npad = G * TB

    (w1cat, s1, t1, w2cat, s2, t2,
     wfc1, bfc1, wfc2, bfc2) = _prep_weights(params)

    # (N,1,28,28) NCHW -> (Npad,28,28), batch zero-padded to a tile multiple.
    img = x_nchw.reshape(N, 28, 28)
    if Npad != N:
        img = jnp.pad(img, ((0, Npad - N), (0, 0), (0, 0)))

    # Receptive-field gather: pooled layer-1 pixel (ph, pw) reads the 7x7
    # input window at (4ph, 4pw).  This is the only wrapper-side patch work
    # (2.25x the raw input bytes, no 25x im2col, no 6-D pool transpose); the
    # conv taps and pool offsets live in w1cat instead.
    rf = []
    for r in range(7):
        for c in range(7):
            rf.append(jax.lax.slice(img, (0, r, c),
                                    (Npad, r + 21, c + 21), (1, 4, 4)))
    r1 = jnp.stack(rf, axis=-1)                       # (Npad, 6, 6, 49)
    r1 = (r1.reshape(G, TB, 36, 49)
          .transpose(0, 2, 1, 3)                      # pixel-major, image-minor
          .reshape(G, 36 * TB, 49)
          .astype(jnp.bfloat16))

    flops = 2 * Npad * (36 * 49 * 128 + 36 * 128 * 128 + 2 * 128 * 128)
    transcendentals = Npad * (36 * 128 + 2 * 128)
    bytes_accessed = (r1.size * 2 + w1cat.size * 2 + w2cat.size * 2
                      + (wfc1.size + wfc2.size) * 4 + 6 * 128 * 4
                      + Npad * 128 * 4)

    out = pl.pallas_call(
        _fused_kernel,
        out_shape=jax.ShapeDtypeStruct((Npad, 128), jnp.float32),
        grid=(G,),
        in_specs=[
            pl.BlockSpec((None, 36 * TB, 49), lambda i: (i, 0, 0)),
            pl.BlockSpec((49, 128), lambda i: (0, 0)),
            pl.BlockSpec((1, 128), lambda i: (0, 0)),
            pl.BlockSpec((1, 128), lambda i: (0, 0)),
            pl.BlockSpec((36 * 128, 128), lambda i: (0, 0)),
            pl.BlockSpec((1, 128), lambda i: (0, 0)),
            pl.BlockSpec((1, 128), lambda i: (0, 0)),
            pl.BlockSpec((128, 128), lambda i: (0, 0)),
            pl.BlockSpec((1, 128), lambda i: (0, 0)),
            pl.BlockSpec((128, 128), lambda i: (0, 0)),
            pl.BlockSpec((1, 128), lambda i: (0, 0)),
        ],
        out_specs=pl.BlockSpec((TB, 128), lambda i: (i, 0)),
        compiler_params=pltpu.CompilerParams(
            dimension_semantics=("parallel",)),
        cost_estimate=pl.CostEstimate(
            flops=flops, transcendentals=transcendentals,
            bytes_accessed=bytes_accessed),
    )(r1, w1cat, s1, t1, w2cat, s2, t2, wfc1, bfc1, wfc2, bfc2)

    return out[:N, :10]


# ---------------------------------------------------------------------------
# Pure-JAX reference (same eval-mode semantics) for correctness checking
# ---------------------------------------------------------------------------
def reference_forward(x_nchw, params):
    eps = params['bn_eps']
    x = jnp.transpose(x_nchw, (0, 2, 3, 1))

    def conv(x, w, b, stride):
        y = jax.lax.conv_general_dilated(
            x, w, window_strides=(stride, stride), padding='VALID',
            dimension_numbers=('NHWC', 'HWIO', 'NHWC'))
        return y + b

    def maxpool2(y):
        return jax.lax.reduce_window(y, -jnp.inf, jax.lax.max,
                                     (1, 2, 2, 1), (1, 2, 2, 1), 'VALID')

    def bn(y, gamma, beta, mean, var):
        return (y - mean) / jnp.sqrt(var + eps) * gamma + beta

    elu = jax.nn.elu
    y = conv(x, params['conv1_w'], params['conv1_b'], 2)
    y = elu(bn(maxpool2(y), params['bn1_gamma'], params['bn1_beta'],
               params['bn1_mean'], params['bn1_var']))
    y = conv(y, params['conv2_w'], params['conv2_b'], 1)
    y = elu(bn(maxpool2(y), params['bn2_gamma'], params['bn2_beta'],
               params['bn2_mean'], params['bn2_var']))
    feat = y.reshape(-1, 20)
    h = elu(feat @ params['fc1_w'] + params['fc1_b'])
    return h @ params['fc2_w'] + params['fc2_b']


if __name__ == "__main__":
    key = jax.random.PRNGKey(0)
    ks = jax.random.split(key, 10)

    def u(k, shape, fan_in):
        bound = 1.0 / math.sqrt(fan_in)
        return jax.random.uniform(k, shape, jnp.float32, -bound, bound)

    params = dict(
        conv1_w=u(ks[0], (5, 5, 1, 10), 25),      # HWIO
        conv1_b=u(ks[1], (10,), 25),
        conv2_w=u(ks[2], (5, 5, 10, 20), 250),    # HWIO
        conv2_b=u(ks[3], (20,), 250),
        bn1_gamma=jnp.ones((10,), jnp.float32), bn1_beta=jnp.zeros((10,), jnp.float32),
        bn1_mean=jnp.zeros((10,), jnp.float32), bn1_var=jnp.ones((10,), jnp.float32),
        bn2_gamma=jnp.ones((20,), jnp.float32), bn2_beta=jnp.zeros((20,), jnp.float32),
        bn2_mean=jnp.zeros((20,), jnp.float32), bn2_var=jnp.ones((20,), jnp.float32),
        bn_eps=jnp.float32(1e-5),
        fc1_w=u(ks[4], (20, 20), 20), fc1_b=u(ks[5], (20,), 20),   # (in, out)
        fc2_w=u(ks[6], (20, 10), 20), fc2_b=u(ks[7], (10,), 20),   # (in, out)
    )

    # MNIST-shaped input (28x28 is required so that x.view(-1, 20) is (N, 20)).
    N = 32                                            # two batch tiles -> grid=(2,)
    x = jax.random.normal(ks[8], (N, 1, 28, 28), jnp.float32)      # NCHW

    fwd = jax.jit(functools.partial(conv_forward, batch_tile=16))
    out = jax.block_until_ready(fwd(x, params))
    ref = jax.block_until_ready(reference_forward(x, params))

    assert out.shape == (N, 10), out.shape
    assert jnp.allclose(out, ref, atol=2e-2, rtol=2e-2), (
        "max abs err", float(jnp.max(jnp.abs(out - ref))))
    print("KERNEL_OK")
</pallas_src>

<mosaic_0001>
module attributes {stable_mosaic.version = 11 : i64} {
  func.func @_fused_kernel(%arg0: i32, %arg1: memref<1x576x49xbf16, #tpu.memory_space<vmem>>, %arg2: memref<49x128xbf16, #tpu.memory_space<vmem>>, %arg3: memref<1x128xf32, #tpu.memory_space<vmem>>, %arg4: memref<1x128xf32, #tpu.memory_space<vmem>>, %arg5: memref<4608x128xbf16, #tpu.memory_space<vmem>>, %arg6: memref<1x128xf32, #tpu.memory_space<vmem>>, %arg7: memref<1x128xf32, #tpu.memory_space<vmem>>, %arg8: memref<128x128xf32, #tpu.memory_space<vmem>>, %arg9: memref<1x128xf32, #tpu.memory_space<vmem>>, %arg10: memref<128x128xf32, #tpu.memory_space<vmem>>, %arg11: memref<1x128xf32, #tpu.memory_space<vmem>>, %arg12: memref<16x128xf32, #tpu.memory_space<vmem>>) attributes {dimension_semantics = [#tpu.dimension_semantics<parallel>], iteration_bounds = array<i64: 2>, scalar_prefetch = 0 : i64, scratch_operands = 0 : i64, tpu.core_type = #tpu.core_type<tc>, window_params = [{transform_indices = @transform_0, window_bounds = array<i64: 1, 576, 49>}, {pipeline_mode = #tpu.pipeline_mode<synchronous>, transform_indices = @transform_1, window_bounds = array<i64: 49, 128>}, {pipeline_mode = #tpu.pipeline_mode<synchronous>, transform_indices = @transform_2, window_bounds = array<i64: 1, 128>}, {pipeline_mode = #tpu.pipeline_mode<synchronous>, transform_indices = @transform_3, window_bounds = array<i64: 1, 128>}, {pipeline_mode = #tpu.pipeline_mode<synchronous>, transform_indices = @transform_4, window_bounds = array<i64: 4608, 128>}, {pipeline_mode = #tpu.pipeline_mode<synchronous>, transform_indices = @transform_5, window_bounds = array<i64: 1, 128>}, {pipeline_mode = #tpu.pipeline_mode<synchronous>, transform_indices = @transform_6, window_bounds = array<i64: 1, 128>}, {pipeline_mode = #tpu.pipeline_mode<synchronous>, transform_indices = @transform_7, window_bounds = array<i64: 128, 128>}, {pipeline_mode = #tpu.pipeline_mode<synchronous>, transform_indices = @transform_8, window_bounds = array<i64: 1, 128>}, {pipeline_mode = #tpu.pipeline_mode<synchronous>, transform_indices = @transform_9, window_bounds = array<i64: 128, 128>}, {pipeline_mode = #tpu.pipeline_mode<synchronous>, transform_indices = @transform_10, window_bounds = array<i64: 1, 128>}, {transform_indices = @transform_11, window_bounds = array<i64: 16, 128>}]} {
    %c0 = arith.constant 0 : index
    %c0_0 = arith.constant 0 : index
    %c0_1 = arith.constant 0 : index
    %0 = vector.load %arg1[%c0, %c0_0, %c0_1] : memref<1x576x49xbf16, #tpu.memory_space<vmem>>, vector<1x576x49xbf16>
    %1 = vector.shape_cast %0 : vector<1x576x49xbf16> to vector<576x49xbf16>
    %c0_2 = arith.constant 0 : index
    %c0_3 = arith.constant 0 : index
    %2 = vector.load %arg2[%c0_2, %c0_3] : memref<49x128xbf16, #tpu.memory_space<vmem>>, vector<49x128xbf16>
    %cst = arith.constant dense<0.000000e+00> : vector<576x128xf32>
    %3 = tpu.matmul %1, %2, %cst {dimension_numbers = #tpu.dot_dimension_numbers<[1], [0], [0], [1], [0, 0, 1, 1], [], []>} : vector<576x49xbf16>, vector<49x128xbf16>, vector<576x128xf32> -> vector<576x128xf32>
    %c64_i32 = arith.constant 64 : i32
    %4 = tpu.dynamic_rotate %3 by %c64_i32 dim 1 : vector<576x128xf32>, i32 -> vector<576x128xf32>
    %5 = arith.maximumf %3, %4 : vector<576x128xf32>
    %c32_i32 = arith.constant 32 : i32
    %6 = tpu.dynamic_rotate %5 by %c32_i32 dim 1 : vector<576x128xf32>, i32 -> vector<576x128xf32>
    %7 = arith.maximumf %5, %6 : vector<576x128xf32>
    %c0_4 = arith.constant 0 : index
    %c0_5 = arith.constant 0 : index
    %8 = vector.load %arg3[%c0_4, %c0_5] : memref<1x128xf32, #tpu.memory_space<vmem>>, vector<1x128xf32>
    %9 = vector.broadcast %8 : vector<1x128xf32> to vector<576x128xf32>
    %10 = arith.mulf %7, %9 : vector<576x128xf32>
    %c0_6 = arith.constant 0 : index
    %c0_7 = arith.constant 0 : index
    %11 = vector.load %arg4[%c0_6, %c0_7] : memref<1x128xf32, #tpu.memory_space<vmem>>, vector<1x128xf32>
    %12 = vector.broadcast %11 : vector<1x128xf32> to vector<576x128xf32>
    %13 = arith.addf %10, %12 : vector<576x128xf32>
    %cst_8 = arith.constant 0.000000e+00 : f32
    %14 = vector.broadcast %cst_8 : f32 to vector<576x128xf32>
    %15 = arith.cmpf ogt, %13, %14 : vector<576x128xf32>
    %cst_9 = arith.constant 0.000000e+00 : f32
    %16 = vector.broadcast %cst_9 : f32 to vector<576x128xf32>
    %17 = arith.minimumf %13, %16 : vector<576x128xf32>
    %18 = math.exp %17 : vector<576x128xf32>
    %cst_10 = arith.constant 1.000000e+00 : f32
    %19 = vector.broadcast %cst_10 : f32 to vector<576x128xf32>
    %20 = arith.subf %18, %19 : vector<576x128xf32>
    %21 = arith.select %15, %13, %20 : vector<576x128xi1>, vector<576x128xf32>
    %22 = arith.truncf %21 : vector<576x128xf32> to vector<576x128xbf16>
    %23 = vector.extract_strided_slice %22 {offsets = [0, 0], sizes = [16, 128], strides = [1, 1]} : vector<576x128xbf16> to vector<16x128xbf16>
    %24 = vector.extract_strided_slice %22 {offsets = [16, 0], sizes = [16, 128], strides = [1, 1]} : vector<576x128xbf16> to vector<16x128xbf16>
    %25 = vector.extract_strided_slice %22 {offsets = [32, 0], sizes = [16, 128], strides = [1, 1]} : vector<576x128xbf16> to vector<16x128xbf16>
    %26 = vector.extract_strided_slice %22 {offsets = [48, 0], sizes = [16, 128], strides = [1, 1]} : vector<576x128xbf16> to vector<16x128xbf16>
    %27 = vector.extract_strided_slice %22 {offsets = [64, 0], sizes = [16, 128], strides = [1, 1]} : vector<576x128xbf16> to vector<16x128xbf16>
    %28 = vector.extract_strided_slice %22 {offsets = [80, 0], sizes = [16, 128], strides = [1, 1]} : vector<576x128xbf16> to vector<16x128xbf16>
    %29 = vector.extract_strided_slice %22 {offsets = [96, 0], sizes = [16, 128], strides = [1, 1]} : vector<576x128xbf16> to vector<16x128xbf16>
    %30 = vector.extract_strided_slice %22 {offsets = [112, 0], sizes = [16, 128], strides = [1, 1]} : vector<576x128xbf16> to vector<16x128xbf16>
    %31 = vector.extract_strided_slice %22 {offsets = [128, 0], sizes = [16, 128], strides = [1, 1]} : vector<576x128xbf16> to vector<16x128xbf16>
    %32 = vector.extract_strided_slice %22 {offsets = [144, 0], sizes = [16, 128], strides = [1, 1]} : vector<576x128xbf16> to vector<16x128xbf16>
    %33 = vector.extract_strided_slice %22 {offsets = [160, 0], sizes = [16, 128], strides = [1, 1]} : vector<576x128xbf16> to vector<16x128xbf16>
    %34 = vector.extract_strided_slice %22 {offsets = [176, 0], sizes = [16, 128], strides = [1, 1]} : vector<576x128xbf16> to vector<16x128xbf16>
    %35 = vector.extract_strided_slice %22 {offsets = [192, 0], sizes = [16, 128], strides = [1, 1]} : vector<576x128xbf16> to vector<16x128xbf16>
    %36 = vector.extract_strided_slice %22 {offsets = [208, 0], sizes = [16, 128], strides = [1, 1]} : vector<576x128xbf16> to vector<16x128xbf16>
    %37 = vector.extract_strided_slice %22 {offsets = [224, 0], sizes = [16, 128], strides = [1, 1]} : vector<576x128xbf16> to vector<16x128xbf16>
    %38 = vector.extract_strided_slice %22 {offsets = [240, 0], sizes = [16, 128], strides = [1, 1]} : vector<576x128xbf16> to vector<16x128xbf16>
    %39 = vector.extract_strided_slice %22 {offsets = [256, 0], sizes = [16, 128], strides = [1, 1]} : vector<576x128xbf16> to vector<16x128xbf16>
    %40 = vector.extract_strided_slice %22 {offsets = [272, 0], sizes = [16, 128], strides = [1, 1]} : vector<576x128xbf16> to vector<16x128xbf16>
    %41 = vector.extract_strided_slice %22 {offsets = [288, 0], sizes = [16, 128], strides = [1, 1]} : vector<576x128xbf16> to vector<16x128xbf16>
    %42 = vector.extract_strided_slice %22 {offsets = [304, 0], sizes = [16, 128], strides = [1, 1]} : vector<576x128xbf16> to vector<16x128xbf16>
    %43 = vector.extract_strided_slice %22 {offsets = [320, 0], sizes = [16, 128], strides = [1, 1]} : vector<576x128xbf16> to vector<16x128xbf16>
    %44 = vector.extract_strided_slice %22 {offsets = [336, 0], sizes = [16, 128], strides = [1, 1]} : vector<576x128xbf16> to vector<16x128xbf16>
    %45 = vector.extract_strided_slice %22 {offsets = [352, 0], sizes = [16, 128], strides = [1, 1]} : vector<576x128xbf16> to vector<16x128xbf16>
    %46 = vector.extract_strided_slice %22 {offsets = [368, 0], sizes = [16, 128], strides = [1, 1]} : vector<576x128xbf16> to vector<16x128xbf16>
    %47 = vector.extract_strided_slice %22 {offsets = [384, 0], sizes = [16, 128], strides = [1, 1]} : vector<576x128xbf16> to vector<16x128xbf16>
    %48 = vector.extract_strided_slice %22 {offsets = [400, 0], sizes = [16, 128], strides = [1, 1]} : vector<576x128xbf16> to vector<16x128xbf16>
    %49 = vector.extract_strided_slice %22 {offsets = [416, 0], sizes = [16, 128], strides = [1, 1]} : vector<576x128xbf16> to vector<16x128xbf16>
    %50 = vector.extract_strided_slice %22 {offsets = [432, 0], sizes = [16, 128], strides = [1, 1]} : vector<576x128xbf16> to vector<16x128xbf16>
    %51 = vector.extract_strided_slice %22 {offsets = [448, 0], sizes = [16, 128], strides = [1, 1]} : vector<576x128xbf16> to vector<16x128xbf16>
    %52 = vector.extract_strided_slice %22 {offsets = [464, 0], sizes = [16, 128], strides = [1, 1]} : vector<576x128xbf16> to vector<16x128xbf16>
    %53 = vector.extract_strided_slice %22 {offsets = [480, 0], sizes = [16, 128], strides = [1, 1]} : vector<576x128xbf16> to vector<16x128xbf16>
    %54 = vector.extract_strided_slice %22 {offsets = [496, 0], sizes = [16, 128], strides = [1, 1]} : vector<576x128xbf16> to vector<16x128xbf16>
    %55 = vector.extract_strided_slice %22 {offsets = [512, 0], sizes = [16, 128], strides = [1, 1]} : vector<576x128xbf16> to vector<16x128xbf16>
    %56 = vector.extract_strided_slice %22 {offsets = [528, 0], sizes = [16, 128], strides = [1, 1]} : vector<576x128xbf16> to vector<16x128xbf16>
    %57 = vector.extract_strided_slice %22 {offsets = [544, 0], sizes = [16, 128], strides = [1, 1]} : vector<576x128xbf16> to vector<16x128xbf16>
    %58 = vector.extract_strided_slice %22 {offsets = [560, 0], sizes = [16, 128], strides = [1, 1]} : vector<576x128xbf16> to vector<16x128xbf16>
    %59 = tpu.concatenate %23, %24, %25, %26, %27, %28, %29, %30, %31, %32, %33, %34, %35, %36, %37, %38 in 1 : vector<16x128xbf16>, vector<16x128xbf16>, vector<16x128xbf16>, vector<16x128xbf16>, vector<16x128xbf16>, vector<16x128xbf16>, vector<16x128xbf16>, vector<16x128xbf16>, vector<16x128xbf16>, vector<16x128xbf16>, vector<16x128xbf16>, vector<16x128xbf16>, vector<16x128xbf16>, vector<16x128xbf16>, vector<16x128xbf16>, vector<16x128xbf16> -> vector<16x2048xbf16>
    %60 = tpu.concatenate %39, %40, %41, %42, %43, %44, %45, %46, %47, %48, %49, %50, %51, %52, %53, %54 in 1 : vector<16x128xbf16>, vector<16x128xbf16>, vector<16x128xbf16>, vector<16x128xbf16>, vector<16x128xbf16>, vector<16x128xbf16>, vector<16x128xbf16>, vector<16x128xbf16>, vector<16x128xbf16>, vector<16x128xbf16>, vector<16x128xbf16>, vector<16x128xbf16>, vector<16x128xbf16>, vector<16x128xbf16>, vector<16x128xbf16>, vector<16x128xbf16> -> vector<16x2048xbf16>
    %61 = tpu.concatenate %55, %56, %57, %58 in 1 : vector<16x128xbf16>, vector<16x128xbf16>, vector<16x128xbf16>, vector<16x128xbf16> -> vector<16x512xbf16>
    %62 = tpu.concatenate %59, %60, %61 in 1 : vector<16x2048xbf16>, vector<16x2048xbf16>, vector<16x512xbf16> -> vector<16x4608xbf16>
    %c0_11 = arith.constant 0 : index
    %c0_12 = arith.constant 0 : index
    %63 = vector.load %arg5[%c0_11, %c0_12] : memref<4608x128xbf16, #tpu.memory_space<vmem>>, vector<4608x128xbf16>
    %cst_13 = arith.constant dense<0.000000e+00> : vector<16x128xf32>
    %64 = tpu.matmul %62, %63, %cst_13 {dimension_numbers = #tpu.dot_dimension_numbers<[1], [0], [0], [1], [0, 0, 1, 1], [], []>} : vector<16x4608xbf16>, vector<4608x128xbf16>, vector<16x128xf32> -> vector<16x128xf32>
    %c64_i32_14 = arith.constant 64 : i32
    %65 = tpu.dynamic_rotate %64 by %c64_i32_14 dim 1 : vector<16x128xf32>, i32 -> vector<16x128xf32>
    %66 = arith.maximumf %64, %65 : vector<16x128xf32>
    %c32_i32_15 = arith.constant 32 : i32
    %67 = tpu.dynamic_rotate %66 by %c32_i32_15 dim 1 : vector<16x128xf32>, i32 -> vector<16x128xf32>
    %68 = arith.maximumf %66, %67 : vector<16x128xf32>
    %c0_16 = arith.constant 0 : index
    %c0_17 = arith.constant 0 : index
    %69 = vector.load %arg6[%c0_16, %c0_17] : memref<1x128xf32, #tpu.memory_space<vmem>>, vector<1x128xf32>
    %70 = vector.broadcast %69 : vector<1x128xf32> to vector<16x128xf32>
    %71 = arith.mulf %68, %70 : vector<16x128xf32>
    %c0_18 = arith.constant 0 : index
    %c0_19 = arith.constant 0 : index
    %72 = vector.load %arg7[%c0_18, %c0_19] : memref<1x128xf32, #tpu.memory_space<vmem>>, vector<1x128xf32>
    %73 = vector.broadcast %72 : vector<1x128xf32> to vector<16x128xf32>
    %74 = arith.addf %71, %73 : vector<16x128xf32>
    %cst_20 = arith.constant 0.000000e+00 : f32
    %75 = vector.broadcast %cst_20 : f32 to vector<16x128xf32>
    %76 = arith.cmpf ogt, %74, %75 : vector<16x128xf32>
    %cst_21 = arith.constant 0.000000e+00 : f32
    %77 = vector.broadcast %cst_21 : f32 to vector<16x128xf32>
    %78 = arith.minimumf %74, %77 : vector<16x128xf32>
    %79 = math.exp %78 : vector<16x128xf32>
    %cst_22 = arith.constant 1.000000e+00 : f32
    %80 = vector.broadcast %cst_22 : f32 to vector<16x128xf32>
    %81 = arith.subf %79, %80 : vector<16x128xf32>
    %82 = arith.select %76, %74, %81 : vector<16x128xi1>, vector<16x128xf32>
    %c0_23 = arith.constant 0 : index
    %c0_24 = arith.constant 0 : index
    %83 = vector.load %arg8[%c0_23, %c0_24] : memref<128x128xf32, #tpu.memory_space<vmem>>, vector<128x128xf32>
    %cst_25 = arith.constant dense<0.000000e+00> : vector<16x128xf32>
    %84 = tpu.matmul %82, %83, %cst_25 {dimension_numbers = #tpu.dot_dimension_numbers<[1], [0], [0], [1], [0, 0, 1, 1], [], []>} : vector<16x128xf32>, vector<128x128xf32>, vector<16x128xf32> -> vector<16x128xf32>
    %c0_26 = arith.constant 0 : index
    %c0_27 = arith.constant 0 : index
    %85 = vector.load %arg9[%c0_26, %c0_27] : memref<1x128xf32, #tpu.memory_space<vmem>>, vector<1x128xf32>
    %86 = vector.broadcast %85 : vector<1x128xf32> to vector<16x128xf32>
    %87 = arith.addf %84, %86 : vector<16x128xf32>
    %cst_28 = arith.constant 0.000000e+00 : f32
    %88 = vector.broadcast %cst_28 : f32 to vector<16x128xf32>
    %89 = arith.cmpf ogt, %87, %88 : vector<16x128xf32>
    %cst_29 = arith.constant 0.000000e+00 : f32
    %90 = vector.broadcast %cst_29 : f32 to vector<16x128xf32>
    %91 = arith.minimumf %87, %90 : vector<16x128xf32>
    %92 = math.exp %91 : vector<16x128xf32>
    %cst_30 = arith.constant 1.000000e+00 : f32
    %93 = vector.broadcast %cst_30 : f32 to vector<16x128xf32>
    %94 = arith.subf %92, %93 : vector<16x128xf32>
    %95 = arith.select %89, %87, %94 : vector<16x128xi1>, vector<16x128xf32>
    %c0_31 = arith.constant 0 : index
    %c0_32 = arith.constant 0 : index
    %96 = vector.load %arg10[%c0_31, %c0_32] : memref<128x128xf32, #tpu.memory_space<vmem>>, vector<128x128xf32>
    %cst_33 = arith.constant dense<0.000000e+00> : vector<16x128xf32>
    %97 = tpu.matmul %95, %96, %cst_33 {dimension_numbers = #tpu.dot_dimension_numbers<[1], [0], [0], [1], [0, 0, 1, 1], [], []>} : vector<16x128xf32>, vector<128x128xf32>, vector<16x128xf32> -> vector<16x128xf32>
    %c0_34 = arith.constant 0 : index
    %c0_35 = arith.constant 0 : index
    %98 = vector.load %arg11[%c0_34, %c0_35] : memref<1x128xf32, #tpu.memory_space<vmem>>, vector<1x128xf32>
    %99 = vector.broadcast %98 : vector<1x128xf32> to vector<16x128xf32>
    %100 = arith.addf %97, %99 : vector<16x128xf32>
    %c0_36 = arith.constant 0 : index
    %c0_37 = arith.constant 0 : index
    %101 = vector.load %arg12[%c0_36, %c0_37] : memref<16x128xf32, #tpu.memory_space<vmem>>, vector<16x128xf32>
    tpu.vector_store %arg12[%c0_36, %c0_37], %100 {strides = array<i32>} : memref<16x128xf32, #tpu.memory_space<vmem>>, vector<16x128xf32>,
    return
  }
  func.func @transform_0(%arg0: i32) -> (i32, i32, i32) {
    %c0_i32 = arith.constant 0 : i32
    %c0_i32_0 = arith.constant 0 : i32
    %c0_i32_1 = arith.constant 0 : i32
    return %arg0, %c0_i32, %c0_i32_0 : i32, i32, i32
  }
  func.func @transform_1(%arg0: i32) -> (i32, i32) {
    %c0_i32 = arith.constant 0 : i32
    %c0_i32_0 = arith.constant 0 : i32
    %c0_i32_1 = arith.constant 0 : i32
    return %c0_i32, %c0_i32_0 : i32, i32
  }
  func.func @transform_2(%arg0: i32) -> (i32, i32) {
    %c0_i32 = arith.constant 0 : i32
    %c0_i32_0 = arith.constant 0 : i32
    %c0_i32_1 = arith.constant 0 : i32
    return %c0_i32, %c0_i32_0 : i32, i32
  }
  func.func @transform_3(%arg0: i32) -> (i32, i32) {
    %c0_i32 = arith.constant 0 : i32
    %c0_i32_0 = arith.constant 0 : i32
    %c0_i32_1 = arith.constant 0 : i32
    return %c0_i32, %c0_i32_0 : i32, i32
  }
  func.func @transform_4(%arg0: i32) -> (i32, i32) {
    %c0_i32 = arith.constant 0 : i32
    %c0_i32_0 = arith.constant 0 : i32
    %c0_i32_1 = arith.constant 0 : i32
    return %c0_i32, %c0_i32_0 : i32, i32
  }
  func.func @transform_5(%arg0: i32) -> (i32, i32) {
    %c0_i32 = arith.constant 0 : i32
    %c0_i32_0 = arith.constant 0 : i32
    %c0_i32_1 = arith.constant 0 : i32
    return %c0_i32, %c0_i32_0 : i32, i32
  }
  func.func @transform_6(%arg0: i32) -> (i32, i32) {
    %c0_i32 = arith.constant 0 : i32
    %c0_i32_0 = arith.constant 0 : i32
    %c0_i32_1 = arith.constant 0 : i32
    return %c0_i32, %c0_i32_0 : i32, i32
  }
  func.func @transform_7(%arg0: i32) -> (i32, i32) {
    %c0_i32 = arith.constant 0 : i32
    %c0_i32_0 = arith.constant 0 : i32
    %c0_i32_1 = arith.constant 0 : i32
    return %c0_i32, %c0_i32_0 : i32, i32
  }
  func.func @transform_8(%arg0: i32) -> (i32, i32) {
    %c0_i32 = arith.constant 0 : i32
    %c0_i32_0 = arith.constant 0 : i32
    %c0_i32_1 = arith.constant 0 : i32
    return %c0_i32, %c0_i32_0 : i32, i32
  }
  func.func @transform_9(%arg0: i32) -> (i32, i32) {
    %c0_i32 = arith.constant 0 : i32
    %c0_i32_0 = arith.constant 0 : i32
    %c0_i32_1 = arith.constant 0 : i32
    return %c0_i32, %c0_i32_0 : i32, i32
  }
  func.func @transform_10(%arg0: i32) -> (i32, i32) {
    %c0_i32 = arith.constant 0 : i32
    %c0_i32_0 = arith.constant 0 : i32
    %c0_i32_1 = arith.constant 0 : i32
    return %c0_i32, %c0_i32_0 : i32, i32
  }
  func.func @transform_11(%arg0: i32) -> (i32, i32) {
    %c0_i32 = arith.constant 0 : i32
    %c0_i32_0 = arith.constant 0 : i32
    return %arg0, %c0_i32 : i32, i32
  }
}

</mosaic_0001>

<llo_original>
// kernel: conv_forward.1
$region0: #{conv_forward.1}
  #allocation0 [shape = 'u32[]', space=smem, size = 0x4, offset = 0x4, fixed_abs, tag = 'smem constant byte address 0x4 - core index']
  #allocation1 [shape = 'u32[144,128]{1,0:T(1,128)}', space=vmem, size = 0x12000, scoped, tag = 'internal scratch']
  %s0 = inlined_call_operand.vmem [shape: bf16[2,576,49], index: 0, kind: input, shape index: {}]
  %s1 = inlined_call_operand.vmem [shape: bf16[49,128], index: 1, kind: input, shape index: {}]
  %s2 = inlined_call_operand.vmem [shape: f32[1,128], index: 2, kind: input, shape index: {}]
  %s3 = inlined_call_operand.vmem [shape: f32[1,128], index: 3, kind: input, shape index: {}]
  %s4 = inlined_call_operand.vmem [shape: bf16[4608,128], index: 4, kind: input, shape index: {}]
  %s5 = inlined_call_operand.vmem [shape: f32[1,128], index: 5, kind: input, shape index: {}]
  %s6 = inlined_call_operand.vmem [shape: f32[1,128], index: 6, kind: input, shape index: {}]
  %s7 = inlined_call_operand.vmem [shape: f32[128,128], index: 7, kind: input, shape index: {}]
  %s8 = inlined_call_operand.vmem [shape: f32[1,128], index: 8, kind: input, shape index: {}]
  %s9 = inlined_call_operand.vmem [shape: f32[128,128], index: 9, kind: input, shape index: {}]
  %s10 = inlined_call_operand.vmem [shape: f32[1,128], index: 10, kind: input, shape index: {}]
  %s11 = inlined_call_operand.vmem [shape: f32[32,128], index: 11, kind: output, shape index: {}]
  %s12 = sld [smem:[#allocation0]]
  $region77: #{conv_forward.1} parent=0
    _
  %s14 = ssub.s32 1, %s12
  %s15 = scalar_select 0, %s14, %s12
  loop: start=0, step=1, limit=4
  $region2: #{conv_forward.1} parent=0 // loop_pre_header
    _
  $region3: #{conv_forward.1} parent=0 // loop_header
    %s17 = sphi 0, %s21
    %p18 = scmp.ge.s32.totalorder %s17, 4
    %s27 = sphi 0, %s29
    %s30 = sphi 0, %s27
    %s31 = sphi 0, %s30
    %s47 = sphi 0, %s31
    %s51 = sphi 0, %s51
    %s53 = sphi 0, %s51
    %s54 = sphi 0, %s53
    %s68 = sphi 0, %s54
    %s72 = sphi 0, %s72
    %s74 = sphi 0, %s72
    %s75 = sphi 0, %s74
    %s89 = sphi 0, %s75
    %s93 = sphi 0, %s93
    %s95 = sphi 0, %s93
    %s96 = sphi 0, %s95
    %s110 = sphi 0, %s96
    %s114 = sphi 0, %s114
    %s116 = sphi 0, %s114
    %s117 = sphi 0, %s116
    %s131 = sphi 0, %s117
    %s135 = sphi 0, %s135
    %s137 = sphi 0, %s135
    %s138 = sphi 0, %s137
    %s152 = sphi 0, %s138
    %s156 = sphi 0, %s156
    %s158 = sphi 0, %s156
    %s159 = sphi 0, %s158
    %s173 = sphi 0, %s159
    %s177 = sphi 0, %s177
    %s179 = sphi 0, %s177
    %s180 = sphi 0, %s179
    %s194 = sphi 0, %s180
    %s198 = sphi 0, %s198
    %s200 = sphi 0, %s198
    %s201 = sphi 0, %s200
    %s215 = sphi 0, %s201
    %s219 = sphi 0, %s219
    %s221 = sphi 0, %s219
    %s222 = sphi 0, %s221
    %s236 = sphi 0, %s222
    %s240 = sphi 0, %s240
    %s242 = sphi 0, %s240
    %s243 = sphi 0, %s242
    %s257 = sphi 0, %s243
    %s263 = sphi 0, %s265
    %s266 = sphi 0, %s263
    %s267 = sphi 0, %s266
    %s283 = sphi 0, %s267
  $region4: #{conv_forward.1} parent=0 // loop_header_branch
    %20 = sbr.rel (%p18) target = $region8
  $region5: #{conv_forward.1} parent=0 // loop_body
    %s22 = ssub.s32 %s17, 1
    %s23 = ssub.s32 %s17, 2
    %s24 = sadd.s32 %s17, 1
    %s25 = ssub.s32 %s17, %s24
    %p26 = scmp.eq.s32.totalorder %s25, 0
    %s28 = sadd.s32 %s27, 1
    %s29 = scalar_select %p26, %s27, %s28
    %p32 = pneg %p26
    %p33 = scmp.eq.s32.totalorder %s17, 1
    %p34 = por %p32, %p33
    %p35 = scmp.ne.s32.totalorder %s27, %s30
    %p36 = scmp.eq.s32.totalorder %s17, 0
    %p37 = por %p35, %p36
    %p38 = scmp.ne.s32.totalorder %s27, %s30
    %p39 = scmp.eq.s32.totalorder %s22, 1
    %p40 = por %p38, %p39
    %p41 = scmp.ne.s32.totalorder %s30, %s31
    %p42 = scmp.eq.s32.totalorder %s22, 0
    %p43 = por %p41, %p42
    %p44 = scmp.ne.s32.totalorder %s30, %s31
    %p45 = scmp.eq.s32.totalorder %s23, 1
    %p46 = por %p44, %p45
    %p48 = scmp.ne.s32.totalorder %s31, %s47
    %p49 = scmp.eq.s32.totalorder %s23, 0
    %p50 = por %p48, %p49
    %s52 = sadd.s32 %s51, 1
    %p55 = scmp.eq.s32.totalorder %s17, 1
    %p56 = scmp.ne.s32.totalorder %s51, %s53
    %p57 = scmp.eq.s32.totalorder %s17, 0
    %p58 = por %p56, %p57
    %p59 = scmp.ne.s32.totalorder %s51, %s53
    %p60 = scmp.eq.s32.totalorder %s22, 1
    %p61 = por %p59, %p60
    %p62 = scmp.ne.s32.totalorder %s53, %s54
    %p63 = scmp.eq.s32.totalorder %s22, 0
    %p64 = por %p62, %p63
    %p65 = scmp.ne.s32.totalorder %s53, %s54
    %p66 = scmp.eq.s32.totalorder %s23, 1
    %p67 = por %p65, %p66
    %p69 = scmp.ne.s32.totalorder %s54, %s68
    %p70 = scmp.eq.s32.totalorder %s23, 0
    %p71 = por %p69, %p70
    %s73 = sadd.s32 %s72, 1
    %p76 = scmp.eq.s32.totalorder %s17, 1
    %p77 = scmp.ne.s32.totalorder %s72, %s74
    %p78 = scmp.eq.s32.totalorder %s17, 0
    %p79 = por %p77, %p78
    %p80 = scmp.ne.s32.totalorder %s72, %s74
    %p81 = scmp.eq.s32.totalorder %s22, 1
    %p82 = por %p80, %p81
    %p83 = scmp.ne.s32.totalorder %s74, %s75
    %p84 = scmp.eq.s32.totalorder %s22, 0
    %p85 = por %p83, %p84
    %p86 = scmp.ne.s32.totalorder %s74, %s75
    %p87 = scmp.eq.s32.totalorder %s23, 1
    %p88 = por %p86, %p87
    %p90 = scmp.ne.s32.totalorder %s75, %s89
    %p91 = scmp.eq.s32.totalorder %s23, 0
    %p92 = por %p90, %p91
    %s94 = sadd.s32 %s93, 1
    %p97 = scmp.eq.s32.totalorder %s17, 1
    %p98 = scmp.ne.s32.totalorder %s93, %s95
    %p99 = scmp.eq.s32.totalorder %s17, 0
    %p100 = por %p98, %p99
    %p101 = scmp.ne.s32.totalorder %s93, %s95
    %p102 = scmp.eq.s32.totalorder %s22, 1
    %p103 = por %p101, %p102
    %p104 = scmp.ne.s32.totalorder %s95, %s96
    %p105 = scmp.eq.s32.totalorder %s22, 0
    %p106 = por %p104, %p105
    %p107 = scmp.ne.s32.totalorder %s95, %s96
    %p108 = scmp.eq.s32.totalorder %s23, 1
    %p109 = por %p107, %p108
    %p111 = scmp.ne.s32.totalorder %s96, %s110
    %p112 = scmp.eq.s32.totalorder %s23, 0
    %p113 = por %p111, %p112
    %s115 = sadd.s32 %s114, 1
    %p118 = scmp.eq.s32.totalorder %s17, 1
    %p119 = scmp.ne.s32.totalorder %s114, %s116
    %p120 = scmp.eq.s32.totalorder %s17, 0
    %p121 = por %p119, %p120
    %p122 = scmp.ne.s32.totalorder %s114, %s116
    %p123 = scmp.eq.s32.totalorder %s22, 1
    %p124 = por %p122, %p123
    %p125 = scmp.ne.s32.totalorder %s116, %s117
    %p126 = scmp.eq.s32.totalorder %s22, 0
    %p127 = por %p125, %p126
    %p128 = scmp.ne.s32.totalorder %s116, %s117
    %p129 = scmp.eq.s32.totalorder %s23, 1
    %p130 = por %p128, %p129
    %p132 = scmp.ne.s32.totalorder %s117, %s131
    %p133 = scmp.eq.s32.totalorder %s23, 0
    %p134 = por %p132, %p133
    %s136 = sadd.s32 %s135, 1
    %p139 = scmp.eq.s32.totalorder %s17, 1
    %p140 = scmp.ne.s32.totalorder %s135, %s137
    %p141 = scmp.eq.s32.totalorder %s17, 0
    %p142 = por %p140, %p141
    %p143 = scmp.ne.s32.totalorder %s135, %s137
    %p144 = scmp.eq.s32.totalorder %s22, 1
    %p145 = por %p143, %p144
    %p146 = scmp.ne.s32.totalorder %s137, %s138
    %p147 = scmp.eq.s32.totalorder %s22, 0
    %p148 = por %p146, %p147
    %p149 = scmp.ne.s32.totalorder %s137, %s138
    %p150 = scmp.eq.s32.totalorder %s23, 1
    %p151 = por %p149, %p150
    %p153 = scmp.ne.s32.totalorder %s138, %s152
    %p154 = scmp.eq.s32.totalorder %s23, 0
    %p155 = por %p153, %p154
    %s157 = sadd.s32 %s156, 1
    %p160 = scmp.eq.s32.totalorder %s17, 1
    %p161 = scmp.ne.s32.totalorder %s156, %s158
    %p162 = scmp.eq.s32.totalorder %s17, 0
    %p163 = por %p161, %p162
    %p164 = scmp.ne.s32.totalorder %s156, %s158
    %p165 = scmp.eq.s32.totalorder %s22, 1
    %p166 = por %p164, %p165
    %p167 = scmp.ne.s32.totalorder %s158, %s159
    %p168 = scmp.eq.s32.totalorder %s22, 0
    %p169 = por %p167, %p168
    %p170 = scmp.ne.s32.totalorder %s158, %s159
    %p171 = scmp.eq.s32.totalorder %s23, 1
    %p172 = por %p170, %p171
    %p174 = scmp.ne.s32.totalorder %s159, %s173
    %p175 = scmp.eq.s32.totalorder %s23, 0
    %p176 = por %p174, %p175
    %s178 = sadd.s32 %s177, 1
    %p181 = scmp.eq.s32.totalorder %s17, 1
    %p182 = scmp.ne.s32.totalorder %s177, %s179
    %p183 = scmp.eq.s32.totalorder %s17, 0
    %p184 = por %p182, %p183
    %p185 = scmp.ne.s32.totalorder %s177, %s179
    %p186 = scmp.eq.s32.totalorder %s22, 1
    %p187 = por %p185, %p186
    %p188 = scmp.ne.s32.totalorder %s179, %s180
    %p189 = scmp.eq.s32.totalorder %s22, 0
    %p190 = por %p188, %p189
    %p191 = scmp.ne.s32.totalorder %s179, %s180
    %p192 = scmp.eq.s32.totalorder %s23, 1
    %p193 = por %p191, %p192
    %p195 = scmp.ne.s32.totalorder %s180, %s194
    %p196 = scmp.eq.s32.totalorder %s23, 0
    %p197 = por %p195, %p196
    %s199 = sadd.s32 %s198, 1
    %p202 = scmp.eq.s32.totalorder %s17, 1
    %p203 = scmp.ne.s32.totalorder %s198, %s200
    %p204 = scmp.eq.s32.totalorder %s17, 0
    %p205 = por %p203, %p204
    %p206 = scmp.ne.s32.totalorder %s198, %s200
    %p207 = scmp.eq.s32.totalorder %s22, 1
    %p208 = por %p206, %p207
    %p209 = scmp.ne.s32.totalorder %s200, %s201
    %p210 = scmp.eq.s32.totalorder %s22, 0
    %p211 = por %p209, %p210
    %p212 = scmp.ne.s32.totalorder %s200, %s201
    %p213 = scmp.eq.s32.totalorder %s23, 1
    %p214 = por %p212, %p213
    %p216 = scmp.ne.s32.totalorder %s201, %s215
    %p217 = scmp.eq.s32.totalorder %s23, 0
    %p218 = por %p216, %p217
    %s220 = sadd.s32 %s219, 1
    %p223 = scmp.eq.s32.totalorder %s17, 1
    %p224 = scmp.ne.s32.totalorder %s219, %s221
    %p225 = scmp.eq.s32.totalorder %s17, 0
    %p226 = por %p224, %p225
    %p227 = scmp.ne.s32.totalorder %s219, %s221
    %p228 = scmp.eq.s32.totalorder %s22, 1
    %p229 = por %p227, %p228
    %p230 = scmp.ne.s32.totalorder %s221, %s222
    %p231 = scmp.eq.s32.totalorder %s22, 0
    %p232 = por %p230, %p231
    %p233 = scmp.ne.s32.totalorder %s221, %s222
    %p234 = scmp.eq.s32.totalorder %s23, 1
    %p235 = por %p233, %p234
    %p237 = scmp.ne.s32.totalorder %s222, %s236
    %p238 = scmp.eq.s32.totalorder %s23, 0
    %p239 = por %p237, %p238
    %s241 = sadd.s32 %s240, 1
    %p244 = scmp.eq.s32.totalorder %s17, 1
    %p245 = scmp.ne.s32.totalorder %s240, %s242
    %p246 = scmp.eq.s32.totalorder %s17, 0
    %p247 = por %p245, %p246
    %p248 = scmp.ne.s32.totalorder %s240, %s242
    %p249 = scmp.eq.s32.totalorder %s22, 1
    %p250 = por %p248, %p249
    %p251 = scmp.ne.s32.totalorder %s242, %s243
    %p252 = scmp.eq.s32.totalorder %s22, 0
    %p253 = por %p251, %p252
    %p254 = scmp.ne.s32.totalorder %s242, %s243
    %p255 = scmp.eq.s32.totalorder %s23, 1
    %p256 = por %p254, %p255
    %p258 = scmp.ne.s32.totalorder %s243, %s257
    %p259 = scmp.eq.s32.totalorder %s23, 0
    %p260 = por %p258, %p259
    %s261 = ssub.s32 %s17, %s24
    %p262 = scmp.eq.s32.totalorder %s261, 0
    %s264 = sadd.s32 %s263, 1
    %s265 = scalar_select %p262, %s263, %s264
    %p268 = pneg %p262
    %p269 = scmp.eq.s32.totalorder %s17, 1
    %p270 = por %p268, %p269
    %p271 = scmp.ne.s32.totalorder %s263, %s266
    %p272 = scmp.eq.s32.totalorder %s17, 0
    %p273 = por %p271, %p272
    %p274 = scmp.ne.s32.totalorder %s263, %s266
    %p275 = scmp.eq.s32.totalorder %s22, 1
    %p276 = por %p274, %p275
    %p277 = scmp.ne.s32.totalorder %s266, %s267
    %p278 = scmp.eq.s32.totalorder %s22, 0
    %p279 = por %p277, %p278
    %p280 = scmp.ne.s32.totalorder %s266, %s267
    %p281 = scmp.eq.s32.totalorder %s23, 1
    %p282 = por %p280, %p281
    %p284 = scmp.ne.s32.totalorder %s267, %s283
    %p285 = scmp.eq.s32.totalorder %s23, 0
    %p286 = por %p284, %p285
    %p287 = scmp.le.s32.totalorder 1, %s17
    %p288 = scmp.lt.s32.totalorder %s17, 3
    %p289 = pnand %p287, %p288
    %p290 = pneg %p289
    // Predicated region
    $region9: #{conv_forward.1} parent=5 // pred_check
      _
    $region10: #{conv_forward.1} parent=5 // pred_check_branch
      %292 = sbr.rel (%p289) target = $region12
    $region11: #{conv_forward.1} parent=5 // pred_region
      %s293 = ssub.s32 %s17, 1
      // Predicated region
      $region13: #{conv_forward.1} parent=11 // pred_check
        %p294 = pneg %p64
      $region14: #{conv_forward.1} parent=11 // pred_check_branch
        %296 = sbr.rel (%p294) target = $region16
      $region15: #{conv_forward.1} parent=11 // pred_region
        _
      $region16: #{conv_forward.1} parent=11 // pred_fallthru
        _
      // Predicated region
      $region17: #{conv_forward.1} parent=11 // pred_check
        %p297 = pneg %p85
      $region18: #{conv_forward.1} parent=11 // pred_check_branch
        %299 = sbr.rel (%p297) target = $region20
      $region19: #{conv_forward.1} parent=11 // pred_region
        _
      $region20: #{conv_forward.1} parent=11 // pred_fallthru
        _
      // Predicated region
      $region21: #{conv_forward.1} parent=11 // pred_check
        %p300 = pneg %p106
      $region22: #{conv_forward.1} parent=11 // pred_check_branch
        %302 = sbr.rel (%p300) target = $region24
      $region23: #{conv_forward.1} parent=11 // pred_region
        _
      $region24: #{conv_forward.1} parent=11 // pred_fallthru
        _
      // Predicated region
      $region25: #{conv_forward.1} parent=11 // pred_check
        %p303 = pneg %p127
      $region26: #{conv_forward.1} parent=11 // pred_check_branch
        %305 = sbr.rel (%p303) target = $region28
      $region27: #{conv_forward.1} parent=11 // pred_region
        _
      $region28: #{conv_forward.1} parent=11 // pred_fallthru
        _
      // Predicated region
      $region29: #{conv_forward.1} parent=11 // pred_check
        %p306 = pneg %p148
      $region30: #{conv_forward.1} parent=11 // pred_check_branch
        %308 = sbr.rel (%p306) target = $region32
      $region31: #{conv_forward.1} parent=11 // pred_region
        _
      $region32: #{conv_forward.1} parent=11 // pred_fallthru
        _
      // Predicated region
      $region33: #{conv_forward.1} parent=11 // pred_check
        %p309 = pneg %p169
      $region34: #{conv_forward.1} parent=11 // pred_check_branch
        %311 = sbr.rel (%p309) target = $region36
      $region35: #{conv_forward.1} parent=11 // pred_region
        _
      $region36: #{conv_forward.1} parent=11 // pred_fallthru
        _
      // Predicated region
      $region37: #{conv_forward.1} parent=11 // pred_check
        %p312 = pneg %p190
      $region38: #{conv_forward.1} parent=11 // pred_check_branch
        %314 = sbr.rel (%p312) target = $region40
      $region39: #{conv_forward.1} parent=11 // pred_region
        _
      $region40: #{conv_forward.1} parent=11 // pred_fallthru
        _
      // Predicated region
      $region41: #{conv_forward.1} parent=11 // pred_check
        %p315 = pneg %p211
      $region42: #{conv_forward.1} parent=11 // pred_check_branch
        %317 = sbr.rel (%p315) target = $region44
      $region43: #{conv_forward.1} parent=11 // pred_region
        _
      $region44: #{conv_forward.1} parent=11 // pred_fallthru
        _
      // Predicated region
      $region45: #{conv_forward.1} parent=11 // pred_check
        %p318 = pneg %p232
      $region46: #{conv_forward.1} parent=11 // pred_check_branch
        %320 = sbr.rel (%p318) target = $region48
      $region47: #{conv_forward.1} parent=11 // pred_region
        _
      $region48: #{conv_forward.1} parent=11 // pred_fallthru
        _
      // Predicated region
      $region49: #{conv_forward.1} parent=11 // pred_check
        %p321 = pneg %p253
      $region50: #{conv_forward.1} parent=11 // pred_check_branch
        %323 = sbr.rel (%p321) target = $region52
      $region51: #{conv_forward.1} parent=11 // pred_region
        _
      $region52: #{conv_forward.1} parent=11 // pred_fallthru
        _
    $region12: #{conv_forward.1} parent=5 // pred_fallthru
      _
    %p324 = scmp.lt.s32.totalorder %s17, 2
    // Predicated region
    $region53: #{conv_forward.1} parent=5 // pred_check
      %p325 = pneg %p324
    $region54: #{conv_forward.1} parent=5 // pred_check_branch
      %327 = sbr.rel (%p325) target = $region56
    $region55: #{conv_forward.1} parent=5 // pred_region
      // Predicated region
      $region57: #{conv_forward.1} parent=55 // pred_check
        %p328 = pneg %p37
      $region58: #{conv_forward.1} parent=55 // pred_check_branch
        %330 = sbr.rel (%p328) target = $region60
      $region59: #{conv_forward.1} parent=55 // pred_region
        %p331 = scmp.lt.s32.totalorder %s17, 1
        %s332 = scalar_select %p331, %s17, 1
        %s333 = smul.addr %s332, 72
        %s334 = smul.addr %s333, 4
        %s335 = scalar_lea.vmem %s0, %s334
      $region60: #{conv_forward.1} parent=55 // pred_fallthru
        _
    $region56: #{conv_forward.1} parent=5 // pred_fallthru
      _
    %p336 = scmp.le.s32.totalorder 1, %s17
    %p337 = scmp.lt.s32.totalorder %s17, 3
    %p338 = pnand %p336, %p337
    %p339 = pneg %p338
    // Predicated region
    $region61: #{conv_forward.1} parent=5 // pred_check
      _
    $region62: #{conv_forward.1} parent=5 // pred_check_branch
      %341 = sbr.rel (%p338) target = $region64
    $region63: #{conv_forward.1} parent=5 // pred_region
      %s342 = ssub.s32 %s17, 1
      %p343 = scmp.lt.s32.totalorder %s22, 1
      %s344 = scalar_select %p343, %s22, 1
      %s345 = smul.addr %s344, 72
      %s346 = smul.addr %s345, 4
      %s347 = scalar_lea.vmem %s0, %s346
      %p348 = pneg %p43
      %p349 = pneg %p40
      %p350 = pneg %p64
      %p351 = pneg %p61
      %p352 = pneg %p85
      %p353 = pneg %p82
      %p354 = pneg %p106
      %p355 = pneg %p103
      %p356 = pneg %p127
      %p357 = pneg %p124
      %p358 = pneg %p148
      %p359 = pneg %p145
      %p360 = pneg %p169
      %p361 = pneg %p166
      %p362 = pneg %p190
      %p363 = pneg %p187
      %p364 = pneg %p211
      %p365 = pneg %p208
      %p366 = pneg %p232
      %p367 = pneg %p229
      %p368 = pneg %p253
      %p369 = pneg %p250
      %p370 = pneg %p279
      %p371 = pneg %p276
      %s372 = smul.u32 2, %s22
      %p373 = scmp.lt.s32.totalorder %s372, 3
      %s374 = scalar_select %p373, %s372, 3
      %s375 = smul.addr %s374, 8
      %s376 = scalar_lea.vmem %s11, %s375
      %p377 = scmp.lt.s32.totalorder %s22, 1
      %s378 = scalar_select %p377, %s22, 1
      %s379 = smul.addr %s378, 72
      %s380 = smul.addr %s379, 4
      %s381 = scalar_lea.vmem %s0, %s380
      %s382 = smul.u32 2, %s22
      %p383 = scmp.lt.s32.totalorder %s382, 3
      %s384 = scalar_select %p383, %s382, 3
      %s385 = smul.addr %s384, 8
      %s386 = scalar_lea.vmem %s11, %s385
      %s387 = smul.u32 2, %s22
      %v389 = vld [vmem:[%s381] sm:$0xf]
      %v390 = vld [vmem:[%s381 + $0x4] sm:$0xf]
      %v391 = vld [vmem:[%s381 + $0x8] sm:$0xf]
      %v392 = vld [vmem:[%s381 + $0xc] sm:$0xf]
      %v393 = vld [vmem:[%s381 + $0x10] sm:$0xf]
      %v394 = vld [vmem:[%s381 + $0x14] sm:$0xf]
      %v395 = vld [vmem:[%s381 + $0x18] sm:$0xf]
      %v396 = vld [vmem:[%s381 + $0x1c] sm:$0xf]
      %v397 = vld [vmem:[%s381 + $0x20] sm:$0xf]
      %v398 = vld [vmem:[%s381 + $0x24] sm:$0xf]
      %v399 = vld [vmem:[%s381 + $0x28] sm:$0xf]
      %v400 = vld [vmem:[%s381 + $0x2c] sm:$0xf]
      %v401 = vld [vmem:[%s381 + $0x30] sm:$0xf]
      %v402 = vld [vmem:[%s381 + $0x34] sm:$0xf]
      %v403 = vld [vmem:[%s381 + $0x38] sm:$0xf]
      %v404 = vld [vmem:[%s381 + $0x3c] sm:$0xf]
      %v405 = vld [vmem:[%s381 + $0x40] sm:$0xf]
      %v406 = vld [vmem:[%s381 + $0x44] sm:$0xf]
      %v407 = vld [vmem:[%s381 + $0x48] sm:$0xf]
      %v408 = vld [vmem:[%s381 + $0x4c] sm:$0xf]
      %v409 = vld [vmem:[%s381 + $0x50] sm:$0xf]
      %v410 = vld [vmem:[%s381 + $0x54] sm:$0xf]
      %v411 = vld [vmem:[%s381 + $0x58] sm:$0xf]
      %v412 = vld [vmem:[%s381 + $0x5c] sm:$0xf]
      %v413 = vld [vmem:[%s381 + $0x60] sm:$0xf]
      %v414 = vld [vmem:[%s381 + $0x64] sm:$0xf]
      %v415 = vld [vmem:[%s381 + $0x68] sm:$0xf]
      %v416 = vld [vmem:[%s381 + $0x6c] sm:$0xf]
      %v417 = vld [vmem:[%s381 + $0x70] sm:$0xf]
      %v418 = vld [vmem:[%s381 + $0x74] sm:$0xf]
      %v419 = vld [vmem:[%s381 + $0x78] sm:$0xf]
      %v420 = vld [vmem:[%s381 + $0x7c] sm:$0xf]
      %v421 = vld [vmem:[%s381 + $0x80] sm:$0xf]
      %v422 = vld [vmem:[%s381 + $0x84] sm:$0xf]
      %v423 = vld [vmem:[%s381 + $0x88] sm:$0xf]
      %v424 = vld [vmem:[%s381 + $0x8c] sm:$0xf]
      %v425 = vld [vmem:[%s381 + $0x90] sm:$0xf]
      %v426 = vld [vmem:[%s381 + $0x94] sm:$0xf]
      %v427 = vld [vmem:[%s381 + $0x98] sm:$0xf]
      %v428 = vld [vmem:[%s381 + $0x9c] sm:$0xf]
      %v429 = vld [vmem:[%s381 + $0xa0] sm:$0xf]
      %v430 = vld [vmem:[%s381 + $0xa4] sm:$0xf]
      %v431 = vld [vmem:[%s381 + $0xa8] sm:$0xf]
      %v432 = vld [vmem:[%s381 + $0xac] sm:$0xf]
      %v433 = vld [vmem:[%s381 + $0xb0] sm:$0xf]
      %v434 = vld [vmem:[%s381 + $0xb4] sm:$0xf]
      %v435 = vld [vmem:[%s381 + $0xb8] sm:$0xf]
      %v436 = vld [vmem:[%s381 + $0xbc] sm:$0xf]
      %v437 = vld [vmem:[%s381 + $0xc0] sm:$0xf]
      %v438 = vld [vmem:[%s381 + $0xc4] sm:$0xf]
      %v439 = vld [vmem:[%s381 + $0xc8] sm:$0xf]
      %v440 = vld [vmem:[%s381 + $0xcc] sm:$0xf]
      %v441 = vld [vmem:[%s381 + $0xd0] sm:$0xf]
      %v442 = vld [vmem:[%s381 + $0xd4] sm:$0xf]
      %v443 = vld [vmem:[%s381 + $0xd8] sm:$0xf]
      %v444 = vld [vmem:[%s381 + $0xdc] sm:$0xf]
      %v445 = vld [vmem:[%s381 + $0xe0] sm:$0xf]
      %v446 = vld [vmem:[%s381 + $0xe4] sm:$0xf]
      %v447 = vld [vmem:[%s381 + $0xe8] sm:$0xf]
      %v448 = vld [vmem:[%s381 + $0xec] sm:$0xf]
      %v449 = vld [vmem:[%s381 + $0xf0] sm:$0xf]
      %v450 = vld [vmem:[%s381 + $0xf4] sm:$0xf]
      %v451 = vld [vmem:[%s381 + $0xf8] sm:$0xf]
      %v452 = vld [vmem:[%s381 + $0xfc] sm:$0xf]
      %v453 = vld [vmem:[%s381 + $0x100] sm:$0xf]
      %v454 = vld [vmem:[%s381 + $0x104] sm:$0xf]
      %v455 = vld [vmem:[%s381 + $0x108] sm:$0xf]
      %v456 = vld [vmem:[%s381 + $0x10c] sm:$0xf]
      %v457 = vld [vmem:[%s381 + $0x110] sm:$0xf]
      %v458 = vld [vmem:[%s381 + $0x114] sm:$0xf]
      %v459 = vld [vmem:[%s381 + $0x118] sm:$0xf]
      %v460 = vld [vmem:[%s381 + $0x11c] sm:$0xf]
      %v461 = vld [vmem:[%s1] sm:$0xf]
      %v462 = vld [vmem:[%s1 + $0x4] sm:$0xf]
      %v463 = vld [vmem:[%s1 + $0x8] sm:$0xf]
      %v464 = vld [vmem:[%s1 + $0xc] sm:$0xf]
      %v465 = vld [vmem:[%s1 + $0x10] sm:$0xf]
      %v466 = vld [vmem:[%s1 + $0x14] sm:$0xf]
      %v467 = vld [vmem:[%s1 + $0x18] sm:$0x1]
      %v540 = vunpack.c.l.b16 %v389
      %v541 = vunpack.c.l.b16 %v390
      %v542 = vunpack.c.l.b16 %v391
      %v543 = vunpack.c.l.b16 %v392
      %v544 = vunpack.c.l.b16 %v393
      %v545 = vunpack.c.l.b16 %v394
      %v546 = vunpack.c.l.b16 %v395
      %v547 = vunpack.c.l.b16 %v396
      %v548 = vunpack.c.l.b16 %v397
      %v549 = vunpack.c.l.b16 %v398
      %v550 = vunpack.c.l.b16 %v399
      %v551 = vunpack.c.l.b16 %v400
      %v552 = vunpack.c.l.b16 %v401
      %v553 = vunpack.c.l.b16 %v402
      %v554 = vunpack.c.l.b16 %v403
      %v555 = vunpack.c.l.b16 %v404
      %v556 = vunpack.c.l.b16 %v405
      %v557 = vunpack.c.l.b16 %v406
      %v558 = vunpack.c.l.b16 %v407
      %v559 = vunpack.c.l.b16 %v408
      %v560 = vunpack.c.l.b16 %v409
      %v561 = vunpack.c.l.b16 %v410
      %v562 = vunpack.c.l.b16 %v411
      %v563 = vunpack.c.l.b16 %v412
      %v564 = vunpack.c.l.b16 %v413
      %v565 = vunpack.c.l.b16 %v414
      %v566 = vunpack.c.l.b16 %v415
      %v567 = vunpack.c.l.b16 %v416
      %v568 = vunpack.c.l.b16 %v417
      %v569 = vunpack.c.l.b16 %v418
      %v570 = vunpack.c.l.b16 %v419
      %v571 = vunpack.c.l.b16 %v420
      %v572 = vunpack.c.l.b16 %v421
      %v573 = vunpack.c.l.b16 %v422
      %v574 = vunpack.c.l.b16 %v423
      %v575 = vunpack.c.l.b16 %v424
      %v576 = vunpack.c.l.b16 %v425
      %v577 = vunpack.c.l.b16 %v426
      %v578 = vunpack.c.l.b16 %v427
      %v579 = vunpack.c.l.b16 %v428
      %v580 = vunpack.c.l.b16 %v429
      %v581 = vunpack.c.l.b16 %v430
      %v582 = vunpack.c.l.b16 %v431
      %v583 = vunpack.c.l.b16 %v432
      %v584 = vunpack.c.l.b16 %v433
      %v585 = vunpack.c.l.b16 %v434
      %v586 = vunpack.c.l.b16 %v435
      %v587 = vunpack.c.l.b16 %v436
      %v588 = vunpack.c.l.b16 %v437
      %v589 = vunpack.c.l.b16 %v438
      %v590 = vunpack.c.l.b16 %v439
      %v591 = vunpack.c.l.b16 %v440
      %v592 = vunpack.c.l.b16 %v441
      %v593 = vunpack.c.l.b16 %v442
      %v594 = vunpack.c.l.b16 %v443
      %v595 = vunpack.c.l.b16 %v444
      %v596 = vunpack.c.l.b16 %v445
      %v597 = vunpack.c.l.b16 %v446
      %v598 = vunpack.c.l.b16 %v447
      %v599 = vunpack.c.l.b16 %v448
      %v600 = vunpack.c.l.b16 %v449
      %v601 = vunpack.c.l.b16 %v450
      %v602 = vunpack.c.l.b16 %v451
      %v603 = vunpack.c.l.b16 %v452
      %v604 = vunpack.c.l.b16 %v453
      %v605 = vunpack.c.l.b16 %v454
      %v606 = vunpack.c.l.b16 %v455
      %v607 = vunpack.c.l.b16 %v456
      %v608 = vunpack.c.l.b16 %v457
      %v609 = vunpack.c.l.b16 %v458
      %v610 = vunpack.c.l.b16 %v459
      %v611 = vunpack.c.l.b16 %v460
      %v612 = vpack.c.b16 %v541, %v540
      %v613 = vpack.c.b16 %v543, %v542
      %v614 = vpack.c.b16 %v545, %v544
      %v615 = vpack.c.b16 %v547, %v546
      %v616 = vpack.c.b16 %v549, %v548
      %v617 = vpack.c.b16 %v551, %v550
      %v618 = vpack.c.b16 %v553, %v552
      %v619 = vpack.c.b16 %v555, %v554
      %v620 = vpack.c.b16 %v557, %v556
      %v621 = vpack.c.b16 %v559, %v558
      %v622 = vpack.c.b16 %v561, %v560
      %v623 = vpack.c.b16 %v563, %v562
      %v624 = vpack.c.b16 %v565, %v564
      %v625 = vpack.c.b16 %v567, %v566
      %v626 = vpack.c.b16 %v569, %v568
      %v627 = vpack.c.b16 %v571, %v570
      %v628 = vpack.c.b16 %v573, %v572
      %v629 = vpack.c.b16 %v575, %v574
      %v630 = vpack.c.b16 %v577, %v576
      %v631 = vpack.c.b16 %v579, %v578
      %v632 = vpack.c.b16 %v581, %v580
      %v633 = vpack.c.b16 %v583, %v582
      %v634 = vpack.c.b16 %v585, %v584
      %v635 = vpack.c.b16 %v587, %v586
      %v636 = vpack.c.b16 %v589, %v588
      %v637 = vpack.c.b16 %v591, %v590
      %v638 = vpack.c.b16 %v593, %v592
      %v639 = vpack.c.b16 %v595, %v594
      %v640 = vpack.c.b16 %v597, %v596
      %v641 = vpack.c.b16 %v599, %v598
      %v642 = vpack.c.b16 %v601, %v600
      %v643 = vpack.c.b16 %v603, %v602
      %v644 = vpack.c.b16 %v605, %v604
      %v645 = vpack.c.b16 %v607, %v606
      %v646 = vpack.c.b16 %v609, %v608
      %v647 = vpack.c.b16 %v611, %v610
      %v655 = vunpack.c.l.b16 %v461
      %v656 = vunpack.c.l.b16 %v462
      %v657 = vunpack.c.l.b16 %v463
      %v658 = vunpack.c.l.b16 %v464
      %v659 = vunpack.c.l.b16 %v465
      %v660 = vunpack.c.l.b16 %v466
      %v661 = vunpack.c.l.b16 %v467
      %v662 = vpack.c.b16 %v656, %v655
      %v663 = vpack.c.b16 %v658, %v657
      %v664 = vpack.c.b16 %v660, %v659
      %v665 = vpack.c.b16 %v661, %v661
      %vm669 = vcmask 400384
      %v671 = vsel %vm669, %v612, 0
      %v674 = vsel %vm669, %v613, 0
      %v677 = vsel %vm669, %v614, 0
      %v680 = vsel %vm669, %v615, 0
      %v683 = vsel %vm669, %v616, 0
      %v686 = vsel %vm669, %v617, 0
      %v689 = vsel %vm669, %v618, 0
      %v692 = vsel %vm669, %v619, 0
      %v695 = vsel %vm669, %v620, 0
      %v698 = vsel %vm669, %v621, 0
      %v701 = vsel %vm669, %v622, 0
      %v704 = vsel %vm669, %v623, 0
      %v707 = vsel %vm669, %v624, 0
      %v710 = vsel %vm669, %v625, 0
      %v713 = vsel %vm669, %v626, 0
      %v716 = vsel %vm669, %v627, 0
      %v719 = vsel %vm669, %v628, 0
      %v722 = vsel %vm669, %v629, 0
      %v725 = vsel %vm669, %v630, 0
      %v728 = vsel %vm669, %v631, 0
      %v731 = vsel %vm669, %v632, 0
      %v734 = vsel %vm669, %v633, 0
      %v737 = vsel %vm669, %v634, 0
      %v740 = vsel %vm669, %v635, 0
      %v743 = vsel %vm669, %v636, 0
      %v746 = vsel %vm669, %v637, 0
      %v749 = vsel %vm669, %v638, 0
      %v752 = vsel %vm669, %v639, 0
      %v755 = vsel %vm669, %v640, 0
      %v758 = vsel %vm669, %v641, 0
      %v761 = vsel %vm669, %v642, 0
      %v764 = vsel %vm669, %v643, 0
      %v767 = vsel %vm669, %v644, 0
      %v770 = vsel %vm669, %v645, 0
      %v773 = vsel %vm669, %v646, 0
      %v776 = vsel %vm669, %v647, 0
      %vm778 = vcmask 1040384
      %v779 = vsel 0, 4294967295, 65535
      %v780 = vsel %vm778, %v779, 0
      %v782 = vand.u32 %v665, %v780
      %784 = vmatprep.subr.bf16.mxu0 0
      %785 = vmatpush1.bf16.msra.mxu0 %v662
      %786 = vmatprep.subr.bf16.mxu0 0
      %787 = vmatpush1.bf16.msra.mxu0 %v663
      %788 = vmatprep.subr.bf16.mxu0 0
      %789 = vmatpush1.bf16.msra.mxu0 %v664
      %790 = vmatprep.subr.bf16.mxu0 0
      %791 = vmatpush1.bf16.msra.mxu0 %v782
      %792 = vmatprep.subr.bf16.mxu0 0
      %793 = vmatpush1.bf16.msra.mxu0 0
      %794 = vmatprep.subr.bf16.mxu0 0
      %795 = vmatpush1.bf16.msra.mxu0 0
      %796 = vmatprep.subr.bf16.mxu0 0
      %797 = vmatpush1.bf16.msra.mxu0 0
      %798 = vmatprep.subr.bf16.mxu0 0
      %799 = vmatpush1.bf16.msra.mxu0 0
      %800 = vmatprep.subr.bf16.mxu0 0
      %801 = vmatpush1.bf16.msra.mxu0 0
      %802 = vmatprep.subr.bf16.mxu0 0
      %803 = vmatpush1.bf16.msra.mxu0 0
      %804 = vmatprep.subr.bf16.mxu0 0
      %805 = vmatpush1.bf16.msra.mxu0 0
      %806 = vmatprep.subr.bf16.mxu0 0
      %807 = vmatpush1.bf16.msra.mxu0 0
      %808 = vmatprep.subr.bf16.mxu0 0
      %809 = vmatpush1.bf16.msra.mxu0 0
      %810 = vmatprep.subr.bf16.mxu0 0
      %811 = vmatpush1.bf16.msra.mxu0 0
      %812 = vmatprep.subr.bf16.mxu0 0
      %813 = vmatpush1.bf16.msra.mxu0 0
      %814 = vmatprep.subr.bf16.mxu0 0
      %815 = vmatpush1.bf16.msra.mxu0 0
      %816 = vmatprep.mubr.bf16.mxu0 0
      %817 = vmatmul.mubr.bf16.gmra.mrb[0].mxu0 %v671
      %v818 = vpop.f32.mrb[0].mxu0
      %v819 = vadd.f32 0.0, %v818
      %v820 = vpop.f32.mrb[0].mxu0
      %v821 = vpop.f32.mrb[0].mxu0
      %v822 = vadd.f32 0.0, %v821
      %v823 = vpop.f32.mrb[0].mxu0
      %824 = vmatprep.mubr.bf16.mxu0 0
      %825 = vmatmul.mubr.bf16.gmra.mrb[0].mxu0 %v674
      %v826 = vpop.f32.mrb[0].mxu0
      %v827 = vadd.f32 0.0, %v826
      %v828 = vpop.f32.mrb[0].mxu0
      %v829 = vpop.f32.mrb[0].mxu0
      %v830 = vadd.f32 0.0, %v829
      %v831 = vpop.f32.mrb[0].mxu0
      %832 = vmatprep.mubr.bf16.mxu0 0
      %833 = vmatmul.mubr.bf16.gmra.mrb[0].mxu0 %v677
      %v834 = vpop.f32.mrb[0].mxu0
      %v835 = vadd.f32 0.0, %v834
      %v836 = vpop.f32.mrb[0].mxu0
      %v837 = vpop.f32.mrb[0].mxu0
      %v838 = vadd.f32 0.0, %v837
      %v839 = vpop.f32.mrb[0].mxu0
      %840 = vmatprep.mubr.bf16.mxu0 0
      %841 = vmatmul.mubr.bf16.gmra.mrb[0].mxu0 %v680
      %v842 = vpop.f32.mrb[0].mxu0
      %v843 = vadd.f32 0.0, %v842
      %v844 = vpop.f32.mrb[0].mxu0
      %v845 = vpop.f32.mrb[0].mxu0
      %v846 = vadd.f32 0.0, %v845
      %v847 = vpop.f32.mrb[0].mxu0
      %848 = vmatprep.mubr.bf16.mxu0 0
      %849 = vmatmul.mubr.bf16.gmra.mrb[0].mxu0 %v683
      %v850 = vpop.f32.mrb[0].mxu0
      %v851 = vadd.f32 0.0, %v850
      %v852 = vpop.f32.mrb[0].mxu0
      %v853 = vpop.f32.mrb[0].mxu0
      %v854 = vadd.f32 0.0, %v853
      %v855 = vpop.f32.mrb[0].mxu0
      %856 = vmatprep.mubr.bf16.mxu0 0
      %857 = vmatmul.mubr.bf16.gmra.mrb[0].mxu0 %v686
      %v858 = vpop.f32.mrb[0].mxu0
      %v859 = vadd.f32 0.0, %v858
      %v860 = vpop.f32.mrb[0].mxu0
      %v861 = vpop.f32.mrb[0].mxu0
      %v862 = vadd.f32 0.0, %v861
      %v863 = vpop.f32.mrb[0].mxu0
      %864 = vmatprep.mubr.bf16.mxu0 0
      %865 = vmatmul.mubr.bf16.gmra.mrb[0].mxu0 %v689
      %v866 = vpop.f32.mrb[0].mxu0
      %v867 = vadd.f32 0.0, %v866
      %v868 = vpop.f32.mrb[0].mxu0
      %v869 = vpop.f32.mrb[0].mxu0
      %v870 = vadd.f32 0.0, %v869
      %v871 = vpop.f32.mrb[0].mxu0
      %872 = vmatprep.mubr.bf16.mxu0 0
      %873 = vmatmul.mubr.bf16.gmra.mrb[0].mxu0 %v692
      %v874 = vpop.f32.mrb[0].mxu0
      %v875 = vadd.f32 0.0, %v874
      %v876 = vpop.f32.mrb[0].mxu0
      %v877 = vpop.f32.mrb[0].mxu0
      %v878 = vadd.f32 0.0, %v877
      %v879 = vpop.f32.mrb[0].mxu0
      %880 = vmatprep.mubr.bf16.mxu0 0
      %881 = vmatmul.mubr.bf16.gmra.mrb[0].mxu0 %v695
      %v882 = vpop.f32.mrb[0].mxu0
      %v883 = vadd.f32 0.0, %v882
      %v884 = vpop.f32.mrb[0].mxu0
      %v885 = vpop.f32.mrb[0].mxu0
      %v886 = vadd.f32 0.0, %v885
      %v887 = vpop.f32.mrb[0].mxu0
      %888 = vmatprep.mubr.bf16.mxu0 0
      %889 = vmatmul.mubr.bf16.gmra.mrb[0].mxu0 %v698
      %v890 = vpop.f32.mrb[0].mxu0
      %v891 = vadd.f32 0.0, %v890
      %v892 = vpop.f32.mrb[0].mxu0
      %v893 = vpop.f32.mrb[0].mxu0
      %v894 = vadd.f32 0.0, %v893
      %v895 = vpop.f32.mrb[0].mxu0
      %896 = vmatprep.mubr.bf16.mxu0 0
      %897 = vmatmul.mubr.bf16.gmra.mrb[0].mxu0 %v701
      %v898 = vpop.f32.mrb[0].mxu0
      %v899 = vadd.f32 0.0, %v898
      %v900 = vpop.f32.mrb[0].mxu0
      %v901 = vpop.f32.mrb[0].mxu0
      %v902 = vadd.f32 0.0, %v901
      %v903 = vpop.f32.mrb[0].mxu0
      %904 = vmatprep.mubr.bf16.mxu0 0
      %905 = vmatmul.mubr.bf16.gmra.mrb[0].mxu0 %v704
      %v906 = vpop.f32.mrb[0].mxu0
      %v907 = vadd.f32 0.0, %v906
      %v908 = vpop.f32.mrb[0].mxu0
      %v909 = vpop.f32.mrb[0].mxu0
      %v910 = vadd.f32 0.0, %v909
      %v911 = vpop.f32.mrb[0].mxu0
      %912 = vmatprep.mubr.bf16.mxu0 0
      %913 = vmatmul.mubr.bf16.gmra.mrb[0].mxu0 %v707
      %v914 = vpop.f32.mrb[0].mxu0
      %v915 = vadd.f32 0.0, %v914
      %v916 = vpop.f32.mrb[0].mxu0
      %v917 = vpop.f32.mrb[0].mxu0
      %v918 = vadd.f32 0.0, %v917
      %v919 = vpop.f32.mrb[0].mxu0
      %920 = vmatprep.mubr.bf16.mxu0 0
      %921 = vmatmul.mubr.bf16.gmra.mrb[0].mxu0 %v710
      %v922 = vpop.f32.mrb[0].mxu0
      %v923 = vadd.f32 0.0, %v922
      %v924 = vpop.f32.mrb[0].mxu0
      %v925 = vpop.f32.mrb[0].mxu0
      %v926 = vadd.f32 0.0, %v925
      %v927 = vpop.f32.mrb[0].mxu0
      %928 = vmatprep.mubr.bf16.mxu0 0
      %929 = vmatmul.mubr.bf16.gmra.mrb[0].mxu0 %v713
      %v930 = vpop.f32.mrb[0].mxu0
      %v931 = vadd.f32 0.0, %v930
      %v932 = vpop.f32.mrb[0].mxu0
      %v933 = vpop.f32.mrb[0].mxu0
      %v934 = vadd.f32 0.0, %v933
      %v935 = vpop.f32.mrb[0].mxu0
      %936 = vmatprep.mubr.bf16.mxu0 0
      %937 = vmatmul.mubr.bf16.gmra.mrb[0].mxu0 %v716
      %v938 = vpop.f32.mrb[0].mxu0
      %v939 = vadd.f32 0.0, %v938
      %v940 = vpop.f32.mrb[0].mxu0
      %v941 = vpop.f32.mrb[0].mxu0
      %v942 = vadd.f32 0.0, %v941
      %v943 = vpop.f32.mrb[0].mxu0
      %944 = vmatprep.mubr.bf16.mxu0 0
      %945 = vmatmul.mubr.bf16.gmra.mrb[0].mxu0 %v719
      %v946 = vpop.f32.mrb[0].mxu0
      %v947 = vadd.f32 0.0, %v946
      %v948 = vpop.f32.mrb[0].mxu0
      %v949 = vpop.f32.mrb[0].mxu0
      %v950 = vadd.f32 0.0, %v949
      %v951 = vpop.f32.mrb[0].mxu0
      %952 = vmatprep.mubr.bf16.mxu0 0
      %953 = vmatmul.mubr.bf16.gmra.mrb[0].mxu0 %v722
      %v954 = vpop.f32.mrb[0].mxu0
      %v955 = vadd.f32 0.0, %v954
      %v956 = vpop.f32.mrb[0].mxu0
      %v957 = vpop.f32.mrb[0].mxu0
      %v958 = vadd.f32 0.0, %v957
      %v959 = vpop.f32.mrb[0].mxu0
      %960 = vmatprep.mubr.bf16.mxu0 0
      %961 = vmatmul.mubr.bf16.gmra.mrb[0].mxu0 %v725
      %v962 = vpop.f32.mrb[0].mxu0
      %v963 = vadd.f32 0.0, %v962
      %v964 = vpop.f32.mrb[0].mxu0
      %v965 = vpop.f32.mrb[0].mxu0
      %v966 = vadd.f32 0.0, %v965
      %v967 = vpop.f32.mrb[0].mxu0
      %968 = vmatprep.mubr.bf16.mxu0 0
      %969 = vmatmul.mubr.bf16.gmra.mrb[0].mxu0 %v728
      %v970 = vpop.f32.mrb[0].mxu0
      %v971 = vadd.f32 0.0, %v970
      %v972 = vpop.f32.mrb[0].mxu0
      %v973 = vpop.f32.mrb[0].mxu0
      %v974 = vadd.f32 0.0, %v973
      %v975 = vpop.f32.mrb[0].mxu0
      %976 = vmatprep.mubr.bf16.mxu0 0
      %977 = vmatmul.mubr.bf16.gmra.mrb[0].mxu0 %v731
      %v978 = vpop.f32.mrb[0].mxu0
      %v979 = vadd.f32 0.0, %v978
      %v980 = vpop.f32.mrb[0].mxu0
      %v981 = vpop.f32.mrb[0].mxu0
      %v982 = vadd.f32 0.0, %v981
      %v983 = vpop.f32.mrb[0].mxu0
      %984 = vmatprep.mubr.bf16.mxu0 0
      %985 = vmatmul.mubr.bf16.gmra.mrb[0].mxu0 %v734
      %v986 = vpop.f32.mrb[0].mxu0
      %v987 = vadd.f32 0.0, %v986
      %v988 = vpop.f32.mrb[0].mxu0
      %v989 = vpop.f32.mrb[0].mxu0
      %v990 = vadd.f32 0.0, %v989
      %v991 = vpop.f32.mrb[0].mxu0
      %992 = vmatprep.mubr.bf16.mxu0 0
      %993 = vmatmul.mubr.bf16.gmra.mrb[0].mxu0 %v737
      %v994 = vpop.f32.mrb[0].mxu0
      %v995 = vadd.f32 0.0, %v994
      %v996 = vpop.f32.mrb[0].mxu0
      %v997 = vpop.f32.mrb[0].mxu0
      %v998 = vadd.f32 0.0, %v997
      %v999 = vpop.f32.mrb[0].mxu0
      %1000 = vmatprep.mubr.bf16.mxu0 0
      %1001 = vmatmul.mubr.bf16.gmra.mrb[0].mxu0 %v740
      %v1002 = vpop.f32.mrb[0].mxu0
      %v1003 = vadd.f32 0.0, %v1002
      %v1004 = vpop.f32.mrb[0].mxu0
      %v1005 = vpop.f32.mrb[0].mxu0
      %v1006 = vadd.f32 0.0, %v1005
      %v1007 = vpop.f32.mrb[0].mxu0
      %1008 = vmatprep.mubr.bf16.mxu0 0
      %1009 = vmatmul.mubr.bf16.gmra.mrb[0].mxu0 %v743
      %v1010 = vpop.f32.mrb[0].mxu0
      %v1011 = vadd.f32 0.0, %v1010
      %v1012 = vpop.f32.mrb[0].mxu0
      %v1013 = vpop.f32.mrb[0].mxu0
      %v1014 = vadd.f32 0.0, %v1013
      %v1015 = vpop.f32.mrb[0].mxu0
      %1016 = vmatprep.mubr.bf16.mxu0 0
      %1017 = vmatmul.mubr.bf16.gmra.mrb[0].mxu0 %v746
      %v1018 = vpop.f32.mrb[0].mxu0
      %v1019 = vadd.f32 0.0, %v1018
      %v1020 = vpop.f32.mrb[0].mxu0
      %v1021 = vpop.f32.mrb[0].mxu0
      %v1022 = vadd.f32 0.0, %v1021
      %v1023 = vpop.f32.mrb[0].mxu0
      %1024 = vmatprep.mubr.bf16.mxu0 0
      %1025 = vmatmul.mubr.bf16.gmra.mrb[0].mxu0 %v749
      %v1026 = vpop.f32.mrb[0].mxu0
      %v1027 = vadd.f32 0.0, %v1026
      %v1028 = vpop.f32.mrb[0].mxu0
      %v1029 = vpop.f32.mrb[0].mxu0
      %v1030 = vadd.f32 0.0, %v1029
      %v1031 = vpop.f32.mrb[0].mxu0
      %1032 = vmatprep.mubr.bf16.mxu0 0
      %1033 = vmatmul.mubr.bf16.gmra.mrb[0].mxu0 %v752
      %v1034 = vpop.f32.mrb[0].mxu0
      %v1035 = vadd.f32 0.0, %v1034
      %v1036 = vpop.f32.mrb[0].mxu0
      %v1037 = vpop.f32.mrb[0].mxu0
      %v1038 = vadd.f32 0.0, %v1037
      %v1039 = vpop.f32.mrb[0].mxu0
      %1040 = vmatprep.mubr.bf16.mxu0 0
      %1041 = vmatmul.mubr.bf16.gmra.mrb[0].mxu0 %v755
      %v1042 = vpop.f32.mrb[0].mxu0
      %v1043 = vadd.f32 0.0, %v1042
      %v1044 = vpop.f32.mrb[0].mxu0
      %v1045 = vpop.f32.mrb[0].mxu0
      %v1046 = vadd.f32 0.0, %v1045
      %v1047 = vpop.f32.mrb[0].mxu0
      %1048 = vmatprep.mubr.bf16.mxu0 0
      %1049 = vmatmul.mubr.bf16.gmra.mrb[0].mxu0 %v758
      %v1050 = vpop.f32.mrb[0].mxu0
      %v1051 = vadd.f32 0.0, %v1050
      %v1052 = vpop.f32.mrb[0].mxu0
      %v1053 = vpop.f32.mrb[0].mxu0
      %v1054 = vadd.f32 0.0, %v1053
      %v1055 = vpop.f32.mrb[0].mxu0
      %1056 = vmatprep.mubr.bf16.mxu0 0
      %1057 = vmatmul.mubr.bf16.gmra.mrb[0].mxu0 %v761
      %v1058 = vpop.f32.mrb[0].mxu0
      %v1059 = vadd.f32 0.0, %v1058
      %v1060 = vpop.f32.mrb[0].mxu0
      %v1061 = vpop.f32.mrb[0].mxu0
      %v1062 = vadd.f32 0.0, %v1061
      %v1063 = vpop.f32.mrb[0].mxu0
      %1064 = vmatprep.mubr.bf16.mxu0 0
      %1065 = vmatmul.mubr.bf16.gmra.mrb[0].mxu0 %v764
      %v1066 = vpop.f32.mrb[0].mxu0
      %v1067 = vadd.f32 0.0, %v1066
      %v1068 = vpop.f32.mrb[0].mxu0
      %v1069 = vpop.f32.mrb[0].mxu0
      %v1070 = vadd.f32 0.0, %v1069
      %v1071 = vpop.f32.mrb[0].mxu0
      %1072 = vmatprep.mubr.bf16.mxu0 0
      %1073 = vmatmul.mubr.bf16.gmra.mrb[0].mxu0 %v767
      %v1074 = vpop.f32.mrb[0].mxu0
      %v1075 = vadd.f32 0.0, %v1074
      %v1076 = vpop.f32.mrb[0].mxu0
      %v1077 = vpop.f32.mrb[0].mxu0
      %v1078 = vadd.f32 0.0, %v1077
      %v1079 = vpop.f32.mrb[0].mxu0
      %1080 = vmatprep.mubr.bf16.mxu0 0
      %1081 = vmatmul.mubr.bf16.gmra.mrb[0].mxu0 %v770
      %v1082 = vpop.f32.mrb[0].mxu0
      %v1083 = vadd.f32 0.0, %v1082
      %v1084 = vpop.f32.mrb[0].mxu0
      %v1085 = vpop.f32.mrb[0].mxu0
      %v1086 = vadd.f32 0.0, %v1085
      %v1087 = vpop.f32.mrb[0].mxu0
      %1088 = vmatprep.mubr.bf16.mxu0 0
      %1089 = vmatmul.mubr.bf16.gmra.mrb[0].mxu0 %v773
      %v1090 = vpop.f32.mrb[0].mxu0
      %v1091 = vadd.f32 0.0, %v1090
      %v1092 = vpop.f32.mrb[0].mxu0
      %v1093 = vpop.f32.mrb[0].mxu0
      %v1094 = vadd.f32 0.0, %v1093
      %v1095 = vpop.f32.mrb[0].mxu0
      %1096 = vmatprep.mubr.bf16.mxu0 0
      %1097 = vmatmul.mubr.bf16.gmra.mrb[0].mxu0 %v776
      %v1098 = vpop.f32.mrb[0].mxu0
      %v1099 = vadd.f32 0.0, %v1098
      %v1100 = vpop.f32.mrb[0].mxu0
      %v1101 = vpop.f32.mrb[0].mxu0
      %v1102 = vadd.f32 0.0, %v1101
      %v1103 = vpop.f32.mrb[0].mxu0
      %1104 = vdwg.mxu0
      %1105 = vrot.lane.b32.xlu0 %v819, 64
      %v1106 = vpop.permute.xlu0 %1105
      %1107 = vrot.lane.b32.xlu0 %v822, 64
      %v1108 = vpop.permute.xlu0 %1107
      %1109 = vrot.lane.b32.xlu0 %v827, 64
      %v1110 = vpop.permute.xlu0 %1109
      %1111 = vrot.lane.b32.xlu0 %v830, 64
      %v1112 = vpop.permute.xlu0 %1111
      %1113 = vrot.lane.b32.xlu0 %v835, 64
      %v1114 = vpop.permute.xlu0 %1113
      %1115 = vrot.lane.b32.xlu0 %v838, 64
      %v1116 = vpop.permute.xlu0 %1115
      %1117 = vrot.lane.b32.xlu0 %v843, 64
      %v1118 = vpop.permute.xlu0 %1117
      %1119 = vrot.lane.b32.xlu0 %v846, 64
      %v1120 = vpop.permute.xlu0 %1119
      %1121 = vrot.lane.b32.xlu0 %v851, 64
      %v1122 = vpop.permute.xlu0 %1121
      %1123 = vrot.lane.b32.xlu0 %v854, 64
      %v1124 = vpop.permute.xlu0 %1123
      %1125 = vrot.lane.b32.xlu0 %v859, 64
      %v1126 = vpop.permute.xlu0 %1125
      %1127 = vrot.lane.b32.xlu0 %v862, 64
      %v1128 = vpop.permute.xlu0 %1127
      %1129 = vrot.lane.b32.xlu0 %v867, 64
      %v1130 = vpop.permute.xlu0 %1129
      %1131 = vrot.lane.b32.xlu0 %v870, 64
      %v1132 = vpop.permute.xlu0 %1131
      %1133 = vrot.lane.b32.xlu0 %v875, 64
      %v1134 = vpop.permute.xlu0 %1133
      %1135 = vrot.lane.b32.xlu0 %v878, 64
      %v1136 = vpop.permute.xlu0 %1135
      %1137 = vrot.lane.b32.xlu0 %v883, 64
      %v1138 = vpop.permute.xlu0 %1137
      %1139 = vrot.lane.b32.xlu0 %v886, 64
      %v1140 = vpop.permute.xlu0 %1139
      %1141 = vrot.lane.b32.xlu0 %v891, 64
      %v1142 = vpop.permute.xlu0 %1141
      %1143 = vrot.lane.b32.xlu0 %v894, 64
      %v1144 = vpop.permute.xlu0 %1143
      %1145 = vrot.lane.b32.xlu0 %v899, 64
      %v1146 = vpop.permute.xlu0 %1145
      %1147 = vrot.lane.b32.xlu0 %v902, 64
      %v1148 = vpop.permute.xlu0 %1147
      %1149 = vrot.lane.b32.xlu0 %v907, 64
      %v1150 = vpop.permute.xlu0 %1149
      %1151 = vrot.lane.b32.xlu0 %v910, 64
      %v1152 = vpop.permute.xlu0 %1151
      %1153 = vrot.lane.b32.xlu0 %v915, 64
      %v1154 = vpop.permute.xlu0 %1153
      %1155 = vrot.lane.b32.xlu0 %v918, 64
      %v1156 = vpop.permute.xlu0 %1155
      %1157 = vrot.lane.b32.xlu0 %v923, 64
      %v1158 = vpop.permute.xlu0 %1157
      %1159 = vrot.lane.b32.xlu0 %v926, 64
      %v1160 = vpop.permute.xlu0 %1159
      %1161 = vrot.lane.b32.xlu0 %v931, 64
      %v1162 = vpop.permute.xlu0 %1161
      %1163 = vrot.lane.b32.xlu0 %v934, 64
      %v1164 = vpop.permute.xlu0 %1163
      %1165 = vrot.lane.b32.xlu0 %v939, 64
      %v1166 = vpop.permute.xlu0 %1165
      %1167 = vrot.lane.b32.xlu0 %v942, 64
      %v1168 = vpop.permute.xlu0 %1167
      %1169 = vrot.lane.b32.xlu0 %v947, 64
      %v1170 = vpop.permute.xlu0 %1169
      %1171 = vrot.lane.b32.xlu0 %v950, 64
      %v1172 = vpop.permute.xlu0 %1171
      %1173 = vrot.lane.b32.xlu0 %v955, 64
      %v1174 = vpop.permute.xlu0 %1173
      %1175 = vrot.lane.b32.xlu0 %v958, 64
      %v1176 = vpop.permute.xlu0 %1175
      %1177 = vrot.lane.b32.xlu0 %v963, 64
      %v1178 = vpop.permute.xlu0 %1177
      %1179 = vrot.lane.b32.xlu0 %v966, 64
      %v1180 = vpop.permute.xlu0 %1179
      %1181 = vrot.lane.b32.xlu0 %v971, 64
      %v1182 = vpop.permute.xlu0 %1181
      %1183 = vrot.lane.b32.xlu0 %v974, 64
      %v1184 = vpop.permute.xlu0 %1183
      %1185 = vrot.lane.b32.xlu0 %v979, 64
      %v1186 = vpop.permute.xlu0 %1185
      %1187 = vrot.lane.b32.xlu0 %v982, 64
      %v1188 = vpop.permute.xlu0 %1187
      %1189 = vrot.lane.b32.xlu0 %v987, 64
      %v1190 = vpop.permute.xlu0 %1189
      %1191 = vrot.lane.b32.xlu0 %v990, 64
      %v1192 = vpop.permute.xlu0 %1191
      %1193 = vrot.lane.b32.xlu0 %v995, 64
      %v1194 = vpop.permute.xlu0 %1193
      %1195 = vrot.lane.b32.xlu0 %v998, 64
      %v1196 = vpop.permute.xlu0 %1195
      %1197 = vrot.lane.b32.xlu0 %v1003, 64
      %v1198 = vpop.permute.xlu0 %1197
      %1199 = vrot.lane.b32.xlu0 %v1006, 64
      %v1200 = vpop.permute.xlu0 %1199
      %1201 = vrot.lane.b32.xlu0 %v1011, 64
      %v1202 = vpop.permute.xlu0 %1201
      %1203 = vrot.lane.b32.xlu0 %v1014, 64
      %v1204 = vpop.permute.xlu0 %1203
      %1205 = vrot.lane.b32.xlu0 %v1019, 64
      %v1206 = vpop.permute.xlu0 %1205
      %1207 = vrot.lane.b32.xlu0 %v1022, 64
      %v1208 = vpop.permute.xlu0 %1207
      %1209 = vrot.lane.b32.xlu0 %v1027, 64
      %v1210 = vpop.permute.xlu0 %1209
      %1211 = vrot.lane.b32.xlu0 %v1030, 64
      %v1212 = vpop.permute.xlu0 %1211
      %1213 = vrot.lane.b32.xlu0 %v1035, 64
      %v1214 = vpop.permute.xlu0 %1213
      %1215 = vrot.lane.b32.xlu0 %v1038, 64
      %v1216 = vpop.permute.xlu0 %1215
      %1217 = vrot.lane.b32.xlu0 %v1043, 64
      %v1218 = vpop.permute.xlu0 %1217
      %1219 = vrot.lane.b32.xlu0 %v1046, 64
      %v1220 = vpop.permute.xlu0 %1219
      %1221 = vrot.lane.b32.xlu0 %v1051, 64
      %v1222 = vpop.permute.xlu0 %1221
      %1223 = vrot.lane.b32.xlu0 %v1054, 64
      %v1224 = vpop.permute.xlu0 %1223
      %1225 = vrot.lane.b32.xlu0 %v1059, 64
      %v1226 = vpop.permute.xlu0 %1225
      %1227 = vrot.lane.b32.xlu0 %v1062, 64
      %v1228 = vpop.permute.xlu0 %1227
      %1229 = vrot.lane.b32.xlu0 %v1067, 64
      %v1230 = vpop.permute.xlu0 %1229
      %1231 = vrot.lane.b32.xlu0 %v1070, 64
      %v1232 = vpop.permute.xlu0 %1231
      %1233 = vrot.lane.b32.xlu0 %v1075, 64
      %v1234 = vpop.permute.xlu0 %1233
      %1235 = vrot.lane.b32.xlu0 %v1078, 64
      %v1236 = vpop.permute.xlu0 %1235
      %1237 = vrot.lane.b32.xlu0 %v1083, 64
      %v1238 = vpop.permute.xlu0 %1237
      %1239 = vrot.lane.b32.xlu0 %v1086, 64
      %v1240 = vpop.permute.xlu0 %1239
      %1241 = vrot.lane.b32.xlu0 %v1091, 64
      %v1242 = vpop.permute.xlu0 %1241
      %1243 = vrot.lane.b32.xlu0 %v1094, 64
      %v1244 = vpop.permute.xlu0 %1243
      %1245 = vrot.lane.b32.xlu0 %v1099, 64
      %v1246 = vpop.permute.xlu0 %1245
      %1247 = vrot.lane.b32.xlu0 %v1102, 64
      %v1248 = vpop.permute.xlu0 %1247
      %v1249 = vmax.f32 %v819, %v1106
      %v1250 = vmax.f32 %v822, %v1108
      %v1251 = vmax.f32 %v827, %v1110
      %v1252 = vmax.f32 %v830, %v1112
      %v1253 = vmax.f32 %v835, %v1114
      %v1254 = vmax.f32 %v838, %v1116
      %v1255 = vmax.f32 %v843, %v1118
      %v1256 = vmax.f32 %v846, %v1120
      %v1257 = vmax.f32 %v851, %v1122
      %v1258 = vmax.f32 %v854, %v1124
      %v1259 = vmax.f32 %v859, %v1126
      %v1260 = vmax.f32 %v862, %v1128
      %v1261 = vmax.f32 %v867, %v1130
      %v1262 = vmax.f32 %v870, %v1132
      %v1263 = vmax.f32 %v875, %v1134
      %v1264 = vmax.f32 %v878, %v1136
      %v1265 = vmax.f32 %v883, %v1138
      %v1266 = vmax.f32 %v886, %v1140
      %v1267 = vmax.f32 %v891, %v1142
      %v1268 = vmax.f32 %v894, %v1144
      %v1269 = vmax.f32 %v899, %v1146
      %v1270 = vmax.f32 %v902, %v1148
      %v1271 = vmax.f32 %v907, %v1150
      %v1272 = vmax.f32 %v910, %v1152
      %v1273 = vmax.f32 %v915, %v1154
      %v1274 = vmax.f32 %v918, %v1156
      %v1275 = vmax.f32 %v923, %v1158
      %v1276 = vmax.f32 %v926, %v1160
      %v1277 = vmax.f32 %v931, %v1162
      %v1278 = vmax.f32 %v934, %v1164
      %v1279 = vmax.f32 %v939, %v1166
      %v1280 = vmax.f32 %v942, %v1168
      %v1281 = vmax.f32 %v947, %v1170
      %v1282 = vmax.f32 %v950, %v1172
      %v1283 = vmax.f32 %v955, %v1174
      %v1284 = vmax.f32 %v958, %v1176
      %v1285 = vmax.f32 %v963, %v1178
      %v1286 = vmax.f32 %v966, %v1180
      %v1287 = vmax.f32 %v971, %v1182
      %v1288 = vmax.f32 %v974, %v1184
      %v1289 = vmax.f32 %v979, %v1186
      %v1290 = vmax.f32 %v982, %v1188
      %v1291 = vmax.f32 %v987, %v1190
      %v1292 = vmax.f32 %v990, %v1192
      %v1293 = vmax.f32 %v995, %v1194
      %v1294 = vmax.f32 %v998, %v1196
      %v1295 = vmax.f32 %v1003, %v1198
      %v1296 = vmax.f32 %v1006, %v1200
      %v1297 = vmax.f32 %v1011, %v1202
      %v1298 = vmax.f32 %v1014, %v1204
      %v1299 = vmax.f32 %v1019, %v1206
      %v1300 = vmax.f32 %v1022, %v1208
      %v1301 = vmax.f32 %v1027, %v1210
      %v1302 = vmax.f32 %v1030, %v1212
      %v1303 = vmax.f32 %v1035, %v1214
      %v1304 = vmax.f32 %v1038, %v1216
      %v1305 = vmax.f32 %v1043, %v1218
      %v1306 = vmax.f32 %v1046, %v1220
      %v1307 = vmax.f32 %v1051, %v1222
      %v1308 = vmax.f32 %v1054, %v1224
      %v1309 = vmax.f32 %v1059, %v1226
      %v1310 = vmax.f32 %v1062, %v1228
      %v1311 = vmax.f32 %v1067, %v1230
      %v1312 = vmax.f32 %v1070, %v1232
      %v1313 = vmax.f32 %v1075, %v1234
      %v1314 = vmax.f32 %v1078, %v1236
      %v1315 = vmax.f32 %v1083, %v1238
      %v1316 = vmax.f32 %v1086, %v1240
      %v1317 = vmax.f32 %v1091, %v1242
      %v1318 = vmax.f32 %v1094, %v1244
      %v1319 = vmax.f32 %v1099, %v1246
      %v1320 = vmax.f32 %v1102, %v1248
      %1321 = vrot.lane.b32.xlu0 %v1249, 32
      %v1322 = vpop.permute.xlu0 %1321
      %1323 = vrot.lane.b32.xlu0 %v1250, 32
      %v1324 = vpop.permute.xlu0 %1323
      %1325 = vrot.lane.b32.xlu0 %v1251, 32
      %v1326 = vpop.permute.xlu0 %1325
      %1327 = vrot.lane.b32.xlu0 %v1252, 32
      %v1328 = vpop.permute.xlu0 %1327
      %1329 = vrot.lane.b32.xlu0 %v1253, 32
      %v1330 = vpop.permute.xlu0 %1329
      %1331 = vrot.lane.b32.xlu0 %v1254, 32
      %v1332 = vpop.permute.xlu0 %1331
      %1333 = vrot.lane.b32.xlu0 %v1255, 32
      %v1334 = vpop.permute.xlu0 %1333
      %1335 = vrot.lane.b32.xlu0 %v1256, 32
      %v1336 = vpop.permute.xlu0 %1335
      %1337 = vrot.lane.b32.xlu0 %v1257, 32
      %v1338 = vpop.permute.xlu0 %1337
      %1339 = vrot.lane.b32.xlu0 %v1258, 32
      %v1340 = vpop.permute.xlu0 %1339
      %1341 = vrot.lane.b32.xlu0 %v1259, 32
      %v1342 = vpop.permute.xlu0 %1341
      %1343 = vrot.lane.b32.xlu0 %v1260, 32
      %v1344 = vpop.permute.xlu0 %1343
      %1345 = vrot.lane.b32.xlu0 %v1261, 32
      %v1346 = vpop.permute.xlu0 %1345
      %1347 = vrot.lane.b32.xlu0 %v1262, 32
      %v1348 = vpop.permute.xlu0 %1347
      %1349 = vrot.lane.b32.xlu0 %v1263, 32
      %v1350 = vpop.permute.xlu0 %1349
      %1351 = vrot.lane.b32.xlu0 %v1264, 32
      %v1352 = vpop.permute.xlu0 %1351
      %1353 = vrot.lane.b32.xlu0 %v1265, 32
      %v1354 = vpop.permute.xlu0 %1353
      %1355 = vrot.lane.b32.xlu0 %v1266, 32
      %v1356 = vpop.permute.xlu0 %1355
      %1357 = vrot.lane.b32.xlu0 %v1267, 32
      %v1358 = vpop.permute.xlu0 %1357
      %1359 = vrot.lane.b32.xlu0 %v1268, 32
      %v1360 = vpop.permute.xlu0 %1359
      %1361 = vrot.lane.b32.xlu0 %v1269, 32
      %v1362 = vpop.permute.xlu0 %1361
      %1363 = vrot.lane.b32.xlu0 %v1270, 32
      %v1364 = vpop.permute.xlu0 %1363
      %1365 = vrot.lane.b32.xlu0 %v1271, 32
      %v1366 = vpop.permute.xlu0 %1365
      %1367 = vrot.lane.b32.xlu0 %v1272, 32
      %v1368 = vpop.permute.xlu0 %1367
      %1369 = vrot.lane.b32.xlu0 %v1273, 32
      %v1370 = vpop.permute.xlu0 %1369
      %1371 = vrot.lane.b32.xlu0 %v1274, 32
      %v1372 = vpop.permute.xlu0 %1371
      %1373 = vrot.lane.b32.xlu0 %v1275, 32
      %v1374 = vpop.permute.xlu0 %1373
      %1375 = vrot.lane.b32.xlu0 %v1276, 32
      %v1376 = vpop.permute.xlu0 %1375
      %1377 = vrot.lane.b32.xlu0 %v1277, 32
      %v1378 = vpop.permute.xlu0 %1377
      %1379 = vrot.lane.b32.xlu0 %v1278, 32
      %v1380 = vpop.permute.xlu0 %1379
      %1381 = vrot.lane.b32.xlu0 %v1279, 32
      %v1382 = vpop.permute.xlu0 %1381
      %1383 = vrot.lane.b32.xlu0 %v1280, 32
      %v1384 = vpop.permute.xlu0 %1383
      %1385 = vrot.lane.b32.xlu0 %v1281, 32
      %v1386 = vpop.permute.xlu0 %1385
      %1387 = vrot.lane.b32.xlu0 %v1282, 32
      %v1388 = vpop.permute.xlu0 %1387
      %1389 = vrot.lane.b32.xlu0 %v1283, 32
      %v1390 = vpop.permute.xlu0 %1389
      %1391 = vrot.lane.b32.xlu0 %v1284, 32
      %v1392 = vpop.permute.xlu0 %1391
      %1393 = vrot.lane.b32.xlu0 %v1285, 32
      %v1394 = vpop.permute.xlu0 %1393
      %1395 = vrot.lane.b32.xlu0 %v1286, 32
      %v1396 = vpop.permute.xlu0 %1395
      %1397 = vrot.lane.b32.xlu0 %v1287, 32
      %v1398 = vpop.permute.xlu0 %1397
      %1399 = vrot.lane.b32.xlu0 %v1288, 32
      %v1400 = vpop.permute.xlu0 %1399
      %1401 = vrot.lane.b32.xlu0 %v1289, 32
      %v1402 = vpop.permute.xlu0 %1401
      %1403 = vrot.lane.b32.xlu0 %v1290, 32
      %v1404 = vpop.permute.xlu0 %1403
      %1405 = vrot.lane.b32.xlu0 %v1291, 32
      %v1406 = vpop.permute.xlu0 %1405
      %1407 = vrot.lane.b32.xlu0 %v1292, 32
      %v1408 = vpop.permute.xlu0 %1407
      %1409 = vrot.lane.b32.xlu0 %v1293, 32
      %v1410 = vpop.permute.xlu0 %1409
      %1411 = vrot.lane.b32.xlu0 %v1294, 32
      %v1412 = vpop.permute.xlu0 %1411
      %1413 = vrot.lane.b32.xlu0 %v1295, 32
      %v1414 = vpop.permute.xlu0 %1413
      %1415 = vrot.lane.b32.xlu0 %v1296, 32
      %v1416 = vpop.permute.xlu0 %1415
      %1417 = vrot.lane.b32.xlu0 %v1297, 32
      %v1418 = vpop.permute.xlu0 %1417
      %1419 = vrot.lane.b32.xlu0 %v1298, 32
      %v1420 = vpop.permute.xlu0 %1419
      %1421 = vrot.lane.b32.xlu0 %v1299, 32
      %v1422 = vpop.permute.xlu0 %1421
      %1423 = vrot.lane.b32.xlu0 %v1300, 32
      %v1424 = vpop.permute.xlu0 %1423
      %1425 = vrot.lane.b32.xlu0 %v1301, 32
      %v1426 = vpop.permute.xlu0 %1425
      %1427 = vrot.lane.b32.xlu0 %v1302, 32
      %v1428 = vpop.permute.xlu0 %1427
      %1429 = vrot.lane.b32.xlu0 %v1303, 32
      %v1430 = vpop.permute.xlu0 %1429
      %1431 = vrot.lane.b32.xlu0 %v1304, 32
      %v1432 = vpop.permute.xlu0 %1431
      %1433 = vrot.lane.b32.xlu0 %v1305, 32
      %v1434 = vpop.permute.xlu0 %1433
      %1435 = vrot.lane.b32.xlu0 %v1306, 32
      %v1436 = vpop.permute.xlu0 %1435
      %1437 = vrot.lane.b32.xlu0 %v1307, 32
      %v1438 = vpop.permute.xlu0 %1437
      %1439 = vrot.lane.b32.xlu0 %v1308, 32
      %v1440 = vpop.permute.xlu0 %1439
      %1441 = vrot.lane.b32.xlu0 %v1309, 32
      %v1442 = vpop.permute.xlu0 %1441
      %1443 = vrot.lane.b32.xlu0 %v1310, 32
      %v1444 = vpop.permute.xlu0 %1443
      %1445 = vrot.lane.b32.xlu0 %v1311, 32
      %v1446 = vpop.permute.xlu0 %1445
      %1447 = vrot.lane.b32.xlu0 %v1312, 32
      %v1448 = vpop.permute.xlu0 %1447
      %1449 = vrot.lane.b32.xlu0 %v1313, 32
      %v1450 = vpop.permute.xlu0 %1449
      %1451 = vrot.lane.b32.xlu0 %v1314, 32
      %v1452 = vpop.permute.xlu0 %1451
      %1453 = vrot.lane.b32.xlu0 %v1315, 32
      %v1454 = vpop.permute.xlu0 %1453
      %1455 = vrot.lane.b32.xlu0 %v1316, 32
      %v1456 = vpop.permute.xlu0 %1455
      %1457 = vrot.lane.b32.xlu0 %v1317, 32
      %v1458 = vpop.permute.xlu0 %1457
      %1459 = vrot.lane.b32.xlu0 %v1318, 32
      %v1460 = vpop.permute.xlu0 %1459
      %1461 = vrot.lane.b32.xlu0 %v1319, 32
      %v1462 = vpop.permute.xlu0 %1461
      %1463 = vrot.lane.b32.xlu0 %v1320, 32
      %v1464 = vpop.permute.xlu0 %1463
      %v1465 = vmax.f32 %v1249, %v1322
      %v1466 = vmax.f32 %v1250, %v1324
      %v1467 = vmax.f32 %v1251, %v1326
      %v1468 = vmax.f32 %v1252, %v1328
      %v1469 = vmax.f32 %v1253, %v1330
      %v1470 = vmax.f32 %v1254, %v1332
      %v1471 = vmax.f32 %v1255, %v1334
      %v1472 = vmax.f32 %v1256, %v1336
      %v1473 = vmax.f32 %v1257, %v1338
      %v1474 = vmax.f32 %v1258, %v1340
      %v1475 = vmax.f32 %v1259, %v1342
      %v1476 = vmax.f32 %v1260, %v1344
      %v1477 = vmax.f32 %v1261, %v1346
      %v1478 = vmax.f32 %v1262, %v1348
      %v1479 = vmax.f32 %v1263, %v1350
      %v1480 = vmax.f32 %v1264, %v1352
      %v1481 = vmax.f32 %v1265, %v1354
      %v1482 = vmax.f32 %v1266, %v1356
      %v1483 = vmax.f32 %v1267, %v1358
      %v1484 = vmax.f32 %v1268, %v1360
      %v1485 = vmax.f32 %v1269, %v1362
      %v1486 = vmax.f32 %v1270, %v1364
      %v1487 = vmax.f32 %v1271, %v1366
      %v1488 = vmax.f32 %v1272, %v1368
      %v1489 = vmax.f32 %v1273, %v1370
      %v1490 = vmax.f32 %v1274, %v1372
      %v1491 = vmax.f32 %v1275, %v1374
      %v1492 = vmax.f32 %v1276, %v1376
      %v1493 = vmax.f32 %v1277, %v1378
      %v1494 = vmax.f32 %v1278, %v1380
      %v1495 = vmax.f32 %v1279, %v1382
      %v1496 = vmax.f32 %v1280, %v1384
      %v1497 = vmax.f32 %v1281, %v1386
      %v1498 = vmax.f32 %v1282, %v1388
      %v1499 = vmax.f32 %v1283, %v1390
      %v1500 = vmax.f32 %v1284, %v1392
      %v1501 = vmax.f32 %v1285, %v1394
      %v1502 = vmax.f32 %v1286, %v1396
      %v1503 = vmax.f32 %v1287, %v1398
      %v1504 = vmax.f32 %v1288, %v1400
      %v1505 = vmax.f32 %v1289, %v1402
      %v1506 = vmax.f32 %v1290, %v1404
      %v1507 = vmax.f32 %v1291, %v1406
      %v1508 = vmax.f32 %v1292, %v1408
      %v1509 = vmax.f32 %v1293, %v1410
      %v1510 = vmax.f32 %v1294, %v1412
      %v1511 = vmax.f32 %v1295, %v1414
      %v1512 = vmax.f32 %v1296, %v1416
      %v1513 = vmax.f32 %v1297, %v1418
      %v1514 = vmax.f32 %v1298, %v1420
      %v1515 = vmax.f32 %v1299, %v1422
      %v1516 = vmax.f32 %v1300, %v1424
      %v1517 = vmax.f32 %v1301, %v1426
      %v1518 = vmax.f32 %v1302, %v1428
      %v1519 = vmax.f32 %v1303, %v1430
      %v1520 = vmax.f32 %v1304, %v1432
      %v1521 = vmax.f32 %v1305, %v1434
      %v1522 = vmax.f32 %v1306, %v1436
      %v1523 = vmax.f32 %v1307, %v1438
      %v1524 = vmax.f32 %v1308, %v1440
      %v1525 = vmax.f32 %v1309, %v1442
      %v1526 = vmax.f32 %v1310, %v1444
      %v1527 = vmax.f32 %v1311, %v1446
      %v1528 = vmax.f32 %v1312, %v1448
      %v1529 = vmax.f32 %v1313, %v1450
      %v1530 = vmax.f32 %v1314, %v1452
      %v1531 = vmax.f32 %v1315, %v1454
      %v1532 = vmax.f32 %v1316, %v1456
      %v1533 = vmax.f32 %v1317, %v1458
      %v1534 = vmax.f32 %v1318, %v1460
      %v1535 = vmax.f32 %v1319, %v1462
      %v1536 = vmax.f32 %v1320, %v1464
      %v1537 = vld [vmem:[%s2] sm:$0x1]
      %v1539 = vlaneseq
      %v1540 = vshrl.u32 %v1539, 7
      %v1541 = vsub.s32 0, %v1540
      %v1542 = vrot.slane %v1537, %v1541
      %v1544 = vmul.f32 %v1465, %v1542
      %v1545 = vmul.f32 %v1466, %v1542
      %v1546 = vmul.f32 %v1467, %v1542
      %v1547 = vmul.f32 %v1468, %v1542
      %v1548 = vmul.f32 %v1469, %v1542
      %v1549 = vmul.f32 %v1470, %v1542
      %v1550 = vmul.f32 %v1471, %v1542
      %v1551 = vmul.f32 %v1472, %v1542
      %v1552 = vmul.f32 %v1473, %v1542
      %v1553 = vmul.f32 %v1474, %v1542
      %v1554 = vmul.f32 %v1475, %v1542
      %v1555 = vmul.f32 %v1476, %v1542
      %v1556 = vmul.f32 %v1477, %v1542
      %v1557 = vmul.f32 %v1478, %v1542
      %v1558 = vmul.f32 %v1479, %v1542
      %v1559 = vmul.f32 %v1480, %v1542
      %v1560 = vmul.f32 %v1481, %v1542
      %v1561 = vmul.f32 %v1482, %v1542
      %v1562 = vmul.f32 %v1483, %v1542
      %v1563 = vmul.f32 %v1484, %v1542
      %v1564 = vmul.f32 %v1485, %v1542
      %v1565 = vmul.f32 %v1486, %v1542
      %v1566 = vmul.f32 %v1487, %v1542
      %v1567 = vmul.f32 %v1488, %v1542
      %v1568 = vmul.f32 %v1489, %v1542
      %v1569 = vmul.f32 %v1490, %v1542
      %v1570 = vmul.f32 %v1491, %v1542
      %v1571 = vmul.f32 %v1492, %v1542
      %v1572 = vmul.f32 %v1493, %v1542
      %v1573 = vmul.f32 %v1494, %v1542
      %v1574 = vmul.f32 %v1495, %v1542
      %v1575 = vmul.f32 %v1496, %v1542
      %v1576 = vmul.f32 %v1497, %v1542
      %v1577 = vmul.f32 %v1498, %v1542
      %v1578 = vmul.f32 %v1499, %v1542
      %v1579 = vmul.f32 %v1500, %v1542
      %v1580 = vmul.f32 %v1501, %v1542
      %v1581 = vmul.f32 %v1502, %v1542
      %v1582 = vmul.f32 %v1503, %v1542
      %v1583 = vmul.f32 %v1504, %v1542
      %v1584 = vmul.f32 %v1505, %v1542
      %v1585 = vmul.f32 %v1506, %v1542
      %v1586 = vmul.f32 %v1507, %v1542
      %v1587 = vmul.f32 %v1508, %v1542
      %v1588 = vmul.f32 %v1509, %v1542
      %v1589 = vmul.f32 %v1510, %v1542
      %v1590 = vmul.f32 %v1511, %v1542
      %v1591 = vmul.f32 %v1512, %v1542
      %v1592 = vmul.f32 %v1513, %v1542
      %v1593 = vmul.f32 %v1514, %v1542
      %v1594 = vmul.f32 %v1515, %v1542
      %v1595 = vmul.f32 %v1516, %v1542
      %v1596 = vmul.f32 %v1517, %v1542
      %v1597 = vmul.f32 %v1518, %v1542
      %v1598 = vmul.f32 %v1519, %v1542
      %v1599 = vmul.f32 %v1520, %v1542
      %v1600 = vmul.f32 %v1521, %v1542
      %v1601 = vmul.f32 %v1522, %v1542
      %v1602 = vmul.f32 %v1523, %v1542
      %v1603 = vmul.f32 %v1524, %v1542
      %v1604 = vmul.f32 %v1525, %v1542
      %v1605 = vmul.f32 %v1526, %v1542
      %v1606 = vmul.f32 %v1527, %v1542
      %v1607 = vmul.f32 %v1528, %v1542
      %v1608 = vmul.f32 %v1529, %v1542
      %v1609 = vmul.f32 %v1530, %v1542
      %v1610 = vmul.f32 %v1531, %v1542
      %v1611 = vmul.f32 %v1532, %v1542
      %v1612 = vmul.f32 %v1533, %v1542
      %v1613 = vmul.f32 %v1534, %v1542
      %v1614 = vmul.f32 %v1535, %v1542
      %v1615 = vmul.f32 %v1536, %v1542
      %v1616 = vld [vmem:[%s3] sm:$0x1]
      %v1618 = vlaneseq
      %v1619 = vshrl.u32 %v1618, 7
      %v1620 = vsub.s32 0, %v1619
      %v1621 = vrot.slane %v1616, %v1620
      %v1623 = vadd.f32 %v1544, %v1621
      %v1624 = vadd.f32 %v1545, %v1621
      %v1625 = vadd.f32 %v1546, %v1621
      %v1626 = vadd.f32 %v1547, %v1621
      %v1627 = vadd.f32 %v1548, %v1621
      %v1628 = vadd.f32 %v1549, %v1621
      %v1629 = vadd.f32 %v1550, %v1621
      %v1630 = vadd.f32 %v1551, %v1621
      %v1631 = vadd.f32 %v1552, %v1621
      %v1632 = vadd.f32 %v1553, %v1621
      %v1633 = vadd.f32 %v1554, %v1621
      %v1634 = vadd.f32 %v1555, %v1621
      %v1635 = vadd.f32 %v1556, %v1621
      %v1636 = vadd.f32 %v1557, %v1621
      %v1637 = vadd.f32 %v1558, %v1621
      %v1638 = vadd.f32 %v1559, %v1621
      %v1639 = vadd.f32 %v1560, %v1621
      %v1640 = vadd.f32 %v1561, %v1621
      %v1641 = vadd.f32 %v1562, %v1621
      %v1642 = vadd.f32 %v1563, %v1621
      %v1643 = vadd.f32 %v1564, %v1621
      %v1644 = vadd.f32 %v1565, %v1621
      %v1645 = vadd.f32 %v1566, %v1621
      %v1646 = vadd.f32 %v1567, %v1621
      %v1647 = vadd.f32 %v1568, %v1621
      %v1648 = vadd.f32 %v1569, %v1621
      %v1649 = vadd.f32 %v1570, %v1621
      %v1650 = vadd.f32 %v1571, %v1621
      %v1651 = vadd.f32 %v1572, %v1621
      %v1652 = vadd.f32 %v1573, %v1621
      %v1653 = vadd.f32 %v1574, %v1621
      %v1654 = vadd.f32 %v1575, %v1621
      %v1655 = vadd.f32 %v1576, %v1621
      %v1656 = vadd.f32 %v1577, %v1621
      %v1657 = vadd.f32 %v1578, %v1621
      %v1658 = vadd.f32 %v1579, %v1621
      %v1659 = vadd.f32 %v1580, %v1621
      %v1660 = vadd.f32 %v1581, %v1621
      %v1661 = vadd.f32 %v1582, %v1621
      %v1662 = vadd.f32 %v1583, %v1621
      %v1663 = vadd.f32 %v1584, %v1621
      %v1664 = vadd.f32 %v1585, %v1621
      %v1665 = vadd.f32 %v1586, %v1621
      %v1666 = vadd.f32 %v1587, %v1621
      %v1667 = vadd.f32 %v1588, %v1621
      %v1668 = vadd.f32 %v1589, %v1621
      %v1669 = vadd.f32 %v1590, %v1621
      %v1670 = vadd.f32 %v1591, %v1621
      %v1671 = vadd.f32 %v1592, %v1621
      %v1672 = vadd.f32 %v1593, %v1621
      %v1673 = vadd.f32 %v1594, %v1621
      %v1674 = vadd.f32 %v1595, %v1621
      %v1675 = vadd.f32 %v1596, %v1621
      %v1676 = vadd.f32 %v1597, %v1621
      %v1677 = vadd.f32 %v1598, %v1621
      %v1678 = vadd.f32 %v1599, %v1621
      %v1679 = vadd.f32 %v1600, %v1621
      %v1680 = vadd.f32 %v1601, %v1621
      %v1681 = vadd.f32 %v1602, %v1621
      %v1682 = vadd.f32 %v1603, %v1621
      %v1683 = vadd.f32 %v1604, %v1621
      %v1684 = vadd.f32 %v1605, %v1621
      %v1685 = vadd.f32 %v1606, %v1621
      %v1686 = vadd.f32 %v1607, %v1621
      %v1687 = vadd.f32 %v1608, %v1621
      %v1688 = vadd.f32 %v1609, %v1621
      %v1689 = vadd.f32 %v1610, %v1621
      %v1690 = vadd.f32 %v1611, %v1621
      %v1691 = vadd.f32 %v1612, %v1621
      %v1692 = vadd.f32 %v1613, %v1621
      %v1693 = vadd.f32 %v1614, %v1621
      %v1694 = vadd.f32 %v1615, %v1621
      %vm1695 = vcmp.gt.f32.partialorder %v1623, 0.0
      %vm1696 = vcmp.gt.f32.partialorder %v1624, 0.0
      %vm1697 = vcmp.gt.f32.partialorder %v1625, 0.0
      %vm1698 = vcmp.gt.f32.partialorder %v1626, 0.0
      %vm1699 = vcmp.gt.f32.partialorder %v1627, 0.0
      %vm1700 = vcmp.gt.f32.partialorder %v1628, 0.0
      %vm1701 = vcmp.gt.f32.partialorder %v1629, 0.0
      %vm1702 = vcmp.gt.f32.partialorder %v1630, 0.0
      %vm1703 = vcmp.gt.f32.partialorder %v1631, 0.0
      %vm1704 = vcmp.gt.f32.partialorder %v1632, 0.0
      %vm1705 = vcmp.gt.f32.partialorder %v1633, 0.0
      %vm1706 = vcmp.gt.f32.partialorder %v1634, 0.0
      %vm1707 = vcmp.gt.f32.partialorder %v1635, 0.0
      %vm1708 = vcmp.gt.f32.partialorder %v1636, 0.0
      %vm1709 = vcmp.gt.f32.partialorder %v1637, 0.0
      %vm1710 = vcmp.gt.f32.partialorder %v1638, 0.0
      %vm1711 = vcmp.gt.f32.partialorder %v1639, 0.0
      %vm1712 = vcmp.gt.f32.partialorder %v1640, 0.0
      %vm1713 = vcmp.gt.f32.partialorder %v1641, 0.0
      %vm1714 = vcmp.gt.f32.partialorder %v1642, 0.0
      %vm1715 = vcmp.gt.f32.partialorder %v1643, 0.0
      %vm1716 = vcmp.gt.f32.partialorder %v1644, 0.0
      %vm1717 = vcmp.gt.f32.partialorder %v1645, 0.0
      %vm1718 = vcmp.gt.f32.partialorder %v1646, 0.0
      %vm1719 = vcmp.gt.f32.partialorder %v1647, 0.0
      %vm1720 = vcmp.gt.f32.partialorder %v1648, 0.0
      %vm1721 = vcmp.gt.f32.partialorder %v1649, 0.0
      %vm1722 = vcmp.gt.f32.partialorder %v1650, 0.0
      %vm1723 = vcmp.gt.f32.partialorder %v1651, 0.0
      %vm1724 = vcmp.gt.f32.partialorder %v1652, 0.0
      %vm1725 = vcmp.gt.f32.partialorder %v1653, 0.0
      %vm1726 = vcmp.gt.f32.partialorder %v1654, 0.0
      %vm1727 = vcmp.gt.f32.partialorder %v1655, 0.0
      %vm1728 = vcmp.gt.f32.partialorder %v1656, 0.0
      %vm1729 = vcmp.gt.f32.partialorder %v1657, 0.0
      %vm1730 = vcmp.gt.f32.partialorder %v1658, 0.0
      %vm1731 = vcmp.gt.f32.partialorder %v1659, 0.0
      %vm1732 = vcmp.gt.f32.partialorder %v1660, 0.0
      %vm1733 = vcmp.gt.f32.partialorder %v1661, 0.0
      %vm1734 = vcmp.gt.f32.partialorder %v1662, 0.0
      %vm1735 = vcmp.gt.f32.partialorder %v1663, 0.0
      %vm1736 = vcmp.gt.f32.partialorder %v1664, 0.0
      %vm1737 = vcmp.gt.f32.partialorder %v1665, 0.0
      %vm1738 = vcmp.gt.f32.partialorder %v1666, 0.0
      %vm1739 = vcmp.gt.f32.partialorder %v1667, 0.0
      %vm1740 = vcmp.gt.f32.partialorder %v1668, 0.0
      %vm1741 = vcmp.gt.f32.partialorder %v1669, 0.0
      %vm1742 = vcmp.gt.f32.partialorder %v1670, 0.0
      %vm1743 = vcmp.gt.f32.partialorder %v1671, 0.0
      %vm1744 = vcmp.gt.f32.partialorder %v1672, 0.0
      %vm1745 = vcmp.gt.f32.partialorder %v1673, 0.0
      %vm1746 = vcmp.gt.f32.partialorder %v1674, 0.0
      %vm1747 = vcmp.gt.f32.partialorder %v1675, 0.0
      %vm1748 = vcmp.gt.f32.partialorder %v1676, 0.0
      %vm1749 = vcmp.gt.f32.partialorder %v1677, 0.0
      %vm1750 = vcmp.gt.f32.partialorder %v1678, 0.0
      %vm1751 = vcmp.gt.f32.partialorder %v1679, 0.0
      %vm1752 = vcmp.gt.f32.partialorder %v1680, 0.0
      %vm1753 = vcmp.gt.f32.partialorder %v1681, 0.0
      %vm1754 = vcmp.gt.f32.partialorder %v1682, 0.0
      %vm1755 = vcmp.gt.f32.partialorder %v1683, 0.0
      %vm1756 = vcmp.gt.f32.partialorder %v1684, 0.0
      %vm1757 = vcmp.gt.f32.partialorder %v1685, 0.0
      %vm1758 = vcmp.gt.f32.partialorder %v1686, 0.0
      %vm1759 = vcmp.gt.f32.partialorder %v1687, 0.0
      %vm1760 = vcmp.gt.f32.partialorder %v1688, 0.0
      %vm1761 = vcmp.gt.f32.partialorder %v1689, 0.0
      %vm1762 = vcmp.gt.f32.partialorder %v1690, 0.0
      %vm1763 = vcmp.gt.f32.partialorder %v1691, 0.0
      %vm1764 = vcmp.gt.f32.partialorder %v1692, 0.0
      %vm1765 = vcmp.gt.f32.partialorder %v1693, 0.0
      %vm1766 = vcmp.gt.f32.partialorder %v1694, 0.0
      %v1767 = vmin.f32 %v1623, 0.0
      %v1768 = vmin.f32 %v1624, 0.0
      %v1769 = vmin.f32 %v1625, 0.0
      %v1770 = vmin.f32 %v1626, 0.0
      %v1771 = vmin.f32 %v1627, 0.0
      %v1772 = vmin.f32 %v1628, 0.0
      %v1773 = vmin.f32 %v1629, 0.0
      %v1774 = vmin.f32 %v1630, 0.0
      %v1775 = vmin.f32 %v1631, 0.0
      %v1776 = vmin.f32 %v1632, 0.0
      %v1777 = vmin.f32 %v1633, 0.0
      %v1778 = vmin.f32 %v1634, 0.0
      %v1779 = vmin.f32 %v1635, 0.0
      %v1780 = vmin.f32 %v1636, 0.0
      %v1781 = vmin.f32 %v1637, 0.0
      %v1782 = vmin.f32 %v1638, 0.0
      %v1783 = vmin.f32 %v1639, 0.0
      %v1784 = vmin.f32 %v1640, 0.0
      %v1785 = vmin.f32 %v1641, 0.0
      %v1786 = vmin.f32 %v1642, 0.0
      %v1787 = vmin.f32 %v1643, 0.0
      %v1788 = vmin.f32 %v1644, 0.0
      %v1789 = vmin.f32 %v1645, 0.0
      %v1790 = vmin.f32 %v1646, 0.0
      %v1791 = vmin.f32 %v1647, 0.0
      %v1792 = vmin.f32 %v1648, 0.0
      %v1793 = vmin.f32 %v1649, 0.0
      %v1794 = vmin.f32 %v1650, 0.0
      %v1795 = vmin.f32 %v1651, 0.0
      %v1796 = vmin.f32 %v1652, 0.0
      %v1797 = vmin.f32 %v1653, 0.0
      %v1798 = vmin.f32 %v1654, 0.0
      %v1799 = vmin.f32 %v1655, 0.0
      %v1800 = vmin.f32 %v1656, 0.0
      %v1801 = vmin.f32 %v1657, 0.0
      %v1802 = vmin.f32 %v1658, 0.0
      %v1803 = vmin.f32 %v1659, 0.0
      %v1804 = vmin.f32 %v1660, 0.0
      %v1805 = vmin.f32 %v1661, 0.0
      %v1806 = vmin.f32 %v1662, 0.0
      %v1807 = vmin.f32 %v1663, 0.0
      %v1808 = vmin.f32 %v1664, 0.0
      %v1809 = vmin.f32 %v1665, 0.0
      %v1810 = vmin.f32 %v1666, 0.0
      %v1811 = vmin.f32 %v1667, 0.0
      %v1812 = vmin.f32 %v1668, 0.0
      %v1813 = vmin.f32 %v1669, 0.0
      %v1814 = vmin.f32 %v1670, 0.0
      %v1815 = vmin.f32 %v1671, 0.0
      %v1816 = vmin.f32 %v1672, 0.0
      %v1817 = vmin.f32 %v1673, 0.0
      %v1818 = vmin.f32 %v1674, 0.0
      %v1819 = vmin.f32 %v1675, 0.0
      %v1820 = vmin.f32 %v1676, 0.0
      %v1821 = vmin.f32 %v1677, 0.0
      %v1822 = vmin.f32 %v1678, 0.0
      %v1823 = vmin.f32 %v1679, 0.0
      %v1824 = vmin.f32 %v1680, 0.0
      %v1825 = vmin.f32 %v1681, 0.0
      %v1826 = vmin.f32 %v1682, 0.0
      %v1827 = vmin.f32 %v1683, 0.0
      %v1828 = vmin.f32 %v1684, 0.0
      %v1829 = vmin.f32 %v1685, 0.0
      %v1830 = vmin.f32 %v1686, 0.0
      %v1831 = vmin.f32 %v1687, 0.0
      %v1832 = vmin.f32 %v1688, 0.0
      %v1833 = vmin.f32 %v1689, 0.0
      %v1834 = vmin.f32 %v1690, 0.0
      %v1835 = vmin.f32 %v1691, 0.0
      %v1836 = vmin.f32 %v1692, 0.0
      %v1837 = vmin.f32 %v1693, 0.0
      %v1838 = vmin.f32 %v1694, 0.0
      %v1839 = vmul.f32 %v1767, 1.442695
      %v1840 = vpow.pop %v1839
      %v1841 = vmul.f32 %v1768, 1.442695
      %v1842 = vpow.pop %v1841
      %v1843 = vmul.f32 %v1769, 1.442695
      %v1844 = vpow.pop %v1843
      %v1845 = vmul.f32 %v1770, 1.442695
      %v1846 = vpow.pop %v1845
      %v1847 = vmul.f32 %v1771, 1.442695
      %v1848 = vpow.pop %v1847
      %v1849 = vmul.f32 %v1772, 1.442695
      %v1850 = vpow.pop %v1849
      %v1851 = vmul.f32 %v1773, 1.442695
      %v1852 = vpow.pop %v1851
      %v1853 = vmul.f32 %v1774, 1.442695
      %v1854 = vpow.pop %v1853
      %v1855 = vmul.f32 %v1775, 1.442695
      %v1856 = vpow.pop %v1855
      %v1857 = vmul.f32 %v1776, 1.442695
      %v1858 = vpow.pop %v1857
      %v1859 = vmul.f32 %v1777, 1.442695
      %v1860 = vpow.pop %v1859
      %v1861 = vmul.f32 %v1778, 1.442695
      %v1862 = vpow.pop %v1861
      %v1863 = vmul.f32 %v1779, 1.442695
      %v1864 = vpow.pop %v1863
      %v1865 = vmul.f32 %v1780, 1.442695
      %v1866 = vpow.pop %v1865
      %v1867 = vmul.f32 %v1781, 1.442695
      %v1868 = vpow.pop %v1867
      %v1869 = vmul.f32 %v1782, 1.442695
      %v1870 = vpow.pop %v1869
      %v1871 = vmul.f32 %v1783, 1.442695
      %v1872 = vpow.pop %v1871
      %v1873 = vmul.f32 %v1784, 1.442695
      %v1874 = vpow.pop %v1873
      %v1875 = vmul.f32 %v1785, 1.442695
      %v1876 = vpow.pop %v1875
      %v1877 = vmul.f32 %v1786, 1.442695
      %v1878 = vpow.pop %v1877
      %v1879 = vmul.f32 %v1787, 1.442695
      %v1880 = vpow.pop %v1879
      %v1881 = vmul.f32 %v1788, 1.442695
      %v1882 = vpow.pop %v1881
      %v1883 = vmul.f32 %v1789, 1.442695
      %v1884 = vpow.pop %v1883
      %v1885 = vmul.f32 %v1790, 1.442695
      %v1886 = vpow.pop %v1885
      %v1887 = vmul.f32 %v1791, 1.442695
      %v1888 = vpow.pop %v1887
      %v1889 = vmul.f32 %v1792, 1.442695
      %v1890 = vpow.pop %v1889
      %v1891 = vmul.f32 %v1793, 1.442695
      %v1892 = vpow.pop %v1891
      %v1893 = vmul.f32 %v1794, 1.442695
      %v1894 = vpow.pop %v1893
      %v1895 = vmul.f32 %v1795, 1.442695
      %v1896 = vpow.pop %v1895
      %v1897 = vmul.f32 %v1796, 1.442695
      %v1898 = vpow.pop %v1897
      %v1899 = vmul.f32 %v1797, 1.442695
      %v1900 = vpow.pop %v1899
      %v1901 = vmul.f32 %v1798, 1.442695
      %v1902 = vpow.pop %v1901
      %v1903 = vmul.f32 %v1799, 1.442695
      %v1904 = vpow.pop %v1903
      %v1905 = vmul.f32 %v1800, 1.442695
      %v1906 = vpow.pop %v1905
      %v1907 = vmul.f32 %v1801, 1.442695
      %v1908 = vpow.pop %v1907
      %v1909 = vmul.f32 %v1802, 1.442695
      %v1910 = vpow.pop %v1909
      %v1911 = vmul.f32 %v1803, 1.442695
      %v1912 = vpow.pop %v1911
      %v1913 = vmul.f32 %v1804, 1.442695
      %v1914 = vpow.pop %v1913
      %v1915 = vmul.f32 %v1805, 1.442695
      %v1916 = vpow.pop %v1915
      %v1917 = vmul.f32 %v1806, 1.442695
      %v1918 = vpow.pop %v1917
      %v1919 = vmul.f32 %v1807, 1.442695
      %v1920 = vpow.pop %v1919
      %v1921 = vmul.f32 %v1808, 1.442695
      %v1922 = vpow.pop %v1921
      %v1923 = vmul.f32 %v1809, 1.442695
      %v1924 = vpow.pop %v1923
      %v1925 = vmul.f32 %v1810, 1.442695
      %v1926 = vpow.pop %v1925
      %v1927 = vmul.f32 %v1811, 1.442695
      %v1928 = vpow.pop %v1927
      %v1929 = vmul.f32 %v1812, 1.442695
      %v1930 = vpow.pop %v1929
      %v1931 = vmul.f32 %v1813, 1.442695
      %v1932 = vpow.pop %v1931
      %v1933 = vmul.f32 %v1814, 1.442695
      %v1934 = vpow.pop %v1933
      %v1935 = vmul.f32 %v1815, 1.442695
      %v1936 = vpow.pop %v1935
      %v1937 = vmul.f32 %v1816, 1.442695
      %v1938 = vpow.pop %v1937
      %v1939 = vmul.f32 %v1817, 1.442695
      %v1940 = vpow.pop %v1939
      %v1941 = vmul.f32 %v1818, 1.442695
      %v1942 = vpow.pop %v1941
      %v1943 = vmul.f32 %v1819, 1.442695
      %v1944 = vpow.pop %v1943
      %v1945 = vmul.f32 %v1820, 1.442695
      %v1946 = vpow.pop %v1945
      %v1947 = vmul.f32 %v1821, 1.442695
      %v1948 = vpow.pop %v1947
      %v1949 = vmul.f32 %v1822, 1.442695
      %v1950 = vpow.pop %v1949
      %v1951 = vmul.f32 %v1823, 1.442695
      %v1952 = vpow.pop %v1951
      %v1953 = vmul.f32 %v1824, 1.442695
      %v1954 = vpow.pop %v1953
      %v1955 = vmul.f32 %v1825, 1.442695
      %v1956 = vpow.pop %v1955
      %v1957 = vmul.f32 %v1826, 1.442695
      %v1958 = vpow.pop %v1957
      %v1959 = vmul.f32 %v1827, 1.442695
      %v1960 = vpow.pop %v1959
      %v1961 = vmul.f32 %v1828, 1.442695
      %v1962 = vpow.pop %v1961
      %v1963 = vmul.f32 %v1829, 1.442695
      %v1964 = vpow.pop %v1963
      %v1965 = vmul.f32 %v1830, 1.442695
      %v1966 = vpow.pop %v1965
      %v1967 = vmul.f32 %v1831, 1.442695
      %v1968 = vpow.pop %v1967
      %v1969 = vmul.f32 %v1832, 1.442695
      %v1970 = vpow.pop %v1969
      %v1971 = vmul.f32 %v1833, 1.442695
      %v1972 = vpow.pop %v1971
      %v1973 = vmul.f32 %v1834, 1.442695
      %v1974 = vpow.pop %v1973
      %v1975 = vmul.f32 %v1835, 1.442695
      %v1976 = vpow.pop %v1975
      %v1977 = vmul.f32 %v1836, 1.442695
      %v1978 = vpow.pop %v1977
      %v1979 = vmul.f32 %v1837, 1.442695
      %v1980 = vpow.pop %v1979
      %v1981 = vmul.f32 %v1838, 1.442695
      %v1982 = vpow.pop %v1981
      %v1983 = vsub.f32 %v1840, 1.0
      %v1984 = vsub.f32 %v1842, 1.0
      %v1985 = vsub.f32 %v1844, 1.0
      %v1986 = vsub.f32 %v1846, 1.0
      %v1987 = vsub.f32 %v1848, 1.0
      %v1988 = vsub.f32 %v1850, 1.0
      %v1989 = vsub.f32 %v1852, 1.0
      %v1990 = vsub.f32 %v1854, 1.0
      %v1991 = vsub.f32 %v1856, 1.0
      %v1992 = vsub.f32 %v1858, 1.0
      %v1993 = vsub.f32 %v1860, 1.0
      %v1994 = vsub.f32 %v1862, 1.0
      %v1995 = vsub.f32 %v1864, 1.0
      %v1996 = vsub.f32 %v1866, 1.0
      %v1997 = vsub.f32 %v1868, 1.0
      %v1998 = vsub.f32 %v1870, 1.0
      %v1999 = vsub.f32 %v1872, 1.0
      %v2000 = vsub.f32 %v1874, 1.0
      %v2001 = vsub.f32 %v1876, 1.0
      %v2002 = vsub.f32 %v1878, 1.0
      %v2003 = vsub.f32 %v1880, 1.0
      %v2004 = vsub.f32 %v1882, 1.0
      %v2005 = vsub.f32 %v1884, 1.0
      %v2006 = vsub.f32 %v1886, 1.0
      %v2007 = vsub.f32 %v1888, 1.0
      %v2008 = vsub.f32 %v1890, 1.0
      %v2009 = vsub.f32 %v1892, 1.0
      %v2010 = vsub.f32 %v1894, 1.0
      %v2011 = vsub.f32 %v1896, 1.0
      %v2012 = vsub.f32 %v1898, 1.0
      %v2013 = vsub.f32 %v1900, 1.0
      %v2014 = vsub.f32 %v1902, 1.0
      %v2015 = vsub.f32 %v1904, 1.0
      %v2016 = vsub.f32 %v1906, 1.0
      %v2017 = vsub.f32 %v1908, 1.0
      %v2018 = vsub.f32 %v1910, 1.0
      %v2019 = vsub.f32 %v1912, 1.0
      %v2020 = vsub.f32 %v1914, 1.0
      %v2021 = vsub.f32 %v1916, 1.0
      %v2022 = vsub.f32 %v1918, 1.0
      %v2023 = vsub.f32 %v1920, 1.0
      %v2024 = vsub.f32 %v1922, 1.0
      %v2025 = vsub.f32 %v1924, 1.0
      %v2026 = vsub.f32 %v1926, 1.0
      %v2027 = vsub.f32 %v1928, 1.0
      %v2028 = vsub.f32 %v1930, 1.0
      %v2029 = vsub.f32 %v1932, 1.0
      %v2030 = vsub.f32 %v1934, 1.0
      %v2031 = vsub.f32 %v1936, 1.0
      %v2032 = vsub.f32 %v1938, 1.0
      %v2033 = vsub.f32 %v1940, 1.0
      %v2034 = vsub.f32 %v1942, 1.0
      %v2035 = vsub.f32 %v1944, 1.0
      %v2036 = vsub.f32 %v1946, 1.0
      %v2037 = vsub.f32 %v1948, 1.0
      %v2038 = vsub.f32 %v1950, 1.0
      %v2039 = vsub.f32 %v1952, 1.0
      %v2040 = vsub.f32 %v1954, 1.0
      %v2041 = vsub.f32 %v1956, 1.0
      %v2042 = vsub.f32 %v1958, 1.0
      %v2043 = vsub.f32 %v1960, 1.0
      %v2044 = vsub.f32 %v1962, 1.0
      %v2045 = vsub.f32 %v1964, 1.0
      %v2046 = vsub.f32 %v1966, 1.0
      %v2047 = vsub.f32 %v1968, 1.0
      %v2048 = vsub.f32 %v1970, 1.0
      %v2049 = vsub.f32 %v1972, 1.0
      %v2050 = vsub.f32 %v1974, 1.0
      %v2051 = vsub.f32 %v1976, 1.0
      %v2052 = vsub.f32 %v1978, 1.0
      %v2053 = vsub.f32 %v1980, 1.0
      %v2054 = vsub.f32 %v1982, 1.0
      %v2055 = vsel %vm1695, %v1623, %v1983
      %v2056 = vsel %vm1696, %v1624, %v1984
      %v2057 = vsel %vm1697, %v1625, %v1985
      %v2058 = vsel %vm1698, %v1626, %v1986
      %v2059 = vsel %vm1699, %v1627, %v1987
      %v2060 = vsel %vm1700, %v1628, %v1988
      %v2061 = vsel %vm1701, %v1629, %v1989
      %v2062 = vsel %vm1702, %v1630, %v1990
      %v2063 = vsel %vm1703, %v1631, %v1991
      %v2064 = vsel %vm1704, %v1632, %v1992
      %v2065 = vsel %vm1705, %v1633, %v1993
      %v2066 = vsel %vm1706, %v1634, %v1994
      %v2067 = vsel %vm1707, %v1635, %v1995
      %v2068 = vsel %vm1708, %v1636, %v1996
      %v2069 = vsel %vm1709, %v1637, %v1997
      %v2070 = vsel %vm1710, %v1638, %v1998
      %v2071 = vsel %vm1711, %v1639, %v1999
      %v2072 = vsel %vm1712, %v1640, %v2000
      %v2073 = vsel %vm1713, %v1641, %v2001
      %v2074 = vsel %vm1714, %v1642, %v2002
      %v2075 = vsel %vm1715, %v1643, %v2003
      %v2076 = vsel %vm1716, %v1644, %v2004
      %v2077 = vsel %vm1717, %v1645, %v2005
      %v2078 = vsel %vm1718, %v1646, %v2006
      %v2079 = vsel %vm1719, %v1647, %v2007
      %v2080 = vsel %vm1720, %v1648, %v2008
      %v2081 = vsel %vm1721, %v1649, %v2009
      %v2082 = vsel %vm1722, %v1650, %v2010
      %v2083 = vsel %vm1723, %v1651, %v2011
      %v2084 = vsel %vm1724, %v1652, %v2012
      %v2085 = vsel %vm1725, %v1653, %v2013
      %v2086 = vsel %vm1726, %v1654, %v2014
      %v2087 = vsel %vm1727, %v1655, %v2015
      %v2088 = vsel %vm1728, %v1656, %v2016
      %v2089 = vsel %vm1729, %v1657, %v2017
      %v2090 = vsel %vm1730, %v1658, %v2018
      %v2091 = vsel %vm1731, %v1659, %v2019
      %v2092 = vsel %vm1732, %v1660, %v2020
      %v2093 = vsel %vm1733, %v1661, %v2021
      %v2094 = vsel %vm1734, %v1662, %v2022
      %v2095 = vsel %vm1735, %v1663, %v2023
      %v2096 = vsel %vm1736, %v1664, %v2024
      %v2097 = vsel %vm1737, %v1665, %v2025
      %v2098 = vsel %vm1738, %v1666, %v2026
      %v2099 = vsel %vm1739, %v1667, %v2027
      %v2100 = vsel %vm1740, %v1668, %v2028
      %v2101 = vsel %vm1741, %v1669, %v2029
      %v2102 = vsel %vm1742, %v1670, %v2030
      %v2103 = vsel %vm1743, %v1671, %v2031
      %v2104 = vsel %vm1744, %v1672, %v2032
      %v2105 = vsel %vm1745, %v1673, %v2033
      %v2106 = vsel %vm1746, %v1674, %v2034
      %v2107 = vsel %vm1747, %v1675, %v2035
      %v2108 = vsel %vm1748, %v1676, %v2036
      %v2109 = vsel %vm1749, %v1677, %v2037
      %v2110 = vsel %vm1750, %v1678, %v2038
      %v2111 = vsel %vm1751, %v1679, %v2039
      %v2112 = vsel %vm1752, %v1680, %v2040
      %v2113 = vsel %vm1753, %v1681, %v2041
      %v2114 = vsel %vm1754, %v1682, %v2042
      %v2115 = vsel %vm1755, %v1683, %v2043
      %v2116 = vsel %vm1756, %v1684, %v2044
      %v2117 = vsel %vm1757, %v1685, %v2045
      %v2118 = vsel %vm1758, %v1686, %v2046
      %v2119 = vsel %vm1759, %v1687, %v2047
      %v2120 = vsel %vm1760, %v1688, %v2048
      %v2121 = vsel %vm1761, %v1689, %v2049
      %v2122 = vsel %vm1762, %v1690, %v2050
      %v2123 = vsel %vm1763, %v1691, %v2051
      %v2124 = vsel %vm1764, %v1692, %v2052
      %v2125 = vsel %vm1765, %v1693, %v2053
      %v2126 = vsel %vm1766, %v1694, %v2054
      %v2127 = vpack.c.bf16 %v2056, %v2055
      %v2128 = vpack.c.bf16 %v2058, %v2057
      %v2129 = vpack.c.bf16 %v2060, %v2059
      %v2130 = vpack.c.bf16 %v2062, %v2061
      %v2131 = vpack.c.bf16 %v2064, %v2063
      %v2132 = vpack.c.bf16 %v2066, %v2065
      %v2133 = vpack.c.bf16 %v2068, %v2067
      %v2134 = vpack.c.bf16 %v2070, %v2069
      %v2135 = vpack.c.bf16 %v2072, %v2071
      %v2136 = vpack.c.bf16 %v2074, %v2073
      %v2137 = vpack.c.bf16 %v2076, %v2075
      %v2138 = vpack.c.bf16 %v2078, %v2077
      %v2139 = vpack.c.bf16 %v2080, %v2079
      %v2140 = vpack.c.bf16 %v2082, %v2081
      %v2141 = vpack.c.bf16 %v2084, %v2083
      %v2142 = vpack.c.bf16 %v2086, %v2085
      %v2143 = vpack.c.bf16 %v2088, %v2087
      %v2144 = vpack.c.bf16 %v2090, %v2089
      %v2145 = vpack.c.bf16 %v2092, %v2091
      %v2146 = vpack.c.bf16 %v2094, %v2093
      %v2147 = vpack.c.bf16 %v2096, %v2095
      %v2148 = vpack.c.bf16 %v2098, %v2097
      %v2149 = vpack.c.bf16 %v2100, %v2099
      %v2150 = vpack.c.bf16 %v2102, %v2101
      %v2151 = vpack.c.bf16 %v2104, %v2103
      %v2152 = vpack.c.bf16 %v2106, %v2105
      %v2153 = vpack.c.bf16 %v2108, %v2107
      %v2154 = vpack.c.bf16 %v2110, %v2109
      %v2155 = vpack.c.bf16 %v2112, %v2111
      %v2156 = vpack.c.bf16 %v2114, %v2113
      %v2157 = vpack.c.bf16 %v2116, %v2115
      %v2158 = vpack.c.bf16 %v2118, %v2117
      %v2159 = vpack.c.bf16 %v2120, %v2119
      %v2160 = vpack.c.bf16 %v2122, %v2121
      %v2161 = vpack.c.bf16 %v2124, %v2123
      %v2162 = vpack.c.bf16 %v2126, %v2125
      %v2163 = vld [vmem:[%s4] sm:$0xf]
      %v2164 = vld [vmem:[%s4 + $0x4] sm:$0xf]
      %v2165 = vld [vmem:[%s4 + $0x8] sm:$0xf]
      %v2166 = vld [vmem:[%s4 + $0xc] sm:$0xf]
      %v2167 = vld [vmem:[%s4 + $0x10] sm:$0xf]
      %v2168 = vld [vmem:[%s4 + $0x14] sm:$0xf]
      %v2169 = vld [vmem:[%s4 + $0x18] sm:$0xf]
      %v2170 = vld [vmem:[%s4 + $0x1c] sm:$0xf]
      %v2171 = vld [vmem:[%s4 + $0x20] sm:$0xf]
      %v2172 = vld [vmem:[%s4 + $0x24] sm:$0xf]
      %v2173 = vld [vmem:[%s4 + $0x28] sm:$0xf]
      %v2174 = vld [vmem:[%s4 + $0x2c] sm:$0xf]
      %v2175 = vld [vmem:[%s4 + $0x30] sm:$0xf]
      %v2176 = vld [vmem:[%s4 + $0x34] sm:$0xf]
      %v2177 = vld [vmem:[%s4 + $0x38] sm:$0xf]
      %v2178 = vld [vmem:[%s4 + $0x3c] sm:$0xf]
      %v2179 = vld [vmem:[%s4 + $0x40] sm:$0xf]
      %v2180 = vld [vmem:[%s4 + $0x44] sm:$0xf]
      %v2181 = vld [vmem:[%s4 + $0x48] sm:$0xf]
      %v2182 = vld [vmem:[%s4 + $0x4c] sm:$0xf]
      %v2183 = vld [vmem:[%s4 + $0x50] sm:$0xf]
      %v2184 = vld [vmem:[%s4 + $0x54] sm:$0xf]
      %v2185 = vld [vmem:[%s4 + $0x58] sm:$0xf]
      %v2186 = vld [vmem:[%s4 + $0x5c] sm:$0xf]
      %v2187 = vld [vmem:[%s4 + $0x60] sm:$0xf]
      %v2188 = vld [vmem:[%s4 + $0x64] sm:$0xf]
      %v2189 = vld [vmem:[%s4 + $0x68] sm:$0xf]
      %v2190 = vld [vmem:[%s4 + $0x6c] sm:$0xf]
      %v2191 = vld [vmem:[%s4 + $0x70] sm:$0xf]
      %v2192 = vld [vmem:[%s4 + $0x74] sm:$0xf]
      %v2193 = vld [vmem:[%s4 + $0x78] sm:$0xf]
      %v2194 = vld [vmem:[%s4 + $0x7c] sm:$0xf]
      %v2195 = vld [vmem:[%s4 + $0x80] sm:$0xf]
      %v2196 = vld [vmem:[%s4 + $0x84] sm:$0xf]
      %v2197 = vld [vmem:[%s4 + $0x88] sm:$0xf]
      %v2198 = vld [vmem:[%s4 + $0x8c] sm:$0xf]
      %v2199 = vld [vmem:[%s4 + $0x90] sm:$0xf]
      %v2200 = vld [vmem:[%s4 + $0x94] sm:$0xf]
      %v2201 = vld [vmem:[%s4 + $0x98] sm:$0xf]
      %v2202 = vld [vmem:[%s4 + $0x9c] sm:$0xf]
      %v2203 = vld [vmem:[%s4 + $0xa0] sm:$0xf]
      %v2204 = vld [vmem:[%s4 + $0xa4] sm:$0xf]
      %v2205 = vld [vmem:[%s4 + $0xa8] sm:$0xf]
      %v2206 = vld [vmem:[%s4 + $0xac] sm:$0xf]
      %v2207 = vld [vmem:[%s4 + $0xb0] sm:$0xf]
      %v2208 = vld [vmem:[%s4 + $0xb4] sm:$0xf]
      %v2209 = vld [vmem:[%s4 + $0xb8] sm:$0xf]
      %v2210 = vld [vmem:[%s4 + $0xbc] sm:$0xf]
      %v2211 = vld [vmem:[%s4 + $0xc0] sm:$0xf]
      %v2212 = vld [vmem:[%s4 + $0xc4] sm:$0xf]
      %v2213 = vld [vmem:[%s4 + $0xc8] sm:$0xf]
      %v2214 = vld [vmem:[%s4 + $0xcc] sm:$0xf]
      %v2215 = vld [vmem:[%s4 + $0xd0] sm:$0xf]
      %v2216 = vld [vmem:[%s4 + $0xd4] sm:$0xf]
      %v2217 = vld [vmem:[%s4 + $0xd8] sm:$0xf]
      %v2218 = vld [vmem:[%s4 + $0xdc] sm:$0xf]
      %v2219 = vld [vmem:[%s4 + $0xe0] sm:$0xf]
      %v2220 = vld [vmem:[%s4 + $0xe4] sm:$0xf]
      %v2221 = vld [vmem:[%s4 + $0xe8] sm:$0xf]
      %v2222 = vld [vmem:[%s4 + $0xec] sm:$0xf]
      %v2223 = vld [vmem:[%s4 + $0xf0] sm:$0xf]
      %v2224 = vld [vmem:[%s4 + $0xf4] sm:$0xf]
      %v2225 = vld [vmem:[%s4 + $0xf8] sm:$0xf]
      %v2226 = vld [vmem:[%s4 + $0xfc] sm:$0xf]
      %v2227 = vld [vmem:[%s4 + $0x100] sm:$0xf]
      %v2228 = vld [vmem:[%s4 + $0x104] sm:$0xf]
      %v2229 = vld [vmem:[%s4 + $0x108] sm:$0xf]
      %v2230 = vld [vmem:[%s4 + $0x10c] sm:$0xf]
      %v2231 = vld [vmem:[%s4 + $0x110] sm:$0xf]
      %v2232 = vld [vmem:[%s4 + $0x114] sm:$0xf]
      %v2233 = vld [vmem:[%s4 + $0x118] sm:$0xf]
      %v2234 = vld [vmem:[%s4 + $0x11c] sm:$0xf]
      %v2235 = vld [vmem:[%s4 + $0x120] sm:$0xf]
      %v2236 = vld [vmem:[%s4 + $0x124] sm:$0xf]
      %v2237 = vld [vmem:[%s4 + $0x128] sm:$0xf]
      %v2238 = vld [vmem:[%s4 + $0x12c] sm:$0xf]
      %v2239 = vld [vmem:[%s4 + $0x130] sm:$0xf]
      %v2240 = vld [vmem:[%s4 + $0x134] sm:$0xf]
      %v2241 = vld [vmem:[%s4 + $0x138] sm:$0xf]
      %v2242 = vld [vmem:[%s4 + $0x13c] sm:$0xf]
      %v2243 = vld [vmem:[%s4 + $0x140] sm:$0xf]
      %v2244 = vld [vmem:[%s4 + $0x144] sm:$0xf]
      %v2245 = vld [vmem:[%s4 + $0x148] sm:$0xf]
      %v2246 = vld [vmem:[%s4 + $0x14c] sm:$0xf]
      %v2247 = vld [vmem:[%s4 + $0x150] sm:$0xf]
      %v2248 = vld [vmem:[%s4 + $0x154] sm:$0xf]
      %v2249 = vld [vmem:[%s4 + $0x158] sm:$0xf]
      %v2250 = vld [vmem:[%s4 + $0x15c] sm:$0xf]
      %v2251 = vld [vmem:[%s4 + $0x160] sm:$0xf]
      %v2252 = vld [vmem:[%s4 + $0x164] sm:$0xf]
      %v2253 = vld [vmem:[%s4 + $0x168] sm:$0xf]
      %v2254 = vld [vmem:[%s4 + $0x16c] sm:$0xf]
      %v2255 = vld [vmem:[%s4 + $0x170] sm:$0xf]
      %v2256 = vld [vmem:[%s4 + $0x174] sm:$0xf]
      %v2257 = vld [vmem:[%s4 + $0x178] sm:$0xf]
      %v2258 = vld [vmem:[%s4 + $0x17c] sm:$0xf]
      %v2259 = vld [vmem:[%s4 + $0x180] sm:$0xf]
      %v2260 = vld [vmem:[%s4 + $0x184] sm:$0xf]
      %v2261 = vld [vmem:[%s4 + $0x188] sm:$0xf]
      %v2262 = vld [vmem:[%s4 + $0x18c] sm:$0xf]
      %v2263 = vld [vmem:[%s4 + $0x190] sm:$0xf]
      %v2264 = vld [vmem:[%s4 + $0x194] sm:$0xf]
      %v2265 = vld [vmem:[%s4 + $0x198] sm:$0xf]
      %v2266 = vld [vmem:[%s4 + $0x19c] sm:$0xf]
      %v2267 = vld [vmem:[%s4 + $0x1a0] sm:$0xf]
      %v2268 = vld [vmem:[%s4 + $0x1a4] sm:$0xf]
      %v2269 = vld [vmem:[%s4 + $0x1a8] sm:$0xf]
      %v2270 = vld [vmem:[%s4 + $0x1ac] sm:$0xf]
      %v2271 = vld [vmem:[%s4 + $0x1b0] sm:$0xf]
      %v2272 = vld [vmem:[%s4 + $0x1b4] sm:$0xf]
      %v2273 = vld [vmem:[%s4 + $0x1b8] sm:$0xf]
      %v2274 = vld [vmem:[%s4 + $0x1bc] sm:$0xf]
      %v2275 = vld [vmem:[%s4 + $0x1c0] sm:$0xf]
      %v2276 = vld [vmem:[%s4 + $0x1c4] sm:$0xf]
      %v2277 = vld [vmem:[%s4 + $0x1c8] sm:$0xf]
      %v2278 = vld [vmem:[%s4 + $0x1cc] sm:$0xf]
      %v2279 = vld [vmem:[%s4 + $0x1d0] sm:$0xf]
      %v2280 = vld [vmem:[%s4 + $0x1d4] sm:$0xf]
      %v2281 = vld [vmem:[%s4 + $0x1d8] sm:$0xf]
      %v2282 = vld [vmem:[%s4 + $0x1dc] sm:$0xf]
      %v2283 = vld [vmem:[%s4 + $0x1e0] sm:$0xf]
      %v2284 = vld [vmem:[%s4 + $0x1e4] sm:$0xf]
      %v2285 = vld [vmem:[%s4 + $0x1e8] sm:$0xf]
      %v2286 = vld [vmem:[%s4 + $0x1ec] sm:$0xf]
      %v2287 = vld [vmem:[%s4 + $0x1f0] sm:$0xf]
      %v2288 = vld [vmem:[%s4 + $0x1f4] sm:$0xf]
      %v2289 = vld [vmem:[%s4 + $0x1f8] sm:$0xf]
      %v2290 = vld [vmem:[%s4 + $0x1fc] sm:$0xf]
      %v2291 = vld [vmem:[%s4 + $0x200] sm:$0xf]
      %v2292 = vld [vmem:[%s4 + $0x204] sm:$0xf]
      %v2293 = vld [vmem:[%s4 + $0x208] sm:$0xf]
      %v2294 = vld [vmem:[%s4 + $0x20c] sm:$0xf]
      %v2295 = vld [vmem:[%s4 + $0x210] sm:$0xf]
      %v2296 = vld [vmem:[%s4 + $0x214] sm:$0xf]
      %v2297 = vld [vmem:[%s4 + $0x218] sm:$0xf]
      %v2298 = vld [vmem:[%s4 + $0x21c] sm:$0xf]
      %v2299 = vld [vmem:[%s4 + $0x220] sm:$0xf]
      %v2300 = vld [vmem:[%s4 + $0x224] sm:$0xf]
      %v2301 = vld [vmem:[%s4 + $0x228] sm:$0xf]
      %v2302 = vld [vmem:[%s4 + $0x22c] sm:$0xf]
      %v2303 = vld [vmem:[%s4 + $0x230] sm:$0xf]
      %v2304 = vld [vmem:[%s4 + $0x234] sm:$0xf]
      %v2305 = vld [vmem:[%s4 + $0x238] sm:$0xf]
      %v2306 = vld [vmem:[%s4 + $0x23c] sm:$0xf]
      %v2307 = vld [vmem:[%s4 + $0x240] sm:$0xf]
      %v2308 = vld [vmem:[%s4 + $0x244] sm:$0xf]
      %v2309 = vld [vmem:[%s4 + $0x248] sm:$0xf]
      %v2310 = vld [vmem:[%s4 + $0x24c] sm:$0xf]
      %v2311 = vld [vmem:[%s4 + $0x250] sm:$0xf]
      %v2312 = vld [vmem:[%s4 + $0x254] sm:$0xf]
      %v2313 = vld [vmem:[%s4 + $0x258] sm:$0xf]
      %v2314 = vld [vmem:[%s4 + $0x25c] sm:$0xf]
      %v2315 = vld [vmem:[%s4 + $0x260] sm:$0xf]
      %v2316 = vld [vmem:[%s4 + $0x264] sm:$0xf]
      %v2317 = vld [vmem:[%s4 + $0x268] sm:$0xf]
      %v2318 = vld [vmem:[%s4 + $0x26c] sm:$0xf]
      %v2319 = vld [vmem:[%s4 + $0x270] sm:$0xf]
      %v2320 = vld [vmem:[%s4 + $0x274] sm:$0xf]
      %v2321 = vld [vmem:[%s4 + $0x278] sm:$0xf]
      %v2322 = vld [vmem:[%s4 + $0x27c] sm:$0xf]
      %v2323 = vld [vmem:[%s4 + $0x280] sm:$0xf]
      %v2324 = vld [vmem:[%s4 + $0x284] sm:$0xf]
      %v2325 = vld [vmem:[%s4 + $0x288] sm:$0xf]
      %v2326 = vld [vmem:[%s4 + $0x28c] sm:$0xf]
      %v2327 = vld [vmem:[%s4 + $0x290] sm:$0xf]
      %v2328 = vld [vmem:[%s4 + $0x294] sm:$0xf]
      %v2329 = vld [vmem:[%s4 + $0x298] sm:$0xf]
      %v2330 = vld [vmem:[%s4 + $0x29c] sm:$0xf]
      %v2331 = vld [vmem:[%s4 + $0x2a0] sm:$0xf]
      %v2332 = vld [vmem:[%s4 + $0x2a4] sm:$0xf]
      %v2333 = vld [vmem:[%s4 + $0x2a8] sm:$0xf]
      %v2334 = vld [vmem:[%s4 + $0x2ac] sm:$0xf]
      %v2335 = vld [vmem:[%s4 + $0x2b0] sm:$0xf]
      %v2336 = vld [vmem:[%s4 + $0x2b4] sm:$0xf]
      %v2337 = vld [vmem:[%s4 + $0x2b8] sm:$0xf]
      %v2338 = vld [vmem:[%s4 + $0x2bc] sm:$0xf]
      %v2339 = vld [vmem:[%s4 + $0x2c0] sm:$0xf]
      %v2340 = vld [vmem:[%s4 + $0x2c4] sm:$0xf]
      %v2341 = vld [vmem:[%s4 + $0x2c8] sm:$0xf]
      %v2342 = vld [vmem:[%s4 + $0x2cc] sm:$0xf]
      %v2343 = vld [vmem:[%s4 + $0x2d0] sm:$0xf]
      %v2344 = vld [vmem:[%s4 + $0x2d4] sm:$0xf]
      %v2345 = vld [vmem:[%s4 + $0x2d8] sm:$0xf]
      %v2346 = vld [vmem:[%s4 + $0x2dc] sm:$0xf]
      %v2347 = vld [vmem:[%s4 + $0x2e0] sm:$0xf]
      %v2348 = vld [vmem:[%s4 + $0x2e4] sm:$0xf]
      %v2349 = vld [vmem:[%s4 + $0x2e8] sm:$0xf]
      %v2350 = vld [vmem:[%s4 + $0x2ec] sm:$0xf]
      %v2351 = vld [vmem:[%s4 + $0x2f0] sm:$0xf]
      %v2352 = vld [vmem:[%s4 + $0x2f4] sm:$0xf]
      %v2353 = vld [vmem:[%s4 + $0x2f8] sm:$0xf]
      %v2354 = vld [vmem:[%s4 + $0x2fc] sm:$0xf]
      %v2355 = vld [vmem:[%s4 + $0x300] sm:$0xf]
      %v2356 = vld [vmem:[%s4 + $0x304] sm:$0xf]
      %v2357 = vld [vmem:[%s4 + $0x308] sm:$0xf]
      %v2358 = vld [vmem:[%s4 + $0x30c] sm:$0xf]
      %v2359 = vld [vmem:[%s4 + $0x310] sm:$0xf]
      %v2360 = vld [vmem:[%s4 + $0x314] sm:$0xf]
      %v2361 = vld [vmem:[%s4 + $0x318] sm:$0xf]
      %v2362 = vld [vmem:[%s4 + $0x31c] sm:$0xf]
      %v2363 = vld [vmem:[%s4 + $0x320] sm:$0xf]
      %v2364 = vld [vmem:[%s4 + $0x324] sm:$0xf]
      %v2365 = vld [vmem:[%s4 + $0x328] sm:$0xf]
      %v2366 = vld [vmem:[%s4 + $0x32c] sm:$0xf]
      %v2367 = vld [vmem:[%s4 + $0x330] sm:$0xf]
      %v2368 = vld [vmem:[%s4 + $0x334] sm:$0xf]
      %v2369 = vld [vmem:[%s4 + $0x338] sm:$0xf]
      %v2370 = vld [vmem:[%s4 + $0x33c] sm:$0xf]
      %v2371 = vld [vmem:[%s4 + $0x340] sm:$0xf]
      %v2372 = vld [vmem:[%s4 + $0x344] sm:$0xf]
      %v2373 = vld [vmem:[%s4 + $0x348] sm:$0xf]
      %v2374 = vld [vmem:[%s4 + $0x34c] sm:$0xf]
      %v2375 = vld [vmem:[%s4 + $0x350] sm:$0xf]
      %v2376 = vld [vmem:[%s4 + $0x354] sm:$0xf]
      %v2377 = vld [vmem:[%s4 + $0x358] sm:$0xf]
      %v2378 = vld [vmem:[%s4 + $0x35c] sm:$0xf]
      %v2379 = vld [vmem:[%s4 + $0x360] sm:$0xf]
      %v2380 = vld [vmem:[%s4 + $0x364] sm:$0xf]
      %v2381 = vld [vmem:[%s4 + $0x368] sm:$0xf]
      %v2382 = vld [vmem:[%s4 + $0x36c] sm:$0xf]
      %v2383 = vld [vmem:[%s4 + $0x370] sm:$0xf]
      %v2384 = vld [vmem:[%s4 + $0x374] sm:$0xf]
      %v2385 = vld [vmem:[%s4 + $0x378] sm:$0xf]
      %v2386 = vld [vmem:[%s4 + $0x37c] sm:$0xf]
      %v2387 = vld [vmem:[%s4 + $0x380] sm:$0xf]
      %v2388 = vld [vmem:[%s4 + $0x384] sm:$0xf]
      %v2389 = vld [vmem:[%s4 + $0x388] sm:$0xf]
      %v2390 = vld [vmem:[%s4 + $0x38c] sm:$0xf]
      %v2391 = vld [vmem:[%s4 + $0x390] sm:$0xf]
      %v2392 = vld [vmem:[%s4 + $0x394] sm:$0xf]
      %v2393 = vld [vmem:[%s4 + $0x398] sm:$0xf]
      %v2394 = vld [vmem:[%s4 + $0x39c] sm:$0xf]
      %v2395 = vld [vmem:[%s4 + $0x3a0] sm:$0xf]
      %v2396 = vld [vmem:[%s4 + $0x3a4] sm:$0xf]
      %v2397 = vld [vmem:[%s4 + $0x3a8] sm:$0xf]
      %v2398 = vld [vmem:[%s4 + $0x3ac] sm:$0xf]
      %v2399 = vld [vmem:[%s4 + $0x3b0] sm:$0xf]
      %v2400 = vld [vmem:[%s4 + $0x3b4] sm:$0xf]
      %v2401 = vld [vmem:[%s4 + $0x3b8] sm:$0xf]
      %v2402 = vld [vmem:[%s4 + $0x3bc] sm:$0xf]
      %v2403 = vld [vmem:[%s4 + $0x3c0] sm:$0xf]
      %v2404 = vld [vmem:[%s4 + $0x3c4] sm:$0xf]
      %v2405 = vld [vmem:[%s4 + $0x3c8] sm:$0xf]
      %v2406 = vld [vmem:[%s4 + $0x3cc] sm:$0xf]
      %v2407 = vld [vmem:[%s4 + $0x3d0] sm:$0xf]
      %v2408 = vld [vmem:[%s4 + $0x3d4] sm:$0xf]
      %v2409 = vld [vmem:[%s4 + $0x3d8] sm:$0xf]
      %v2410 = vld [vmem:[%s4 + $0x3dc] sm:$0xf]
      %v2411 = vld [vmem:[%s4 + $0x3e0] sm:$0xf]
      %v2412 = vld [vmem:[%s4 + $0x3e4] sm:$0xf]
      %v2413 = vld [vmem:[%s4 + $0x3e8] sm:$0xf]
      %v2414 = vld [vmem:[%s4 + $0x3ec] sm:$0xf]
      %v2415 = vld [vmem:[%s4 + $0x3f0] sm:$0xf]
      %v2416 = vld [vmem:[%s4 + $0x3f4] sm:$0xf]
      %v2417 = vld [vmem:[%s4 + $0x3f8] sm:$0xf]
      %v2418 = vld [vmem:[%s4 + $0x3fc] sm:$0xf]
      %v2419 = vld [vmem:[%s4 + $0x400] sm:$0xf]
      %v2420 = vld [vmem:[%s4 + $0x404] sm:$0xf]
      %v2421 = vld [vmem:[%s4 + $0x408] sm:$0xf]
      %v2422 = vld [vmem:[%s4 + $0x40c] sm:$0xf]
      %v2423 = vld [vmem:[%s4 + $0x410] sm:$0xf]
      %v2424 = vld [vmem:[%s4 + $0x414] sm:$0xf]
      %v2425 = vld [vmem:[%s4 + $0x418] sm:$0xf]
      %v2426 = vld [vmem:[%s4 + $0x41c] sm:$0xf]
      %v2427 = vld [vmem:[%s4 + $0x420] sm:$0xf]
      %v2428 = vld [vmem:[%s4 + $0x424] sm:$0xf]
      %v2429 = vld [vmem:[%s4 + $0x428] sm:$0xf]
      %v2430 = vld [vmem:[%s4 + $0x42c] sm:$0xf]
      %v2431 = vld [vmem:[%s4 + $0x430] sm:$0xf]
      %v2432 = vld [vmem:[%s4 + $0x434] sm:$0xf]
      %v2433 = vld [vmem:[%s4 + $0x438] sm:$0xf]
      %v2434 = vld [vmem:[%s4 + $0x43c] sm:$0xf]
      %v2435 = vld [vmem:[%s4 + $0x440] sm:$0xf]
      %v2436 = vld [vmem:[%s4 + $0x444] sm:$0xf]
      %v2437 = vld [vmem:[%s4 + $0x448] sm:$0xf]
      %v2438 = vld [vmem:[%s4 + $0x44c] sm:$0xf]
      %v2439 = vld [vmem:[%s4 + $0x450] sm:$0xf]
      %v2440 = vld [vmem:[%s4 + $0x454] sm:$0xf]
      %v2441 = vld [vmem:[%s4 + $0x458] sm:$0xf]
      %v2442 = vld [vmem:[%s4 + $0x45c] sm:$0xf]
      %v2443 = vld [vmem:[%s4 + $0x460] sm:$0xf]
      %v2444 = vld [vmem:[%s4 + $0x464] sm:$0xf]
      %v2445 = vld [vmem:[%s4 + $0x468] sm:$0xf]
      %v2446 = vld [vmem:[%s4 + $0x46c] sm:$0xf]
      %v2447 = vld [vmem:[%s4 + $0x470] sm:$0xf]
      %v2448 = vld [vmem:[%s4 + $0x474] sm:$0xf]
      %v2449 = vld [vmem:[%s4 + $0x478] sm:$0xf]
      %v2450 = vld [vmem:[%s4 + $0x47c] sm:$0xf]
      %v2451 = vld [vmem:[%s4 + $0x480] sm:$0xf]
      %v2452 = vld [vmem:[%s4 + $0x484] sm:$0xf]
      %v2453 = vld [vmem:[%s4 + $0x488] sm:$0xf]
      %v2454 = vld [vmem:[%s4 + $0x48c] sm:$0xf]
      %v2455 = vld [vmem:[%s4 + $0x490] sm:$0xf]
      %v2456 = vld [vmem:[%s4 + $0x494] sm:$0xf]
      %v2457 = vld [vmem:[%s4 + $0x498] sm:$0xf]
      %v2458 = vld [vmem:[%s4 + $0x49c] sm:$0xf]
      %v2459 = vld [vmem:[%s4 + $0x4a0] sm:$0xf]
      %v2460 = vld [vmem:[%s4 + $0x4a4] sm:$0xf]
      %v2461 = vld [vmem:[%s4 + $0x4a8] sm:$0xf]
      %v2462 = vld [vmem:[%s4 + $0x4ac] sm:$0xf]
      %v2463 = vld [vmem:[%s4 + $0x4b0] sm:$0xf]
      %v2464 = vld [vmem:[%s4 + $0x4b4] sm:$0xf]
      %v2465 = vld [vmem:[%s4 + $0x4b8] sm:$0xf]
      %v2466 = vld [vmem:[%s4 + $0x4bc] sm:$0xf]
      %v2467 = vld [vmem:[%s4 + $0x4c0] sm:$0xf]
      %v2468 = vld [vmem:[%s4 + $0x4c4] sm:$0xf]
      %v2469 = vld [vmem:[%s4 + $0x4c8] sm:$0xf]
      %v2470 = vld [vmem:[%s4 + $0x4cc] sm:$0xf]
      %v2471 = vld [vmem:[%s4 + $0x4d0] sm:$0xf]
      %v2472 = vld [vmem:[%s4 + $0x4d4] sm:$0xf]
      %v2473 = vld [vmem:[%s4 + $0x4d8] sm:$0xf]
      %v2474 = vld [vmem:[%s4 + $0x4dc] sm:$0xf]
      %v2475 = vld [vmem:[%s4 + $0x4e0] sm:$0xf]
      %v2476 = vld [vmem:[%s4 + $0x4e4] sm:$0xf]
      %v2477 = vld [vmem:[%s4 + $0x4e8] sm:$0xf]
      %v2478 = vld [vmem:[%s4 + $0x4ec] sm:$0xf]
      %v2479 = vld [vmem:[%s4 + $0x4f0] sm:$0xf]
      %v2480 = vld [vmem:[%s4 + $0x4f4] sm:$0xf]
      %v2481 = vld [vmem:[%s4 + $0x4f8] sm:$0xf]
      %v2482 = vld [vmem:[%s4 + $0x4fc] sm:$0xf]
      %v2483 = vld [vmem:[%s4 + $0x500] sm:$0xf]
      %v2484 = vld [vmem:[%s4 + $0x504] sm:$0xf]
      %v2485 = vld [vmem:[%s4 + $0x508] sm:$0xf]
      %v2486 = vld [vmem:[%s4 + $0x50c] sm:$0xf]
      %v2487 = vld [vmem:[%s4 + $0x510] sm:$0xf]
      %v2488 = vld [vmem:[%s4 + $0x514] sm:$0xf]
      %v2489 = vld [vmem:[%s4 + $0x518] sm:$0xf]
      %v2490 = vld [vmem:[%s4 + $0x51c] sm:$0xf]
      %v2491 = vld [vmem:[%s4 + $0x520] sm:$0xf]
      %v2492 = vld [vmem:[%s4 + $0x524] sm:$0xf]
      %v2493 = vld [vmem:[%s4 + $0x528] sm:$0xf]
      %v2494 = vld [vmem:[%s4 + $0x52c] sm:$0xf]
      %v2495 = vld [vmem:[%s4 + $0x530] sm:$0xf]
      %v2496 = vld [vmem:[%s4 + $0x534] sm:$0xf]
      %v2497 = vld [vmem:[%s4 + $0x538] sm:$0xf]
      %v2498 = vld [vmem:[%s4 + $0x53c] sm:$0xf]
      %v2499 = vld [vmem:[%s4 + $0x540] sm:$0xf]
      %v2500 = vld [vmem:[%s4 + $0x544] sm:$0xf]
      %v2501 = vld [vmem:[%s4 + $0x548] sm:$0xf]
      %v2502 = vld [vmem:[%s4 + $0x54c] sm:$0xf]
      %v2503 = vld [vmem:[%s4 + $0x550] sm:$0xf]
      %v2504 = vld [vmem:[%s4 + $0x554] sm:$0xf]
      %v2505 = vld [vmem:[%s4 + $0x558] sm:$0xf]
      %v2506 = vld [vmem:[%s4 + $0x55c] sm:$0xf]
      %v2507 = vld [vmem:[%s4 + $0x560] sm:$0xf]
      %v2508 = vld [vmem:[%s4 + $0x564] sm:$0xf]
      %v2509 = vld [vmem:[%s4 + $0x568] sm:$0xf]
      %v2510 = vld [vmem:[%s4 + $0x56c] sm:$0xf]
      %v2511 = vld [vmem:[%s4 + $0x570] sm:$0xf]
      %v2512 = vld [vmem:[%s4 + $0x574] sm:$0xf]
      %v2513 = vld [vmem:[%s4 + $0x578] sm:$0xf]
      %v2514 = vld [vmem:[%s4 + $0x57c] sm:$0xf]
      %v2515 = vld [vmem:[%s4 + $0x580] sm:$0xf]
      %v2516 = vld [vmem:[%s4 + $0x584] sm:$0xf]
      %v2517 = vld [vmem:[%s4 + $0x588] sm:$0xf]
      %v2518 = vld [vmem:[%s4 + $0x58c] sm:$0xf]
      %v2519 = vld [vmem:[%s4 + $0x590] sm:$0xf]
      %v2520 = vld [vmem:[%s4 + $0x594] sm:$0xf]
      %v2521 = vld [vmem:[%s4 + $0x598] sm:$0xf]
      %v2522 = vld [vmem:[%s4 + $0x59c] sm:$0xf]
      %v2523 = vld [vmem:[%s4 + $0x5a0] sm:$0xf]
      %v2524 = vld [vmem:[%s4 + $0x5a4] sm:$0xf]
      %v2525 = vld [vmem:[%s4 + $0x5a8] sm:$0xf]
      %v2526 = vld [vmem:[%s4 + $0x5ac] sm:$0xf]
      %v2527 = vld [vmem:[%s4 + $0x5b0] sm:$0xf]
      %v2528 = vld [vmem:[%s4 + $0x5b4] sm:$0xf]
      %v2529 = vld [vmem:[%s4 + $0x5b8] sm:$0xf]
      %v2530 = vld [vmem:[%s4 + $0x5bc] sm:$0xf]
      %v2531 = vld [vmem:[%s4 + $0x5c0] sm:$0xf]
      %v2532 = vld [vmem:[%s4 + $0x5c4] sm:$0xf]
      %v2533 = vld [vmem:[%s4 + $0x5c8] sm:$0xf]
      %v2534 = vld [vmem:[%s4 + $0x5cc] sm:$0xf]
      %v2535 = vld [vmem:[%s4 + $0x5d0] sm:$0xf]
      %v2536 = vld [vmem:[%s4 + $0x5d4] sm:$0xf]
      %v2537 = vld [vmem:[%s4 + $0x5d8] sm:$0xf]
      %v2538 = vld [vmem:[%s4 + $0x5dc] sm:$0xf]
      %v2539 = vld [vmem:[%s4 + $0x5e0] sm:$0xf]
      %v2540 = vld [vmem:[%s4 + $0x5e4] sm:$0xf]
      %v2541 = vld [vmem:[%s4 + $0x5e8] sm:$0xf]
      %v2542 = vld [vmem:[%s4 + $0x5ec] sm:$0xf]
      %v2543 = vld [vmem:[%s4 + $0x5f0] sm:$0xf]
      %v2544 = vld [vmem:[%s4 + $0x5f4] sm:$0xf]
      %v2545 = vld [vmem:[%s4 + $0x5f8] sm:$0xf]
      %v2546 = vld [vmem:[%s4 + $0x5fc] sm:$0xf]
      %v2547 = vld [vmem:[%s4 + $0x600] sm:$0xf]
      %v2548 = vld [vmem:[%s4 + $0x604] sm:$0xf]
      %v2549 = vld [vmem:[%s4 + $0x608] sm:$0xf]
      %v2550 = vld [vmem:[%s4 + $0x60c] sm:$0xf]
      %v2551 = vld [vmem:[%s4 + $0x610] sm:$0xf]
      %v2552 = vld [vmem:[%s4 + $0x614] sm:$0xf]
      %v2553 = vld [vmem:[%s4 + $0x618] sm:$0xf]
      %v2554 = vld [vmem:[%s4 + $0x61c] sm:$0xf]
      %v2555 = vld [vmem:[%s4 + $0x620] sm:$0xf]
      %v2556 = vld [vmem:[%s4 + $0x624] sm:$0xf]
      %v2557 = vld [vmem:[%s4 + $0x628] sm:$0xf]
      %v2558 = vld [vmem:[%s4 + $0x62c] sm:$0xf]
      %v2559 = vld [vmem:[%s4 + $0x630] sm:$0xf]
      %v2560 = vld [vmem:[%s4 + $0x634] sm:$0xf]
      %v2561 = vld [vmem:[%s4 + $0x638] sm:$0xf]
      %v2562 = vld [vmem:[%s4 + $0x63c] sm:$0xf]
      %v2563 = vld [vmem:[%s4 + $0x640] sm:$0xf]
      %v2564 = vld [vmem:[%s4 + $0x644] sm:$0xf]
      %v2565 = vld [vmem:[%s4 + $0x648] sm:$0xf]
      %v2566 = vld [vmem:[%s4 + $0x64c] sm:$0xf]
      %v2567 = vld [vmem:[%s4 + $0x650] sm:$0xf]
      %v2568 = vld [vmem:[%s4 + $0x654] sm:$0xf]
      %v2569 = vld [vmem:[%s4 + $0x658] sm:$0xf]
      %v2570 = vld [vmem:[%s4 + $0x65c] sm:$0xf]
      %v2571 = vld [vmem:[%s4 + $0x660] sm:$0xf]
      %v2572 = vld [vmem:[%s4 + $0x664] sm:$0xf]
      %v2573 = vld [vmem:[%s4 + $0x668] sm:$0xf]
      %v2574 = vld [vmem:[%s4 + $0x66c] sm:$0xf]
      %v2575 = vld [vmem:[%s4 + $0x670] sm:$0xf]
      %v2576 = vld [vmem:[%s4 + $0x674] sm:$0xf]
      %v2577 = vld [vmem:[%s4 + $0x678] sm:$0xf]
      %v2578 = vld [vmem:[%s4 + $0x67c] sm:$0xf]
      %v2579 = vld [vmem:[%s4 + $0x680] sm:$0xf]
      %v2580 = vld [vmem:[%s4 + $0x684] sm:$0xf]
      %v2581 = vld [vmem:[%s4 + $0x688] sm:$0xf]
      %v2582 = vld [vmem:[%s4 + $0x68c] sm:$0xf]
      %v2583 = vld [vmem:[%s4 + $0x690] sm:$0xf]
      %v2584 = vld [vmem:[%s4 + $0x694] sm:$0xf]
      %v2585 = vld [vmem:[%s4 + $0x698] sm:$0xf]
      %v2586 = vld [vmem:[%s4 + $0x69c] sm:$0xf]
      %v2587 = vld [vmem:[%s4 + $0x6a0] sm:$0xf]
      %v2588 = vld [vmem:[%s4 + $0x6a4] sm:$0xf]
      %v2589 = vld [vmem:[%s4 + $0x6a8] sm:$0xf]
      %v2590 = vld [vmem:[%s4 + $0x6ac] sm:$0xf]
      %v2591 = vld [vmem:[%s4 + $0x6b0] sm:$0xf]
      %v2592 = vld [vmem:[%s4 + $0x6b4] sm:$0xf]
      %v2593 = vld [vmem:[%s4 + $0x6b8] sm:$0xf]
      %v2594 = vld [vmem:[%s4 + $0x6bc] sm:$0xf]
      %v2595 = vld [vmem:[%s4 + $0x6c0] sm:$0xf]
      %v2596 = vld [vmem:[%s4 + $0x6c4] sm:$0xf]
      %v2597 = vld [vmem:[%s4 + $0x6c8] sm:$0xf]
      %v2598 = vld [vmem:[%s4 + $0x6cc] sm:$0xf]
      %v2599 = vld [vmem:[%s4 + $0x6d0] sm:$0xf]
      %v2600 = vld [vmem:[%s4 + $0x6d4] sm:$0xf]
      %v2601 = vld [vmem:[%s4 + $0x6d8] sm:$0xf]
      %v2602 = vld [vmem:[%s4 + $0x6dc] sm:$0xf]
      %v2603 = vld [vmem:[%s4 + $0x6e0] sm:$0xf]
      %v2604 = vld [vmem:[%s4 + $0x6e4] sm:$0xf]
      %v2605 = vld [vmem:[%s4 + $0x6e8] sm:$0xf]
      %v2606 = vld [vmem:[%s4 + $0x6ec] sm:$0xf]
      %v2607 = vld [vmem:[%s4 + $0x6f0] sm:$0xf]
      %v2608 = vld [vmem:[%s4 + $0x6f4] sm:$0xf]
      %v2609 = vld [vmem:[%s4 + $0x6f8] sm:$0xf]
      %v2610 = vld [vmem:[%s4 + $0x6fc] sm:$0xf]
      %v2611 = vld [vmem:[%s4 + $0x700] sm:$0xf]
      %v2612 = vld [vmem:[%s4 + $0x704] sm:$0xf]
      %v2613 = vld [vmem:[%s4 + $0x708] sm:$0xf]
      %v2614 = vld [vmem:[%s4 + $0x70c] sm:$0xf]
      %v2615 = vld [vmem:[%s4 + $0x710] sm:$0xf]
      %v2616 = vld [vmem:[%s4 + $0x714] sm:$0xf]
      %v2617 = vld [vmem:[%s4 + $0x718] sm:$0xf]
      %v2618 = vld [vmem:[%s4 + $0x71c] sm:$0xf]
      %v2619 = vld [vmem:[%s4 + $0x720] sm:$0xf]
      %v2620 = vld [vmem:[%s4 + $0x724] sm:$0xf]
      %v2621 = vld [vmem:[%s4 + $0x728] sm:$0xf]
      %v2622 = vld [vmem:[%s4 + $0x72c] sm:$0xf]
      %v2623 = vld [vmem:[%s4 + $0x730] sm:$0xf]
      %v2624 = vld [vmem:[%s4 + $0x734] sm:$0xf]
      %v2625 = vld [vmem:[%s4 + $0x738] sm:$0xf]
      %v2626 = vld [vmem:[%s4 + $0x73c] sm:$0xf]
      %v2627 = vld [vmem:[%s4 + $0x740] sm:$0xf]
      %v2628 = vld [vmem:[%s4 + $0x744] sm:$0xf]
      %v2629 = vld [vmem:[%s4 + $0x748] sm:$0xf]
      %v2630 = vld [vmem:[%s4 + $0x74c] sm:$0xf]
      %v2631 = vld [vmem:[%s4 + $0x750] sm:$0xf]
      %v2632 = vld [vmem:[%s4 + $0x754] sm:$0xf]
      %v2633 = vld [vmem:[%s4 + $0x758] sm:$0xf]
      %v2634 = vld [vmem:[%s4 + $0x75c] sm:$0xf]
      %v2635 = vld [vmem:[%s4 + $0x760] sm:$0xf]
      %v2636 = vld [vmem:[%s4 + $0x764] sm:$0xf]
      %v2637 = vld [vmem:[%s4 + $0x768] sm:$0xf]
      %v2638 = vld [vmem:[%s4 + $0x76c] sm:$0xf]
      %v2639 = vld [vmem:[%s4 + $0x770] sm:$0xf]
      %v2640 = vld [vmem:[%s4 + $0x774] sm:$0xf]
      %v2641 = vld [vmem:[%s4 + $0x778] sm:$0xf]
      %v2642 = vld [vmem:[%s4 + $0x77c] sm:$0xf]
      %v2643 = vld [vmem:[%s4 + $0x780] sm:$0xf]
      %v2644 = vld [vmem:[%s4 + $0x784] sm:$0xf]
      %v2645 = vld [vmem:[%s4 + $0x788] sm:$0xf]
      %v2646 = vld [vmem:[%s4 + $0x78c] sm:$0xf]
      %v2647 = vld [vmem:[%s4 + $0x790] sm:$0xf]
      %v2648 = vld [vmem:[%s4 + $0x794] sm:$0xf]
      %v2649 = vld [vmem:[%s4 + $0x798] sm:$0xf]
      %v2650 = vld [vmem:[%s4 + $0x79c] sm:$0xf]
      %v2651 = vld [vmem:[%s4 + $0x7a0] sm:$0xf]
      %v2652 = vld [vmem:[%s4 + $0x7a4] sm:$0xf]
      %v2653 = vld [vmem:[%s4 + $0x7a8] sm:$0xf]
      %v2654 = vld [vmem:[%s4 + $0x7ac] sm:$0xf]
      %v2655 = vld [vmem:[%s4 + $0x7b0] sm:$0xf]
      %v2656 = vld [vmem:[%s4 + $0x7b4] sm:$0xf]
      %v2657 = vld [vmem:[%s4 + $0x7b8] sm:$0xf]
      %v2658 = vld [vmem:[%s4 + $0x7bc] sm:$0xf]
      %v2659 = vld [vmem:[%s4 + $0x7c0] sm:$0xf]
      %v2660 = vld [vmem:[%s4 + $0x7c4] sm:$0xf]
      %v2661 = vld [vmem:[%s4 + $0x7c8] sm:$0xf]
      %v2662 = vld [vmem:[%s4 + $0x7cc] sm:$0xf]
      %v2663 = vld [vmem:[%s4 + $0x7d0] sm:$0xf]
      %v2664 = vld [vmem:[%s4 + $0x7d4] sm:$0xf]
      %v2665 = vld [vmem:[%s4 + $0x7d8] sm:$0xf]
      %v2666 = vld [vmem:[%s4 + $0x7dc] sm:$0xf]
      %v2667 = vld [vmem:[%s4 + $0x7e0] sm:$0xf]
      %v2668 = vld [vmem:[%s4 + $0x7e4] sm:$0xf]
      %v2669 = vld [vmem:[%s4 + $0x7e8] sm:$0xf]
      %v2670 = vld [vmem:[%s4 + $0x7ec] sm:$0xf]
      %v2671 = vld [vmem:[%s4 + $0x7f0] sm:$0xf]
      %v2672 = vld [vmem:[%s4 + $0x7f4] sm:$0xf]
      %v2673 = vld [vmem:[%s4 + $0x7f8] sm:$0xf]
      %v2674 = vld [vmem:[%s4 + $0x7fc] sm:$0xf]
      %v2675 = vld [vmem:[%s4 + $0x800] sm:$0xf]
      %v2676 = vld [vmem:[%s4 + $0x804] sm:$0xf]
      %v2677 = vld [vmem:[%s4 + $0x808] sm:$0xf]
      %v2678 = vld [vmem:[%s4 + $0x80c] sm:$0xf]
      %v2679 = vld [vmem:[%s4 + $0x810] sm:$0xf]
      %v2680 = vld [vmem:[%s4 + $0x814] sm:$0xf]
      %v2681 = vld [vmem:[%s4 + $0x818] sm:$0xf]
      %v2682 = vld [vmem:[%s4 + $0x81c] sm:$0xf]
      %v2683 = vld [vmem:[%s4 + $0x820] sm:$0xf]
      %v2684 = vld [vmem:[%s4 + $0x824] sm:$0xf]
      %v2685 = vld [vmem:[%s4 + $0x828] sm:$0xf]
      %v2686 = vld [vmem:[%s4 + $0x82c] sm:$0xf]
      %v2687 = vld [vmem:[%s4 + $0x830] sm:$0xf]
      %v2688 = vld [vmem:[%s4 + $0x834] sm:$0xf]
      %v2689 = vld [vmem:[%s4 + $0x838] sm:$0xf]
      %v2690 = vld [vmem:[%s4 + $0x83c] sm:$0xf]
      %v2691 = vld [vmem:[%s4 + $0x840] sm:$0xf]
      %v2692 = vld [vmem:[%s4 + $0x844] sm:$0xf]
      %v2693 = vld [vmem:[%s4 + $0x848] sm:$0xf]
      %v2694 = vld [vmem:[%s4 + $0x84c] sm:$0xf]
      %v2695 = vld [vmem:[%s4 + $0x850] sm:$0xf]
      %v2696 = vld [vmem:[%s4 + $0x854] sm:$0xf]
      %v2697 = vld [vmem:[%s4 + $0x858] sm:$0xf]
      %v2698 = vld [vmem:[%s4 + $0x85c] sm:$0xf]
      %v2699 = vld [vmem:[%s4 + $0x860] sm:$0xf]
      %v2700 = vld [vmem:[%s4 + $0x864] sm:$0xf]
      %v2701 = vld [vmem:[%s4 + $0x868] sm:$0xf]
      %v2702 = vld [vmem:[%s4 + $0x86c] sm:$0xf]
      %v2703 = vld [vmem:[%s4 + $0x870] sm:$0xf]
      %v2704 = vld [vmem:[%s4 + $0x874] sm:$0xf]
      %v2705 = vld [vmem:[%s4 + $0x878] sm:$0xf]
      %v2706 = vld [vmem:[%s4 + $0x87c] sm:$0xf]
      %v2707 = vld [vmem:[%s4 + $0x880] sm:$0xf]
      %v2708 = vld [vmem:[%s4 + $0x884] sm:$0xf]
      %v2709 = vld [vmem:[%s4 + $0x888] sm:$0xf]
      %v2710 = vld [vmem:[%s4 + $0x88c] sm:$0xf]
      %v2711 = vld [vmem:[%s4 + $0x890] sm:$0xf]
      %v2712 = vld [vmem:[%s4 + $0x894] sm:$0xf]
      %v2713 = vld [vmem:[%s4 + $0x898] sm:$0xf]
      %v2714 = vld [vmem:[%s4 + $0x89c] sm:$0xf]
      %v2715 = vld [vmem:[%s4 + $0x8a0] sm:$0xf]
      %v2716 = vld [vmem:[%s4 + $0x8a4] sm:$0xf]
      %v2717 = vld [vmem:[%s4 + $0x8a8] sm:$0xf]
      %v2718 = vld [vmem:[%s4 + $0x8ac] sm:$0xf]
      %v2719 = vld [vmem:[%s4 + $0x8b0] sm:$0xf]
      %v2720 = vld [vmem:[%s4 + $0x8b4] sm:$0xf]
      %v2721 = vld [vmem:[%s4 + $0x8b8] sm:$0xf]
      %v2722 = vld [vmem:[%s4 + $0x8bc] sm:$0xf]
      %v2723 = vld [vmem:[%s4 + $0x8c0] sm:$0xf]
      %v2724 = vld [vmem:[%s4 + $0x8c4] sm:$0xf]
      %v2725 = vld [vmem:[%s4 + $0x8c8] sm:$0xf]
      %v2726 = vld [vmem:[%s4 + $0x8cc] sm:$0xf]
      %v2727 = vld [vmem:[%s4 + $0x8d0] sm:$0xf]
      %v2728 = vld [vmem:[%s4 + $0x8d4] sm:$0xf]
      %v2729 = vld [vmem:[%s4 + $0x8d8] sm:$0xf]
      %v2730 = vld [vmem:[%s4 + $0x8dc] sm:$0xf]
      %v2731 = vld [vmem:[%s4 + $0x8e0] sm:$0xf]
      %v2732 = vld [vmem:[%s4 + $0x8e4] sm:$0xf]
      %v2733 = vld [vmem:[%s4 + $0x8e8] sm:$0xf]
      %v2734 = vld [vmem:[%s4 + $0x8ec] sm:$0xf]
      %v2735 = vld [vmem:[%s4 + $0x8f0] sm:$0xf]
      %v2736 = vld [vmem:[%s4 + $0x8f4] sm:$0xf]
      %v2737 = vld [vmem:[%s4 + $0x8f8] sm:$0xf]
      %v2738 = vld [vmem:[%s4 + $0x8fc] sm:$0xf]
      %v3315 = vunpack.c.l.b16 %v2163
      %v3316 = vunpack.c.l.b16 %v2164
      %v3317 = vunpack.c.l.b16 %v2165
      %v3318 = vunpack.c.l.b16 %v2166
      %v3319 = vunpack.c.l.b16 %v2167
      %v3320 = vunpack.c.l.b16 %v2168
      %v3321 = vunpack.c.l.b16 %v2169
      %v3322 = vunpack.c.l.b16 %v2170
      %v3323 = vunpack.c.l.b16 %v2171
      %v3324 = vunpack.c.l.b16 %v2172
      %v3325 = vunpack.c.l.b16 %v2173
      %v3326 = vunpack.c.l.b16 %v2174
      %v3327 = vunpack.c.l.b16 %v2175
      %v3328 = vunpack.c.l.b16 %v2176
      %v3329 = vunpack.c.l.b16 %v2177
      %v3330 = vunpack.c.l.b16 %v2178
      %v3331 = vunpack.c.l.b16 %v2179
      %v3332 = vunpack.c.l.b16 %v2180
      %v3333 = vunpack.c.l.b16 %v2181
      %v3334 = vunpack.c.l.b16 %v2182
      %v3335 = vunpack.c.l.b16 %v2183
      %v3336 = vunpack.c.l.b16 %v2184
      %v3337 = vunpack.c.l.b16 %v2185
      %v3338 = vunpack.c.l.b16 %v2186
      %v3339 = vunpack.c.l.b16 %v2187
      %v3340 = vunpack.c.l.b16 %v2188
      %v3341 = vunpack.c.l.b16 %v2189
      %v3342 = vunpack.c.l.b16 %v2190
      %v3343 = vunpack.c.l.b16 %v2191
      %v3344 = vunpack.c.l.b16 %v2192
      %v3345 = vunpack.c.l.b16 %v2193
      %v3346 = vunpack.c.l.b16 %v2194
      %v3347 = vunpack.c.l.b16 %v2195
      %v3348 = vunpack.c.l.b16 %v2196
      %v3349 = vunpack.c.l.b16 %v2197
      %v3350 = vunpack.c.l.b16 %v2198
      %v3351 = vunpack.c.l.b16 %v2199
      %v3352 = vunpack.c.l.b16 %v2200
      %v3353 = vunpack.c.l.b16 %v2201
      %v3354 = vunpack.c.l.b16 %v2202
      %v3355 = vunpack.c.l.b16 %v2203
      %v3356 = vunpack.c.l.b16 %v2204
      %v3357 = vunpack.c.l.b16 %v2205
      %v3358 = vunpack.c.l.b16 %v2206
      %v3359 = vunpack.c.l.b16 %v2207
      %v3360 = vunpack.c.l.b16 %v2208
      %v3361 = vunpack.c.l.b16 %v2209
      %v3362 = vunpack.c.l.b16 %v2210
      %v3363 = vunpack.c.l.b16 %v2211
      %v3364 = vunpack.c.l.b16 %v2212
      %v3365 = vunpack.c.l.b16 %v2213
      %v3366 = vunpack.c.l.b16 %v2214
      %v3367 = vunpack.c.l.b16 %v2215
      %v3368 = vunpack.c.l.b16 %v2216
      %v3369 = vunpack.c.l.b16 %v2217
      %v3370 = vunpack.c.l.b16 %v2218
      %v3371 = vunpack.c.l.b16 %v2219
      %v3372 = vunpack.c.l.b16 %v2220
      %v3373 = vunpack.c.l.b16 %v2221
      %v3374 = vunpack.c.l.b16 %v2222
      %v3375 = vunpack.c.l.b16 %v2223
      %v3376 = vunpack.c.l.b16 %v2224
      %v3377 = vunpack.c.l.b16 %v2225
      %v3378 = vunpack.c.l.b16 %v2226
      %v3379 = vunpack.c.l.b16 %v2227
      %v3380 = vunpack.c.l.b16 %v2228
      %v3381 = vunpack.c.l.b16 %v2229
      %v3382 = vunpack.c.l.b16 %v2230
      %v3383 = vunpack.c.l.b16 %v2231
      %v3384 = vunpack.c.l.b16 %v2232
      %v3385 = vunpack.c.l.b16 %v2233
      %v3386 = vunpack.c.l.b16 %v2234
      %v3387 = vunpack.c.l.b16 %v2235
      %v3388 = vunpack.c.l.b16 %v2236
      %v3389 = vunpack.c.l.b16 %v2237
      %v3390 = vunpack.c.l.b16 %v2238
      %v3391 = vunpack.c.l.b16 %v2239
      %v3392 = vunpack.c.l.b16 %v2240
      %v3393 = vunpack.c.l.b16 %v2241
      %v3394 = vunpack.c.l.b16 %v2242
      %v3395 = vunpack.c.l.b16 %v2243
      %v3396 = vunpack.c.l.b16 %v2244
      %v3397 = vunpack.c.l.b16 %v2245
      %v3398 = vunpack.c.l.b16 %v2246
      %v3399 = vunpack.c.l.b16 %v2247
      %v3400 = vunpack.c.l.b16 %v2248
      %v3401 = vunpack.c.l.b16 %v2249
      %v3402 = vunpack.c.l.b16 %v2250
      %v3403 = vunpack.c.l.b16 %v2251
      %v3404 = vunpack.c.l.b16 %v2252
      %v3405 = vunpack.c.l.b16 %v2253
      %v3406 = vunpack.c.l.b16 %v2254
      %v3407 = vunpack.c.l.b16 %v2255
      %v3408 = vunpack.c.l.b16 %v2256
      %v3409 = vunpack.c.l.b16 %v2257
      %v3410 = vunpack.c.l.b16 %v2258
      %v3411 = vunpack.c.l.b16 %v2259
      %v3412 = vunpack.c.l.b16 %v2260
      %v3413 = vunpack.c.l.b16 %v2261
      %v3414 = vunpack.c.l.b16 %v2262
      %v3415 = vunpack.c.l.b16 %v2263
      %v3416 = vunpack.c.l.b16 %v2264
      %v3417 = vunpack.c.l.b16 %v2265
      %v3418 = vunpack.c.l.b16 %v2266
      %v3419 = vunpack.c.l.b16 %v2267
      %v3420 = vunpack.c.l.b16 %v2268
      %v3421 = vunpack.c.l.b16 %v2269
      %v3422 = vunpack.c.l.b16 %v2270
      %v3423 = vunpack.c.l.b16 %v2271
      %v3424 = vunpack.c.l.b16 %v2272
      %v3425 = vunpack.c.l.b16 %v2273
      %v3426 = vunpack.c.l.b16 %v2274
      %v3427 = vunpack.c.l.b16 %v2275
      %v3428 = vunpack.c.l.b16 %v2276
      %v3429 = vunpack.c.l.b16 %v2277
      %v3430 = vunpack.c.l.b16 %v2278
      %v3431 = vunpack.c.l.b16 %v2279
      %v3432 = vunpack.c.l.b16 %v2280
      %v3433 = vunpack.c.l.b16 %v2281
      %v3434 = vunpack.c.l.b16 %v2282
      %v3435 = vunpack.c.l.b16 %v2283
      %v3436 = vunpack.c.l.b16 %v2284
      %v3437 = vunpack.c.l.b16 %v2285
      %v3438 = vunpack.c.l.b16 %v2286
      %v3439 = vunpack.c.l.b16 %v2287
      %v3440 = vunpack.c.l.b16 %v2288
      %v3441 = vunpack.c.l.b16 %v2289
      %v3442 = vunpack.c.l.b16 %v2290
      %v3443 = vunpack.c.l.b16 %v2291
      %v3444 = vunpack.c.l.b16 %v2292
      %v3445 = vunpack.c.l.b16 %v2293
      %v3446 = vunpack.c.l.b16 %v2294
      %v3447 = vunpack.c.l.b16 %v2295
      %v3448 = vunpack.c.l.b16 %v2296
      %v3449 = vunpack.c.l.b16 %v2297
      %v3450 = vunpack.c.l.b16 %v2298
      %v3451 = vunpack.c.l.b16 %v2299
      %v3452 = vunpack.c.l.b16 %v2300
      %v3453 = vunpack.c.l.b16 %v2301
      %v3454 = vunpack.c.l.b16 %v2302
      %v3455 = vunpack.c.l.b16 %v2303
      %v3456 = vunpack.c.l.b16 %v2304
      %v3457 = vunpack.c.l.b16 %v2305
      %v3458 = vunpack.c.l.b16 %v2306
      %v3459 = vunpack.c.l.b16 %v2307
      %v3460 = vunpack.c.l.b16 %v2308
      %v3461 = vunpack.c.l.b16 %v2309
      %v3462 = vunpack.c.l.b16 %v2310
      %v3463 = vunpack.c.l.b16 %v2311
      %v3464 = vunpack.c.l.b16 %v2312
      %v3465 = vunpack.c.l.b16 %v2313
      %v3466 = vunpack.c.l.b16 %v2314
      %v3467 = vunpack.c.l.b16 %v2315
      %v3468 = vunpack.c.l.b16 %v2316
      %v3469 = vunpack.c.l.b16 %v2317
      %v3470 = vunpack.c.l.b16 %v2318
      %v3471 = vunpack.c.l.b16 %v2319
      %v3472 = vunpack.c.l.b16 %v2320
      %v3473 = vunpack.c.l.b16 %v2321
      %v3474 = vunpack.c.l.b16 %v2322
      %v3475 = vunpack.c.l.b16 %v2323
      %v3476 = vunpack.c.l.b16 %v2324
      %v3477 = vunpack.c.l.b16 %v2325
      %v3478 = vunpack.c.l.b16 %v2326
      %v3479 = vunpack.c.l.b16 %v2327
      %v3480 = vunpack.c.l.b16 %v2328
      %v3481 = vunpack.c.l.b16 %v2329
      %v3482 = vunpack.c.l.b16 %v2330
      %v3483 = vunpack.c.l.b16 %v2331
      %v3484 = vunpack.c.l.b16 %v2332
      %v3485 = vunpack.c.l.b16 %v2333
      %v3486 = vunpack.c.l.b16 %v2334
      %v3487 = vunpack.c.l.b16 %v2335
      %v3488 = vunpack.c.l.b16 %v2336
      %v3489 = vunpack.c.l.b16 %v2337
      %v3490 = vunpack.c.l.b16 %v2338
      %v3491 = vunpack.c.l.b16 %v2339
      %v3492 = vunpack.c.l.b16 %v2340
      %v3493 = vunpack.c.l.b16 %v2341
      %v3494 = vunpack.c.l.b16 %v2342
      %v3495 = vunpack.c.l.b16 %v2343
      %v3496 = vunpack.c.l.b16 %v2344
      %v3497 = vunpack.c.l.b16 %v2345
      %v3498 = vunpack.c.l.b16 %v2346
      %v3499 = vunpack.c.l.b16 %v2347
      %v3500 = vunpack.c.l.b16 %v2348
      %v3501 = vunpack.c.l.b16 %v2349
      %v3502 = vunpack.c.l.b16 %v2350
      %v3503 = vunpack.c.l.b16 %v2351
      %v3504 = vunpack.c.l.b16 %v2352
      %v3505 = vunpack.c.l.b16 %v2353
      %v3506 = vunpack.c.l.b16 %v2354
      %v3507 = vunpack.c.l.b16 %v2355
      %v3508 = vunpack.c.l.b16 %v2356
      %v3509 = vunpack.c.l.b16 %v2357
      %v3510 = vunpack.c.l.b16 %v2358
      %v3511 = vunpack.c.l.b16 %v2359
      %v3512 = vunpack.c.l.b16 %v2360
      %v3513 = vunpack.c.l.b16 %v2361
      %v3514 = vunpack.c.l.b16 %v2362
      %v3515 = vunpack.c.l.b16 %v2363
      %v3516 = vunpack.c.l.b16 %v2364
      %v3517 = vunpack.c.l.b16 %v2365
      %v3518 = vunpack.c.l.b16 %v2366
      %v3519 = vunpack.c.l.b16 %v2367
      %v3520 = vunpack.c.l.b16 %v2368
      %v3521 = vunpack.c.l.b16 %v2369
      %v3522 = vunpack.c.l.b16 %v2370
      %v3523 = vunpack.c.l.b16 %v2371
      %v3524 = vunpack.c.l.b16 %v2372
      %v3525 = vunpack.c.l.b16 %v2373
      %v3526 = vunpack.c.l.b16 %v2374
      %v3527 = vunpack.c.l.b16 %v2375
      %v3528 = vunpack.c.l.b16 %v2376
      %v3529 = vunpack.c.l.b16 %v2377
      %v3530 = vunpack.c.l.b16 %v2378
      %v3531 = vunpack.c.l.b16 %v2379
      %v3532 = vunpack.c.l.b16 %v2380
      %v3533 = vunpack.c.l.b16 %v2381
      %v3534 = vunpack.c.l.b16 %v2382
      %v3535 = vunpack.c.l.b16 %v2383
      %v3536 = vunpack.c.l.b16 %v2384
      %v3537 = vunpack.c.l.b16 %v2385
      %v3538 = vunpack.c.l.b16 %v2386
      %v3539 = vunpack.c.l.b16 %v2387
      %v3540 = vunpack.c.l.b16 %v2388
      %v3541 = vunpack.c.l.b16 %v2389
      %v3542 = vunpack.c.l.b16 %v2390
      %v3543 = vunpack.c.l.b16 %v2391
      %v3544 = vunpack.c.l.b16 %v2392
      %v3545 = vunpack.c.l.b16 %v2393
      %v3546 = vunpack.c.l.b16 %v2394
      %v3547 = vunpack.c.l.b16 %v2395
      %v3548 = vunpack.c.l.b16 %v2396
      %v3549 = vunpack.c.l.b16 %v2397
      %v3550 = vunpack.c.l.b16 %v2398
      %v3551 = vunpack.c.l.b16 %v2399
      %v3552 = vunpack.c.l.b16 %v2400
      %v3553 = vunpack.c.l.b16 %v2401
      %v3554 = vunpack.c.l.b16 %v2402
      %v3555 = vunpack.c.l.b16 %v2403
      %v3556 = vunpack.c.l.b16 %v2404
      %v3557 = vunpack.c.l.b16 %v2405
      %v3558 = vunpack.c.l.b16 %v2406
      %v3559 = vunpack.c.l.b16 %v2407
      %v3560 = vunpack.c.l.b16 %v2408
      %v3561 = vunpack.c.l.b16 %v2409
      %v3562 = vunpack.c.l.b16 %v2410
      %v3563 = vunpack.c.l.b16 %v2411
      %v3564 = vunpack.c.l.b16 %v2412
      %v3565 = vunpack.c.l.b16 %v2413
      %v3566 = vunpack.c.l.b16 %v2414
      %v3567 = vunpack.c.l.b16 %v2415
      %v3568 = vunpack.c.l.b16 %v2416
      %v3569 = vunpack.c.l.b16 %v2417
      %v3570 = vunpack.c.l.b16 %v2418
      %v3571 = vunpack.c.l.b16 %v2419
      %v3572 = vunpack.c.l.b16 %v2420
      %v3573 = vunpack.c.l.b16 %v2421
      %v3574 = vunpack.c.l.b16 %v2422
      %v3575 = vunpack.c.l.b16 %v2423
      %v3576 = vunpack.c.l.b16 %v2424
      %v3577 = vunpack.c.l.b16 %v2425
      %v3578 = vunpack.c.l.b16 %v2426
      %v3579 = vunpack.c.l.b16 %v2427
      %v3580 = vunpack.c.l.b16 %v2428
      %v3581 = vunpack.c.l.b16 %v2429
      %v3582 = vunpack.c.l.b16 %v2430
      %v3583 = vunpack.c.l.b16 %v2431
      %v3584 = vunpack.c.l.b16 %v2432
      %v3585 = vunpack.c.l.b16 %v2433
      %v3586 = vunpack.c.l.b16 %v2434
      %v3587 = vunpack.c.l.b16 %v2435
      %v3588 = vunpack.c.l.b16 %v2436
      %v3589 = vunpack.c.l.b16 %v2437
      %v3590 = vunpack.c.l.b16 %v2438
      %v3591 = vunpack.c.l.b16 %v2439
      %v3592 = vunpack.c.l.b16 %v2440
      %v3593 = vunpack.c.l.b16 %v2441
      %v3594 = vunpack.c.l.b16 %v2442
      %v3595 = vunpack.c.l.b16 %v2443
      %v3596 = vunpack.c.l.b16 %v2444
      %v3597 = vunpack.c.l.b16 %v2445
      %v3598 = vunpack.c.l.b16 %v2446
      %v3599 = vunpack.c.l.b16 %v2447
      %v3600 = vunpack.c.l.b16 %v2448
      %v3601 = vunpack.c.l.b16 %v2449
      %v3602 = vunpack.c.l.b16 %v2450
      %v3603 = vunpack.c.l.b16 %v2451
      %v3604 = vunpack.c.l.b16 %v2452
      %v3605 = vunpack.c.l.b16 %v2453
      %v3606 = vunpack.c.l.b16 %v2454
      %v3607 = vunpack.c.l.b16 %v2455
      %v3608 = vunpack.c.l.b16 %v2456
      %v3609 = vunpack.c.l.b16 %v2457
      %v3610 = vunpack.c.l.b16 %v2458
      %v3611 = vunpack.c.l.b16 %v2459
      %v3612 = vunpack.c.l.b16 %v2460
      %v3613 = vunpack.c.l.b16 %v2461
      %v3614 = vunpack.c.l.b16 %v2462
      %v3615 = vunpack.c.l.b16 %v2463
      %v3616 = vunpack.c.l.b16 %v2464
      %v3617 = vunpack.c.l.b16 %v2465
      %v3618 = vunpack.c.l.b16 %v2466
      %v3619 = vunpack.c.l.b16 %v2467
      %v3620 = vunpack.c.l.b16 %v2468
      %v3621 = vunpack.c.l.b16 %v2469
      %v3622 = vunpack.c.l.b16 %v2470
      %v3623 = vunpack.c.l.b16 %v2471
      %v3624 = vunpack.c.l.b16 %v2472
      %v3625 = vunpack.c.l.b16 %v2473
      %v3626 = vunpack.c.l.b16 %v2474
      %v3627 = vunpack.c.l.b16 %v2475
      %v3628 = vunpack.c.l.b16 %v2476
      %v3629 = vunpack.c.l.b16 %v2477
      %v3630 = vunpack.c.l.b16 %v2478
      %v3631 = vunpack.c.l.b16 %v2479
      %v3632 = vunpack.c.l.b16 %v2480
      %v3633 = vunpack.c.l.b16 %v2481
      %v3634 = vunpack.c.l.b16 %v2482
      %v3635 = vunpack.c.l.b16 %v2483
      %v3636 = vunpack.c.l.b16 %v2484
      %v3637 = vunpack.c.l.b16 %v2485
      %v3638 = vunpack.c.l.b16 %v2486
      %v3639 = vunpack.c.l.b16 %v2487
      %v3640 = vunpack.c.l.b16 %v2488
      %v3641 = vunpack.c.l.b16 %v2489
      %v3642 = vunpack.c.l.b16 %v2490
      %v3643 = vunpack.c.l.b16 %v2491
      %v3644 = vunpack.c.l.b16 %v2492
      %v3645 = vunpack.c.l.b16 %v2493
      %v3646 = vunpack.c.l.b16 %v2494
      %v3647 = vunpack.c.l.b16 %v2495
      %v3648 = vunpack.c.l.b16 %v2496
      %v3649 = vunpack.c.l.b16 %v2497
      %v3650 = vunpack.c.l.b16 %v2498
      %v3651 = vunpack.c.l.b16 %v2499
      %v3652 = vunpack.c.l.b16 %v2500
      %v3653 = vunpack.c.l.b16 %v2501
      %v3654 = vunpack.c.l.b16 %v2502
      %v3655 = vunpack.c.l.b16 %v2503
      %v3656 = vunpack.c.l.b16 %v2504
      %v3657 = vunpack.c.l.b16 %v2505
      %v3658 = vunpack.c.l.b16 %v2506
      %v3659 = vunpack.c.l.b16 %v2507
      %v3660 = vunpack.c.l.b16 %v2508
      %v3661 = vunpack.c.l.b16 %v2509
      %v3662 = vunpack.c.l.b16 %v2510
      %v3663 = vunpack.c.l.b16 %v2511
      %v3664 = vunpack.c.l.b16 %v2512
      %v3665 = vunpack.c.l.b16 %v2513
      %v3666 = vunpack.c.l.b16 %v2514
      %v3667 = vunpack.c.l.b16 %v2515
      %v3668 = vunpack.c.l.b16 %v2516
      %v3669 = vunpack.c.l.b16 %v2517
      %v3670 = vunpack.c.l.b16 %v2518
      %v3671 = vunpack.c.l.b16 %v2519
      %v3672 = vunpack.c.l.b16 %v2520
      %v3673 = vunpack.c.l.b16 %v2521
      %v3674 = vunpack.c.l.b16 %v2522
      %v3675 = vunpack.c.l.b16 %v2523
      %v3676 = vunpack.c.l.b16 %v2524
      %v3677 = vunpack.c.l.b16 %v2525
      %v3678 = vunpack.c.l.b16 %v2526
      %v3679 = vunpack.c.l.b16 %v2527
      %v3680 = vunpack.c.l.b16 %v2528
      %v3681 = vunpack.c.l.b16 %v2529
      %v3682 = vunpack.c.l.b16 %v2530
      %v3683 = vunpack.c.l.b16 %v2531
      %v3684 = vunpack.c.l.b16 %v2532
      %v3685 = vunpack.c.l.b16 %v2533
      %v3686 = vunpack.c.l.b16 %v2534
      %v3687 = vunpack.c.l.b16 %v2535
      %v3688 = vunpack.c.l.b16 %v2536
      %v3689 = vunpack.c.l.b16 %v2537
      %v3690 = vunpack.c.l.b16 %v2538
      %v3691 = vunpack.c.l.b16 %v2539
      %v3692 = vunpack.c.l.b16 %v2540
      %v3693 = vunpack.c.l.b16 %v2541
      %v3694 = vunpack.c.l.b16 %v2542
      %v3695 = vunpack.c.l.b16 %v2543
      %v3696 = vunpack.c.l.b16 %v2544
      %v3697 = vunpack.c.l.b16 %v2545
      %v3698 = vunpack.c.l.b16 %v2546
      %v3699 = vunpack.c.l.b16 %v2547
      %v3700 = vunpack.c.l.b16 %v2548
      %v3701 = vunpack.c.l.b16 %v2549
      %v3702 = vunpack.c.l.b16 %v2550
      %v3703 = vunpack.c.l.b16 %v2551
      %v3704 = vunpack.c.l.b16 %v2552
      %v3705 = vunpack.c.l.b16 %v2553
      %v3706 = vunpack.c.l.b16 %v2554
      %v3707 = vunpack.c.l.b16 %v2555
      %v3708 = vunpack.c.l.b16 %v2556
      %v3709 = vunpack.c.l.b16 %v2557
      %v3710 = vunpack.c.l.b16 %v2558
      %v3711 = vunpack.c.l.b16 %v2559
      %v3712 = vunpack.c.l.b16 %v2560
      %v3713 = vunpack.c.l.b16 %v2561
      %v3714 = vunpack.c.l.b16 %v2562
      %v3715 = vunpack.c.l.b16 %v2563
      %v3716 = vunpack.c.l.b16 %v2564
      %v3717 = vunpack.c.l.b16 %v2565
      %v3718 = vunpack.c.l.b16 %v2566
      %v3719 = vunpack.c.l.b16 %v2567
      %v3720 = vunpack.c.l.b16 %v2568
      %v3721 = vunpack.c.l.b16 %v2569
      %v3722 = vunpack.c.l.b16 %v2570
      %v3723 = vunpack.c.l.b16 %v2571
      %v3724 = vunpack.c.l.b16 %v2572
      %v3725 = vunpack.c.l.b16 %v2573
      %v3726 = vunpack.c.l.b16 %v2574
      %v3727 = vunpack.c.l.b16 %v2575
      %v3728 = vunpack.c.l.b16 %v2576
      %v3729 = vunpack.c.l.b16 %v2577
      %v3730 = vunpack.c.l.b16 %v2578
      %v3731 = vunpack.c.l.b16 %v2579
      %v3732 = vunpack.c.l.b16 %v2580
      %v3733 = vunpack.c.l.b16 %v2581
      %v3734 = vunpack.c.l.b16 %v2582
      %v3735 = vunpack.c.l.b16 %v2583
      %v3736 = vunpack.c.l.b16 %v2584
      %v3737 = vunpack.c.l.b16 %v2585
      %v3738 = vunpack.c.l.b16 %v2586
      %v3739 = vunpack.c.l.b16 %v2587
      %v3740 = vunpack.c.l.b16 %v2588
      %v3741 = vunpack.c.l.b16 %v2589
      %v3742 = vunpack.c.l.b16 %v2590
      %v3743 = vunpack.c.l.b16 %v2591
      %v3744 = vunpack.c.l.b16 %v2592
      %v3745 = vunpack.c.l.b16 %v2593
      %v3746 = vunpack.c.l.b16 %v2594
      %v3747 = vunpack.c.l.b16 %v2595
      %v3748 = vunpack.c.l.b16 %v2596
      %v3749 = vunpack.c.l.b16 %v2597
      %v3750 = vunpack.c.l.b16 %v2598
      %v3751 = vunpack.c.l.b16 %v2599
      %v3752 = vunpack.c.l.b16 %v2600
      %v3753 = vunpack.c.l.b16 %v2601
      %v3754 = vunpack.c.l.b16 %v2602
      %v3755 = vunpack.c.l.b16 %v2603
      %v3756 = vunpack.c.l.b16 %v2604
      %v3757 = vunpack.c.l.b16 %v2605
      %v3758 = vunpack.c.l.b16 %v2606
      %v3759 = vunpack.c.l.b16 %v2607
      %v3760 = vunpack.c.l.b16 %v2608
      %v3761 = vunpack.c.l.b16 %v2609
      %v3762 = vunpack.c.l.b16 %v2610
      %v3763 = vunpack.c.l.b16 %v2611
      %v3764 = vunpack.c.l.b16 %v2612
      %v3765 = vunpack.c.l.b16 %v2613
      %v3766 = vunpack.c.l.b16 %v2614
      %v3767 = vunpack.c.l.b16 %v2615
      %v3768 = vunpack.c.l.b16 %v2616
      %v3769 = vunpack.c.l.b16 %v2617
      %v3770 = vunpack.c.l.b16 %v2618
      %v3771 = vunpack.c.l.b16 %v2619
      %v3772 = vunpack.c.l.b16 %v2620
      %v3773 = vunpack.c.l.b16 %v2621
      %v3774 = vunpack.c.l.b16 %v2622
      %v3775 = vunpack.c.l.b16 %v2623
      %v3776 = vunpack.c.l.b16 %v2624
      %v3777 = vunpack.c.l.b16 %v2625
      %v3778 = vunpack.c.l.b16 %v2626
      %v3779 = vunpack.c.l.b16 %v2627
      %v3780 = vunpack.c.l.b16 %v2628
      %v3781 = vunpack.c.l.b16 %v2629
      %v3782 = vunpack.c.l.b16 %v2630
      %v3783 = vunpack.c.l.b16 %v2631
      %v3784 = vunpack.c.l.b16 %v2632
      %v3785 = vunpack.c.l.b16 %v2633
      %v3786 = vunpack.c.l.b16 %v2634
      %v3787 = vunpack.c.l.b16 %v2635
      %v3788 = vunpack.c.l.b16 %v2636
      %v3789 = vunpack.c.l.b16 %v2637
      %v3790 = vunpack.c.l.b16 %v2638
      %v3791 = vunpack.c.l.b16 %v2639
      %v3792 = vunpack.c.l.b16 %v2640
      %v3793 = vunpack.c.l.b16 %v2641
      %v3794 = vunpack.c.l.b16 %v2642
      %v3795 = vunpack.c.l.b16 %v2643
      %v3796 = vunpack.c.l.b16 %v2644
      %v3797 = vunpack.c.l.b16 %v2645
      %v3798 = vunpack.c.l.b16 %v2646
      %v3799 = vunpack.c.l.b16 %v2647
      %v3800 = vunpack.c.l.b16 %v2648
      %v3801 = vunpack.c.l.b16 %v2649
      %v3802 = vunpack.c.l.b16 %v2650
      %v3803 = vunpack.c.l.b16 %v2651
      %v3804 = vunpack.c.l.b16 %v2652
      %v3805 = vunpack.c.l.b16 %v2653
      %v3806 = vunpack.c.l.b16 %v2654
      %v3807 = vunpack.c.l.b16 %v2655
      %v3808 = vunpack.c.l.b16 %v2656
      %v3809 = vunpack.c.l.b16 %v2657
      %v3810 = vunpack.c.l.b16 %v2658
      %v3811 = vunpack.c.l.b16 %v2659
      %v3812 = vunpack.c.l.b16 %v2660
      %v3813 = vunpack.c.l.b16 %v2661
      %v3814 = vunpack.c.l.b16 %v2662
      %v3815 = vunpack.c.l.b16 %v2663
      %v3816 = vunpack.c.l.b16 %v2664
      %v3817 = vunpack.c.l.b16 %v2665
      %v3818 = vunpack.c.l.b16 %v2666
      %v3819 = vunpack.c.l.b16 %v2667
      %v3820 = vunpack.c.l.b16 %v2668
      %v3821 = vunpack.c.l.b16 %v2669
      %v3822 = vunpack.c.l.b16 %v2670
      %v3823 = vunpack.c.l.b16 %v2671
      %v3824 = vunpack.c.l.b16 %v2672
      %v3825 = vunpack.c.l.b16 %v2673
      %v3826 = vunpack.c.l.b16 %v2674
      %v3827 = vunpack.c.l.b16 %v2675
      %v3828 = vunpack.c.l.b16 %v2676
      %v3829 = vunpack.c.l.b16 %v2677
      %v3830 = vunpack.c.l.b16 %v2678
      %v3831 = vunpack.c.l.b16 %v2679
      %v3832 = vunpack.c.l.b16 %v2680
      %v3833 = vunpack.c.l.b16 %v2681
      %v3834 = vunpack.c.l.b16 %v2682
      %v3835 = vunpack.c.l.b16 %v2683
      %v3836 = vunpack.c.l.b16 %v2684
      %v3837 = vunpack.c.l.b16 %v2685
      %v3838 = vunpack.c.l.b16 %v2686
      %v3839 = vunpack.c.l.b16 %v2687
      %v3840 = vunpack.c.l.b16 %v2688
      %v3841 = vunpack.c.l.b16 %v2689
      %v3842 = vunpack.c.l.b16 %v2690
      %v3843 = vunpack.c.l.b16 %v2691
      %v3844 = vunpack.c.l.b16 %v2692
      %v3845 = vunpack.c.l.b16 %v2693
      %v3846 = vunpack.c.l.b16 %v2694
      %v3847 = vunpack.c.l.b16 %v2695
      %v3848 = vunpack.c.l.b16 %v2696
      %v3849 = vunpack.c.l.b16 %v2697
      %v3850 = vunpack.c.l.b16 %v2698
      %v3851 = vunpack.c.l.b16 %v2699
      %v3852 = vunpack.c.l.b16 %v2700
      %v3853 = vunpack.c.l.b16 %v2701
      %v3854 = vunpack.c.l.b16 %v2702
      %v3855 = vunpack.c.l.b16 %v2703
      %v3856 = vunpack.c.l.b16 %v2704
      %v3857 = vunpack.c.l.b16 %v2705
      %v3858 = vunpack.c.l.b16 %v2706
      %v3859 = vunpack.c.l.b16 %v2707
      %v3860 = vunpack.c.l.b16 %v2708
      %v3861 = vunpack.c.l.b16 %v2709
      %v3862 = vunpack.c.l.b16 %v2710
      %v3863 = vunpack.c.l.b16 %v2711
      %v3864 = vunpack.c.l.b16 %v2712
      %v3865 = vunpack.c.l.b16 %v2713
      %v3866 = vunpack.c.l.b16 %v2714
      %v3867 = vunpack.c.l.b16 %v2715
      %v3868 = vunpack.c.l.b16 %v2716
      %v3869 = vunpack.c.l.b16 %v2717
      %v3870 = vunpack.c.l.b16 %v2718
      %v3871 = vunpack.c.l.b16 %v2719
      %v3872 = vunpack.c.l.b16 %v2720
      %v3873 = vunpack.c.l.b16 %v2721
      %v3874 = vunpack.c.l.b16 %v2722
      %v3875 = vunpack.c.l.b16 %v2723
      %v3876 = vunpack.c.l.b16 %v2724
      %v3877 = vunpack.c.l.b16 %v2725
      %v3878 = vunpack.c.l.b16 %v2726
      %v3879 = vunpack.c.l.b16 %v2727
      %v3880 = vunpack.c.l.b16 %v2728
      %v3881 = vunpack.c.l.b16 %v2729
      %v3882 = vunpack.c.l.b16 %v2730
      %v3883 = vunpack.c.l.b16 %v2731
      %v3884 = vunpack.c.l.b16 %v2732
      %v3885 = vunpack.c.l.b16 %v2733
      %v3886 = vunpack.c.l.b16 %v2734
      %v3887 = vunpack.c.l.b16 %v2735
      %v3888 = vunpack.c.l.b16 %v2736
      %v3889 = vunpack.c.l.b16 %v2737
      %v3890 = vunpack.c.l.b16 %v2738
      %v3891 = vpack.c.b16 %v3316, %v3315
      %v3892 = vpack.c.b16 %v3318, %v3317
      %v3893 = vpack.c.b16 %v3320, %v3319
      %v3894 = vpack.c.b16 %v3322, %v3321
      %v3895 = vpack.c.b16 %v3324, %v3323
      %v3896 = vpack.c.b16 %v3326, %v3325
      %v3897 = vpack.c.b16 %v3328, %v3327
      %v3898 = vpack.c.b16 %v3330, %v3329
      %v3899 = vpack.c.b16 %v3332, %v3331
      %v3900 = vpack.c.b16 %v3334, %v3333
      %v3901 = vpack.c.b16 %v3336, %v3335
      %v3902 = vpack.c.b16 %v3338, %v3337
      %v3903 = vpack.c.b16 %v3340, %v3339
      %v3904 = vpack.c.b16 %v3342, %v3341
      %v3905 = vpack.c.b16 %v3344, %v3343
      %v3906 = vpack.c.b16 %v3346, %v3345
      %v3907 = vpack.c.b16 %v3348, %v3347
      %v3908 = vpack.c.b16 %v3350, %v3349
      %v3909 = vpack.c.b16 %v3352, %v3351
      %v3910 = vpack.c.b16 %v3354, %v3353
      %v3911 = vpack.c.b16 %v3356, %v3355
      %v3912 = vpack.c.b16 %v3358, %v3357
      %v3913 = vpack.c.b16 %v3360, %v3359
      %v3914 = vpack.c.b16 %v3362, %v3361
      %v3915 = vpack.c.b16 %v3364, %v3363
      %v3916 = vpack.c.b16 %v3366, %v3365
      %v3917 = vpack.c.b16 %v3368, %v3367
      %v3918 = vpack.c.b16 %v3370, %v3369
      %v3919 = vpack.c.b16 %v3372, %v3371
      %v3920 = vpack.c.b16 %v3374, %v3373
      %v3921 = vpack.c.b16 %v3376, %v3375
      %v3922 = vpack.c.b16 %v3378, %v3377
      %v3923 = vpack.c.b16 %v3380, %v3379
      %v3924 = vpack.c.b16 %v3382, %v3381
      %v3925 = vpack.c.b16 %v3384, %v3383
      %v3926 = vpack.c.b16 %v3386, %v3385
      %v3927 = vpack.c.b16 %v3388, %v3387
      %v3928 = vpack.c.b16 %v3390, %v3389
      %v3929 = vpack.c.b16 %v3392, %v3391
      %v3930 = vpack.c.b16 %v3394, %v3393
      %v3931 = vpack.c.b16 %v3396, %v3395
      %v3932 = vpack.c.b16 %v3398, %v3397
      %v3933 = vpack.c.b16 %v3400, %v3399
      %v3934 = vpack.c.b16 %v3402, %v3401
      %v3935 = vpack.c.b16 %v3404, %v3403
      %v3936 = vpack.c.b16 %v3406, %v3405
      %v3937 = vpack.c.b16 %v3408, %v3407
      %v3938 = vpack.c.b16 %v3410, %v3409
      %v3939 = vpack.c.b16 %v3412, %v3411
      %v3940 = vpack.c.b16 %v3414, %v3413
      %v3941 = vpack.c.b16 %v3416, %v3415
      %v3942 = vpack.c.b16 %v3418, %v3417
      %v3943 = vpack.c.b16 %v3420, %v3419
      %v3944 = vpack.c.b16 %v3422, %v3421
      %v3945 = vpack.c.b16 %v3424, %v3423
      %v3946 = vpack.c.b16 %v3426, %v3425
      %v3947 = vpack.c.b16 %v3428, %v3427
      %v3948 = vpack.c.b16 %v3430, %v3429
      %v3949 = vpack.c.b16 %v3432, %v3431
      %v3950 = vpack.c.b16 %v3434, %v3433
      %v3951 = vpack.c.b16 %v3436, %v3435
      %v3952 = vpack.c.b16 %v3438, %v3437
      %v3953 = vpack.c.b16 %v3440, %v3439
      %v3954 = vpack.c.b16 %v3442, %v3441
      %v3955 = vpack.c.b16 %v3444, %v3443
      %v3956 = vpack.c.b16 %v3446, %v3445
      %v3957 = vpack.c.b16 %v3448, %v3447
      %v3958 = vpack.c.b16 %v3450, %v3449
      %v3959 = vpack.c.b16 %v3452, %v3451
      %v3960 = vpack.c.b16 %v3454, %v3453
      %v3961 = vpack.c.b16 %v3456, %v3455
      %v3962 = vpack.c.b16 %v3458, %v3457
      %v3963 = vpack.c.b16 %v3460, %v3459
      %v3964 = vpack.c.b16 %v3462, %v3461
      %v3965 = vpack.c.b16 %v3464, %v3463
      %v3966 = vpack.c.b16 %v3466, %v3465
      %v3967 = vpack.c.b16 %v3468, %v3467
      %v3968 = vpack.c.b16 %v3470, %v3469
      %v3969 = vpack.c.b16 %v3472, %v3471
      %v3970 = vpack.c.b16 %v3474, %v3473
      %v3971 = vpack.c.b16 %v3476, %v3475
      %v3972 = vpack.c.b16 %v3478, %v3477
      %v3973 = vpack.c.b16 %v3480, %v3479
      %v3974 = vpack.c.b16 %v3482, %v3481
      %v3975 = vpack.c.b16 %v3484, %v3483
      %v3976 = vpack.c.b16 %v3486, %v3485
      %v3977 = vpack.c.b16 %v3488, %v3487
      %v3978 = vpack.c.b16 %v3490, %v3489
      %v3979 = vpack.c.b16 %v3492, %v3491
      %v3980 = vpack.c.b16 %v3494, %v3493
      %v3981 = vpack.c.b16 %v3496, %v3495
      %v3982 = vpack.c.b16 %v3498, %v3497
      %v3983 = vpack.c.b16 %v3500, %v3499
      %v3984 = vpack.c.b16 %v3502, %v3501
      %v3985 = vpack.c.b16 %v3504, %v3503
      %v3986 = vpack.c.b16 %v3506, %v3505
      %v3987 = vpack.c.b16 %v3508, %v3507
      %v3988 = vpack.c.b16 %v3510, %v3509
      %v3989 = vpack.c.b16 %v3512, %v3511
      %v3990 = vpack.c.b16 %v3514, %v3513
      %v3991 = vpack.c.b16 %v3516, %v3515
      %v3992 = vpack.c.b16 %v3518, %v3517
      %v3993 = vpack.c.b16 %v3520, %v3519
      %v3994 = vpack.c.b16 %v3522, %v3521
      %v3995 = vpack.c.b16 %v3524, %v3523
      %v3996 = vpack.c.b16 %v3526, %v3525
      %v3997 = vpack.c.b16 %v3528, %v3527
      %v3998 = vpack.c.b16 %v3530, %v3529
      %v3999 = vpack.c.b16 %v3532, %v3531
      %v4000 = vpack.c.b16 %v3534, %v3533
      %v4001 = vpack.c.b16 %v3536, %v3535
      %v4002 = vpack.c.b16 %v3538, %v3537
      %v4003 = vpack.c.b16 %v3540, %v3539
      %v4004 = vpack.c.b16 %v3542, %v3541
      %v4005 = vpack.c.b16 %v3544, %v3543
      %v4006 = vpack.c.b16 %v3546, %v3545
      %v4007 = vpack.c.b16 %v3548, %v3547
      %v4008 = vpack.c.b16 %v3550, %v3549
      %v4009 = vpack.c.b16 %v3552, %v3551
      %v4010 = vpack.c.b16 %v3554, %v3553
      %v4011 = vpack.c.b16 %v3556, %v3555
      %v4012 = vpack.c.b16 %v3558, %v3557
      %v4013 = vpack.c.b16 %v3560, %v3559
      %v4014 = vpack.c.b16 %v3562, %v3561
      %v4015 = vpack.c.b16 %v3564, %v3563
      %v4016 = vpack.c.b16 %v3566, %v3565
      %v4017 = vpack.c.b16 %v3568, %v3567
      %v4018 = vpack.c.b16 %v3570, %v3569
      %v4019 = vpack.c.b16 %v3572, %v3571
      %v4020 = vpack.c.b16 %v3574, %v3573
      %v4021 = vpack.c.b16 %v3576, %v3575
      %v4022 = vpack.c.b16 %v3578, %v3577
      %v4023 = vpack.c.b16 %v3580, %v3579
      %v4024 = vpack.c.b16 %v3582, %v3581
      %v4025 = vpack.c.b16 %v3584, %v3583
      %v4026 = vpack.c.b16 %v3586, %v3585
      %v4027 = vpack.c.b16 %v3588, %v3587
      %v4028 = vpack.c.b16 %v3590, %v3589
      %v4029 = vpack.c.b16 %v3592, %v3591
      %v4030 = vpack.c.b16 %v3594, %v3593
      %v4031 = vpack.c.b16 %v3596, %v3595
      %v4032 = vpack.c.b16 %v3598, %v3597
      %v4033 = vpack.c.b16 %v3600, %v3599
      %v4034 = vpack.c.b16 %v3602, %v3601
      %v4035 = vpack.c.b16 %v3604, %v3603
      %v4036 = vpack.c.b16 %v3606, %v3605
      %v4037 = vpack.c.b16 %v3608, %v3607
      %v4038 = vpack.c.b16 %v3610, %v3609
      %v4039 = vpack.c.b16 %v3612, %v3611
      %v4040 = vpack.c.b16 %v3614, %v3613
      %v4041 = vpack.c.b16 %v3616, %v3615
      %v4042 = vpack.c.b16 %v3618, %v3617
      %v4043 = vpack.c.b16 %v3620, %v3619
      %v4044 = vpack.c.b16 %v3622, %v3621
      %v4045 = vpack.c.b16 %v3624, %v3623
      %v4046 = vpack.c.b16 %v3626, %v3625
      %v4047 = vpack.c.b16 %v3628, %v3627
      %v4048 = vpack.c.b16 %v3630, %v3629
      %v4049 = vpack.c.b16 %v3632, %v3631
      %v4050 = vpack.c.b16 %v3634, %v3633
      %v4051 = vpack.c.b16 %v3636, %v3635
      %v4052 = vpack.c.b16 %v3638, %v3637
      %v4053 = vpack.c.b16 %v3640, %v3639
      %v4054 = vpack.c.b16 %v3642, %v3641
      %v4055 = vpack.c.b16 %v3644, %v3643
      %v4056 = vpack.c.b16 %v3646, %v3645
      %v4057 = vpack.c.b16 %v3648, %v3647
      %v4058 = vpack.c.b16 %v3650, %v3649
      %v4059 = vpack.c.b16 %v3652, %v3651
      %v4060 = vpack.c.b16 %v3654, %v3653
      %v4061 = vpack.c.b16 %v3656, %v3655
      %v4062 = vpack.c.b16 %v3658, %v3657
      %v4063 = vpack.c.b16 %v3660, %v3659
      %v4064 = vpack.c.b16 %v3662, %v3661
      %v4065 = vpack.c.b16 %v3664, %v3663
      %v4066 = vpack.c.b16 %v3666, %v3665
      %v4067 = vpack.c.b16 %v3668, %v3667
      %v4068 = vpack.c.b16 %v3670, %v3669
      %v4069 = vpack.c.b16 %v3672, %v3671
      %v4070 = vpack.c.b16 %v3674, %v3673
      %v4071 = vpack.c.b16 %v3676, %v3675
      %v4072 = vpack.c.b16 %v3678, %v3677
      %v4073 = vpack.c.b16 %v3680, %v3679
      %v4074 = vpack.c.b16 %v3682, %v3681
      %v4075 = vpack.c.b16 %v3684, %v3683
      %v4076 = vpack.c.b16 %v3686, %v3685
      %v4077 = vpack.c.b16 %v3688, %v3687
      %v4078 = vpack.c.b16 %v3690, %v3689
      %v4079 = vpack.c.b16 %v3692, %v3691
      %v4080 = vpack.c.b16 %v3694, %v3693
      %v4081 = vpack.c.b16 %v3696, %v3695
      %v4082 = vpack.c.b16 %v3698, %v3697
      %v4083 = vpack.c.b16 %v3700, %v3699
      %v4084 = vpack.c.b16 %v3702, %v3701
      %v4085 = vpack.c.b16 %v3704, %v3703
      %v4086 = vpack.c.b16 %v3706, %v3705
      %v4087 = vpack.c.b16 %v3708, %v3707
      %v4088 = vpack.c.b16 %v3710, %v3709
      %v4089 = vpack.c.b16 %v3712, %v3711
      %v4090 = vpack.c.b16 %v3714, %v3713
      %v4091 = vpack.c.b16 %v3716, %v3715
      %v4092 = vpack.c.b16 %v3718, %v3717
      %v4093 = vpack.c.b16 %v3720, %v3719
      %v4094 = vpack.c.b16 %v3722, %v3721
      %v4095 = vpack.c.b16 %v3724, %v3723
      %v4096 = vpack.c.b16 %v3726, %v3725
      %v4097 = vpack.c.b16 %v3728, %v3727
      %v4098 = vpack.c.b16 %v3730, %v3729
      %v4099 = vpack.c.b16 %v3732, %v3731
      %v4100 = vpack.c.b16 %v3734, %v3733
      %v4101 = vpack.c.b16 %v3736, %v3735
      %v4102 = vpack.c.b16 %v3738, %v3737
      %v4103 = vpack.c.b16 %v3740, %v3739
      %v4104 = vpack.c.b16 %v3742, %v3741
      %v4105 = vpack.c.b16 %v3744, %v3743
      %v4106 = vpack.c.b16 %v3746, %v3745
      %v4107 = vpack.c.b16 %v3748, %v3747
      %v4108 = vpack.c.b16 %v3750, %v3749
      %v4109 = vpack.c.b16 %v3752, %v3751
      %v4110 = vpack.c.b16 %v3754, %v3753
      %v4111 = vpack.c.b16 %v3756, %v3755
      %v4112 = vpack.c.b16 %v3758, %v3757
      %v4113 = vpack.c.b16 %v3760, %v3759
      %v4114 = vpack.c.b16 %v3762, %v3761
      %v4115 = vpack.c.b16 %v3764, %v3763
      %v4116 = vpack.c.b16 %v3766, %v3765
      %v4117 = vpack.c.b16 %v3768, %v3767
      %v4118 = vpack.c.b16 %v3770, %v3769
      %v4119 = vpack.c.b16 %v3772, %v3771
      %v4120 = vpack.c.b16 %v3774, %v3773
      %v4121 = vpack.c.b16 %v3776, %v3775
      %v4122 = vpack.c.b16 %v3778, %v3777
      %v4123 = vpack.c.b16 %v3780, %v3779
      %v4124 = vpack.c.b16 %v3782, %v3781
      %v4125 = vpack.c.b16 %v3784, %v3783
      %v4126 = vpack.c.b16 %v3786, %v3785
      %v4127 = vpack.c.b16 %v3788, %v3787
      %v4128 = vpack.c.b16 %v3790, %v3789
      %v4129 = vpack.c.b16 %v3792, %v3791
      %v4130 = vpack.c.b16 %v3794, %v3793
      %v4131 = vpack.c.b16 %v3796, %v3795
      %v4132 = vpack.c.b16 %v3798, %v3797
      %v4133 = vpack.c.b16 %v3800, %v3799
      %v4134 = vpack.c.b16 %v3802, %v3801
      %v4135 = vpack.c.b16 %v3804, %v3803
      %v4136 = vpack.c.b16 %v3806, %v3805
      %v4137 = vpack.c.b16 %v3808, %v3807
      %v4138 = vpack.c.b16 %v3810, %v3809
      %v4139 = vpack.c.b16 %v3812, %v3811
      %v4140 = vpack.c.b16 %v3814, %v3813
      %v4141 = vpack.c.b16 %v3816, %v3815
      %v4142 = vpack.c.b16 %v3818, %v3817
      %v4143 = vpack.c.b16 %v3820, %v3819
      %v4144 = vpack.c.b16 %v3822, %v3821
      %v4145 = vpack.c.b16 %v3824, %v3823
      %v4146 = vpack.c.b16 %v3826, %v3825
      %v4147 = vpack.c.b16 %v3828, %v3827
      %v4148 = vpack.c.b16 %v3830, %v3829
      %v4149 = vpack.c.b16 %v3832, %v3831
      %v4150 = vpack.c.b16 %v3834, %v3833
      %v4151 = vpack.c.b16 %v3836, %v3835
      %v4152 = vpack.c.b16 %v3838, %v3837
      %v4153 = vpack.c.b16 %v3840, %v3839
      %v4154 = vpack.c.b16 %v3842, %v3841
      %v4155 = vpack.c.b16 %v3844, %v3843
      %v4156 = vpack.c.b16 %v3846, %v3845
      %v4157 = vpack.c.b16 %v3848, %v3847
      %v4158 = vpack.c.b16 %v3850, %v3849
      %v4159 = vpack.c.b16 %v3852, %v3851
      %v4160 = vpack.c.b16 %v3854, %v3853
      %v4161 = vpack.c.b16 %v3856, %v3855
      %v4162 = vpack.c.b16 %v3858, %v3857
      %v4163 = vpack.c.b16 %v3860, %v3859
      %v4164 = vpack.c.b16 %v3862, %v3861
      %v4165 = vpack.c.b16 %v3864, %v3863
      %v4166 = vpack.c.b16 %v3866, %v3865
      %v4167 = vpack.c.b16 %v3868, %v3867
      %v4168 = vpack.c.b16 %v3870, %v3869
      %v4169 = vpack.c.b16 %v3872, %v3871
      %v4170 = vpack.c.b16 %v3874, %v3873
      %v4171 = vpack.c.b16 %v3876, %v3875
      %v4172 = vpack.c.b16 %v3878, %v3877
      %v4173 = vpack.c.b16 %v3880, %v3879
      %v4174 = vpack.c.b16 %v3882, %v3881
      %v4175 = vpack.c.b16 %v3884, %v3883
      %v4176 = vpack.c.b16 %v3886, %v3885
      %v4177 = vpack.c.b16 %v3888, %v3887
      %v4178 = vpack.c.b16 %v3890, %v3889
      %4467 = vmatprep.subr.bf16.mxu0 0
      %4468 = vmatpush1.bf16.msra.mxu0 %v3891
      %4469 = vmatprep.subr.bf16.mxu0 0
      %4470 = vmatpush1.bf16.msra.mxu0 %v3892
      %4471 = vmatprep.subr.bf16.mxu0 0
      %4472 = vmatpush1.bf16.msra.mxu0 %v3893
      %4473 = vmatprep.subr.bf16.mxu0 0
      %4474 = vmatpush1.bf16.msra.mxu0 %v3894
      %4475 = vmatprep.subr.bf16.mxu0 0
      %4476 = vmatpush1.bf16.msra.mxu0 %v3895
      %4477 = vmatprep.subr.bf16.mxu0 0
      %4478 = vmatpush1.bf16.msra.mxu0 %v3896
      %4479 = vmatprep.subr.bf16.mxu0 0
      %4480 = vmatpush1.bf16.msra.mxu0 %v3897
      %4481 = vmatprep.subr.bf16.mxu0 0
      %4482 = vmatpush1.bf16.msra.mxu0 %v3898
      %4483 = vmatprep.subr.bf16.mxu0 0
      %4484 = vmatpush1.bf16.msra.mxu0 %v3899
      %4485 = vmatprep.subr.bf16.mxu0 0
      %4486 = vmatpush1.bf16.msra.mxu0 %v3900
      %4487 = vmatprep.subr.bf16.mxu0 0
      %4488 = vmatpush1.bf16.msra.mxu0 %v3901
      %4489 = vmatprep.subr.bf16.mxu0 0
      %4490 = vmatpush1.bf16.msra.mxu0 %v3902
      %4491 = vmatprep.subr.bf16.mxu0 0
      %4492 = vmatpush1.bf16.msra.mxu0 %v3903
      %4493 = vmatprep.subr.bf16.mxu0 0
      %4494 = vmatpush1.bf16.msra.mxu0 %v3904
      %4495 = vmatprep.subr.bf16.mxu0 0
      %4496 = vmatpush1.bf16.msra.mxu0 %v3905
      %4497 = vmatprep.subr.bf16.mxu0 0
      %4498 = vmatpush1.bf16.msra.mxu0 %v3906
      %4499 = vmatprep.mubr.bf16.mxu0 %v2128
      %4500 = vmatmul.mubr.bf16.gmra.mrb[0].mxu0 %v2127
      %v4501 = vpop.f32.mrb[0].mxu0
      %v4502 = vadd.f32 0.0, %v4501
      %v4503 = vpop.f32.mrb[0].mxu0
      %v4504 = vpop.f32.mrb[0].mxu0
      %v4505 = vadd.f32 0.0, %v4504
      %v4506 = vpop.f32.mrb[0].mxu0
      %4507 = vdwg.mxu0
      %4508 = vmatprep.subr.bf16.mxu0 0
      %4509 = vmatpush1.bf16.msra.mxu0 %v3907
      %4510 = vmatprep.subr.bf16.mxu0 0
      %4511 = vmatpush1.bf16.msra.mxu0 %v3908
      %4512 = vmatprep.subr.bf16.mxu0 0
      %4513 = vmatpush1.bf16.msra.mxu0 %v3909
      %4514 = vmatprep.subr.bf16.mxu0 0
      %4515 = vmatpush1.bf16.msra.mxu0 %v3910
      %4516 = vmatprep.subr.bf16.mxu0 0
      %4517 = vmatpush1.bf16.msra.mxu0 %v3911
      %4518 = vmatprep.subr.bf16.mxu0 0
      %4519 = vmatpush1.bf16.msra.mxu0 %v3912
      %4520 = vmatprep.subr.bf16.mxu0 0
      %4521 = vmatpush1.bf16.msra.mxu0 %v3913
      %4522 = vmatprep.subr.bf16.mxu0 0
      %4523 = vmatpush1.bf16.msra.mxu0 %v3914
      %4524 = vmatprep.subr.bf16.mxu0 0
      %4525 = vmatpush1.bf16.msra.mxu0 %v3915
      %4526 = vmatprep.subr.bf16.mxu0 0
      %4527 = vmatpush1.bf16.msra.mxu0 %v3916
      %4528 = vmatprep.subr.bf16.mxu0 0
      %4529 = vmatpush1.bf16.msra.mxu0 %v3917
      %4530 = vmatprep.subr.bf16.mxu0 0
      %4531 = vmatpush1.bf16.msra.mxu0 %v3918
      %4532 = vmatprep.subr.bf16.mxu0 0
      %4533 = vmatpush1.bf16.msra.mxu0 %v3919
      %4534 = vmatprep.subr.bf16.mxu0 0
      %4535 = vmatpush1.bf16.msra.mxu0 %v3920
      %4536 = vmatprep.subr.bf16.mxu0 0
      %4537 = vmatpush1.bf16.msra.mxu0 %v3921
      %4538 = vmatprep.subr.bf16.mxu0 0
      %4539 = vmatpush1.bf16.msra.mxu0 %v3922
      %4540 = vmatprep.mubr.bf16.mxu0 %v2130
      %4541 = vmatmul.mubr.bf16.gmra.mrb[0].mxu0 %v2129
      %v4542 = vpop.f32.mrb[0].mxu0
      %v4543 = vadd.f32 %v4502, %v4542
      %v4544 = vpop.f32.mrb[0].mxu0
      %v4545 = vpop.f32.mrb[0].mxu0
      %v4546 = vadd.f32 %v4505, %v4545
      %v4547 = vpop.f32.mrb[0].mxu0
      %4548 = vdwg.mxu0
      %4549 = vmatprep.subr.bf16.mxu0 0
      %4550 = vmatpush1.bf16.msra.mxu0 %v3923
      %4551 = vmatprep.subr.bf16.mxu0 0
      %4552 = vmatpush1.bf16.msra.mxu0 %v3924
      %4553 = vmatprep.subr.bf16.mxu0 0
      %4554 = vmatpush1.bf16.msra.mxu0 %v3925
      %4555 = vmatprep.subr.bf16.mxu0 0
      %4556 = vmatpush1.bf16.msra.mxu0 %v3926
      %4557 = vmatprep.subr.bf16.mxu0 0
      %4558 = vmatpush1.bf16.msra.mxu0 %v3927
      %4559 = vmatprep.subr.bf16.mxu0 0
      %4560 = vmatpush1.bf16.msra.mxu0 %v3928
      %4561 = vmatprep.subr.bf16.mxu0 0
      %4562 = vmatpush1.bf16.msra.mxu0 %v3929
      %4563 = vmatprep.subr.bf16.mxu0 0
      %4564 = vmatpush1.bf16.msra.mxu0 %v3930
      %4565 = vmatprep.subr.bf16.mxu0 0
      %4566 = vmatpush1.bf16.msra.mxu0 %v3931
      %4567 = vmatprep.subr.bf16.mxu0 0
      %4568 = vmatpush1.bf16.msra.mxu0 %v3932
      %4569 = vmatprep.subr.bf16.mxu0 0
      %4570 = vmatpush1.bf16.msra.mxu0 %v3933
      %4571 = vmatprep.subr.bf16.mxu0 0
      %4572 = vmatpush1.bf16.msra.mxu0 %v3934
      %4573 = vmatprep.subr.bf16.mxu0 0
      %4574 = vmatpush1.bf16.msra.mxu0 %v3935
      %4575 = vmatprep.subr.bf16.mxu0 0
      %4576 = vmatpush1.bf16.msra.mxu0 %v3936
      %4577 = vmatprep.subr.bf16.mxu0 0
      %4578 = vmatpush1.bf16.msra.mxu0 %v3937
      %4579 = vmatprep.subr.bf16.mxu0 0
      %4580 = vmatpush1.bf16.msra.mxu0 %v3938
      %4581 = vmatprep.mubr.bf16.mxu0 %v2132
      %4582 = vmatmul.mubr.bf16.gmra.mrb[0].mxu0 %v2131
      %v4583 = vpop.f32.mrb[0].mxu0
      %v4584 = vadd.f32 %v4543, %v4583
      %v4585 = vpop.f32.mrb[0].mxu0
      %v4586 = vpop.f32.mrb[0].mxu0
      %v4587 = vadd.f32 %v4546, %v4586
      %v4588 = vpop.f32.mrb[0].mxu0
      %4589 = vdwg.mxu0
      %4590 = vmatprep.subr.bf16.mxu0 0
      %4591 = vmatpush1.bf16.msra.mxu0 %v3939
      %4592 = vmatprep.subr.bf16.mxu0 0
      %4593 = vmatpush1.bf16.msra.mxu0 %v3940
      %4594 = vmatprep.subr.bf16.mxu0 0
      %4595 = vmatpush1.bf16.msra.mxu0 %v3941
      %4596 = vmatprep.subr.bf16.mxu0 0
      %4597 = vmatpush1.bf16.msra.mxu0 %v3942
      %4598 = vmatprep.subr.bf16.mxu0 0
      %4599 = vmatpush1.bf16.msra.mxu0 %v3943
      %4600 = vmatprep.subr.bf16.mxu0 0
      %4601 = vmatpush1.bf16.msra.mxu0 %v3944
      %4602 = vmatprep.subr.bf16.mxu0 0
      %4603 = vmatpush1.bf16.msra.mxu0 %v3945
      %4604 = vmatprep.subr.bf16.mxu0 0
      %4605 = vmatpush1.bf16.msra.mxu0 %v3946
      %4606 = vmatprep.subr.bf16.mxu0 0
      %4607 = vmatpush1.bf16.msra.mxu0 %v3947
      %4608 = vmatprep.subr.bf16.mxu0 0
      %4609 = vmatpush1.bf16.msra.mxu0 %v3948
      %4610 = vmatprep.subr.bf16.mxu0 0
      %4611 = vmatpush1.bf16.msra.mxu0 %v3949
      %4612 = vmatprep.subr.bf16.mxu0 0
      %4613 = vmatpush1.bf16.msra.mxu0 %v3950
      %4614 = vmatprep.subr.bf16.mxu0 0
      %4615 = vmatpush1.bf16.msra.mxu0 %v3951
      %4616 = vmatprep.subr.bf16.mxu0 0
      %4617 = vmatpush1.bf16.msra.mxu0 %v3952
      %4618 = vmatprep.subr.bf16.mxu0 0
      %4619 = vmatpush1.bf16.msra.mxu0 %v3953
      %4620 = vmatprep.subr.bf16.mxu0 0
      %4621 = vmatpush1.bf16.msra.mxu0 %v3954
      %4622 = vmatprep.mubr.bf16.mxu0 %v2134
      %4623 = vmatmul.mubr.bf16.gmra.mrb[0].mxu0 %v2133
      %v4624 = vpop.f32.mrb[0].mxu0
      %v4625 = vadd.f32 %v4584, %v4624
      %v4626 = vpop.f32.mrb[0].mxu0
      %v4627 = vpop.f32.mrb[0].mxu0
      %v4628 = vadd.f32 %v4587, %v4627
      %v4629 = vpop.f32.mrb[0].mxu0
      %4630 = vdwg.mxu0
      %4631 = vmatprep.subr.bf16.mxu0 0
      %4632 = vmatpush1.bf16.msra.mxu0 %v3955
      %4633 = vmatprep.subr.bf16.mxu0 0
      %4634 = vmatpush1.bf16.msra.mxu0 %v3956
      %4635 = vmatprep.subr.bf16.mxu0 0
      %4636 = vmatpush1.bf16.msra.mxu0 %v3957
      %4637 = vmatprep.subr.bf16.mxu0 0
      %4638 = vmatpush1.bf16.msra.mxu0 %v3958
      %4639 = vmatprep.subr.bf16.mxu0 0
      %4640 = vmatpush1.bf16.msra.mxu0 %v3959
      %4641 = vmatprep.subr.bf16.mxu0 0
      %4642 = vmatpush1.bf16.msra.mxu0 %v3960
      %4643 = vmatprep.subr.bf16.mxu0 0
      %4644 = vmatpush1.bf16.msra.mxu0 %v3961
      %4645 = vmatprep.subr.bf16.mxu0 0
      %4646 = vmatpush1.bf16.msra.mxu0 %v3962
      %4647 = vmatprep.subr.bf16.mxu0 0
      %4648 = vmatpush1.bf16.msra.mxu0 %v3963
      %4649 = vmatprep.subr.bf16.mxu0 0
      %4650 = vmatpush1.bf16.msra.mxu0 %v3964
      %4651 = vmatprep.subr.bf16.mxu0 0
      %4652 = vmatpush1.bf16.msra.mxu0 %v3965
      %4653 = vmatprep.subr.bf16.mxu0 0
      %4654 = vmatpush1.bf16.msra.mxu0 %v3966
      %4655 = vmatprep.subr.bf16.mxu0 0
      %4656 = vmatpush1.bf16.msra.mxu0 %v3967
      %4657 = vmatprep.subr.bf16.mxu0 0
      %4658 = vmatpush1.bf16.msra.mxu0 %v3968
      %4659 = vmatprep.subr.bf16.mxu0 0
      %4660 = vmatpush1.bf16.msra.mxu0 %v3969
      %4661 = vmatprep.subr.bf16.mxu0 0
      %4662 = vmatpush1.bf16.msra.mxu0 %v3970
      %4663 = vmatprep.mubr.bf16.mxu0 %v2136
      %4664 = vmatmul.mubr.bf16.gmra.mrb[0].mxu0 %v2135
      %v4665 = vpop.f32.mrb[0].mxu0
      %v4666 = vadd.f32 %v4625, %v4665
      %v4667 = vpop.f32.mrb[0].mxu0
      %v4668 = vpop.f32.mrb[0].mxu0
      %v4669 = vadd.f32 %v4628, %v4668
      %v4670 = vpop.f32.mrb[0].mxu0
      %4671 = vdwg.mxu0
      %4672 = vmatprep.subr.bf16.mxu0 0
      %4673 = vmatpush1.bf16.msra.mxu0 %v3971
      %4674 = vmatprep.subr.bf16.mxu0 0
      %4675 = vmatpush1.bf16.msra.mxu0 %v3972
      %4676 = vmatprep.subr.bf16.mxu0 0
      %4677 = vmatpush1.bf16.msra.mxu0 %v3973
      %4678 = vmatprep.subr.bf16.mxu0 0
      %4679 = vmatpush1.bf16.msra.mxu0 %v3974
      %4680 = vmatprep.subr.bf16.mxu0 0
      %4681 = vmatpush1.bf16.msra.mxu0 %v3975
      %4682 = vmatprep.subr.bf16.mxu0 0
      %4683 = vmatpush1.bf16.msra.mxu0 %v3976
      %4684 = vmatprep.subr.bf16.mxu0 0
      %4685 = vmatpush1.bf16.msra.mxu0 %v3977
      %4686 = vmatprep.subr.bf16.mxu0 0
      %4687 = vmatpush1.bf16.msra.mxu0 %v3978
      %4688 = vmatprep.subr.bf16.mxu0 0
      %4689 = vmatpush1.bf16.msra.mxu0 %v3979
      %4690 = vmatprep.subr.bf16.mxu0 0
      %4691 = vmatpush1.bf16.msra.mxu0 %v3980
      %4692 = vmatprep.subr.bf16.mxu0 0
      %4693 = vmatpush1.bf16.msra.mxu0 %v3981
      %4694 = vmatprep.subr.bf16.mxu0 0
      %4695 = vmatpush1.bf16.msra.mxu0 %v3982
      %4696 = vmatprep.subr.bf16.mxu0 0
      %4697 = vmatpush1.bf16.msra.mxu0 %v3983
      %4698 = vmatprep.subr.bf16.mxu0 0
      %4699 = vmatpush1.bf16.msra.mxu0 %v3984
      %4700 = vmatprep.subr.bf16.mxu0 0
      %4701 = vmatpush1.bf16.msra.mxu0 %v3985
      %4702 = vmatprep.subr.bf16.mxu0 0
      %4703 = vmatpush1.bf16.msra.mxu0 %v3986
      %4704 = vmatprep.mubr.bf16.mxu0 %v2138
      %4705 = vmatmul.mubr.bf16.gmra.mrb[0].mxu0 %v2137
      %v4706 = vpop.f32.mrb[0].mxu0
      %v4707 = vadd.f32 %v4666, %v4706
      %v4708 = vpop.f32.mrb[0].mxu0
      %v4709 = vpop.f32.mrb[0].mxu0
      %v4710 = vadd.f32 %v4669, %v4709
      %v4711 = vpop.f32.mrb[0].mxu0
      %4712 = vdwg.mxu0
      %4713 = vmatprep.subr.bf16.mxu0 0
      %4714 = vmatpush1.bf16.msra.mxu0 %v3987
      %4715 = vmatprep.subr.bf16.mxu0 0
      %4716 = vmatpush1.bf16.msra.mxu0 %v3988
      %4717 = vmatprep.subr.bf16.mxu0 0
      %4718 = vmatpush1.bf16.msra.mxu0 %v3989
      %4719 = vmatprep.subr.bf16.mxu0 0
      %4720 = vmatpush1.bf16.msra.mxu0 %v3990
      %4721 = vmatprep.subr.bf16.mxu0 0
      %4722 = vmatpush1.bf16.msra.mxu0 %v3991
      %4723 = vmatprep.subr.bf16.mxu0 0
      %4724 = vmatpush1.bf16.msra.mxu0 %v3992
      %4725 = vmatprep.subr.bf16.mxu0 0
      %4726 = vmatpush1.bf16.msra.mxu0 %v3993
      %4727 = vmatprep.subr.bf16.mxu0 0
      %4728 = vmatpush1.bf16.msra.mxu0 %v3994
      %4729 = vmatprep.subr.bf16.mxu0 0
      %4730 = vmatpush1.bf16.msra.mxu0 %v3995
      %4731 = vmatprep.subr.bf16.mxu0 0
      %4732 = vmatpush1.bf16.msra.mxu0 %v3996
      %4733 = vmatprep.subr.bf16.mxu0 0
      %4734 = vmatpush1.bf16.msra.mxu0 %v3997
      %4735 = vmatprep.subr.bf16.mxu0 0
      %4736 = vmatpush1.bf16.msra.mxu0 %v3998
      %4737 = vmatprep.subr.bf16.mxu0 0
      %4738 = vmatpush1.bf16.msra.mxu0 %v3999
      %4739 = vmatprep.subr.bf16.mxu0 0
      %4740 = vmatpush1.bf16.msra.mxu0 %v4000
      %4741 = vmatprep.subr.bf16.mxu0 0
      %4742 = vmatpush1.bf16.msra.mxu0 %v4001
      %4743 = vmatprep.subr.bf16.mxu0 0
      %4744 = vmatpush1.bf16.msra.mxu0 %v4002
      %4745 = vmatprep.mubr.bf16.mxu0 %v2140
      %4746 = vmatmul.mubr.bf16.gmra.mrb[0].mxu0 %v2139
      %v4747 = vpop.f32.mrb[0].mxu0
      %v4748 = vadd.f32 %v4707, %v4747
      %v4749 = vpop.f32.mrb[0].mxu0
      %v4750 = vpop.f32.mrb[0].mxu0
      %v4751 = vadd.f32 %v4710, %v4750
      %v4752 = vpop.f32.mrb[0].mxu0
      %4753 = vdwg.mxu0
      %4754 = vmatprep.subr.bf16.mxu0 0
      %4755 = vmatpush1.bf16.msra.mxu0 %v4003
      %4756 = vmatprep.subr.bf16.mxu0 0
      %4757 = vmatpush1.bf16.msra.mxu0 %v4004
      %4758 = vmatprep.subr.bf16.mxu0 0
      %4759 = vmatpush1.bf16.msra.mxu0 %v4005
      %4760 = vmatprep.subr.bf16.mxu0 0
      %4761 = vmatpush1.bf16.msra.mxu0 %v4006
      %4762 = vmatprep.subr.bf16.mxu0 0
      %4763 = vmatpush1.bf16.msra.mxu0 %v4007
      %4764 = vmatprep.subr.bf16.mxu0 0
      %4765 = vmatpush1.bf16.msra.mxu0 %v4008
      %4766 = vmatprep.subr.bf16.mxu0 0
      %4767 = vmatpush1.bf16.msra.mxu0 %v4009
      %4768 = vmatprep.subr.bf16.mxu0 0
      %4769 = vmatpush1.bf16.msra.mxu0 %v4010
      %4770 = vmatprep.subr.bf16.mxu0 0
      %4771 = vmatpush1.bf16.msra.mxu0 %v4011
      %4772 = vmatprep.subr.bf16.mxu0 0
      %4773 = vmatpush1.bf16.msra.mxu0 %v4012
      %4774 = vmatprep.subr.bf16.mxu0 0
      %4775 = vmatpush1.bf16.msra.mxu0 %v4013
      %4776 = vmatprep.subr.bf16.mxu0 0
      %4777 = vmatpush1.bf16.msra.mxu0 %v4014
      %4778 = vmatprep.subr.bf16.mxu0 0
      %4779 = vmatpush1.bf16.msra.mxu0 %v4015
      %4780 = vmatprep.subr.bf16.mxu0 0
      %4781 = vmatpush1.bf16.msra.mxu0 %v4016
      %4782 = vmatprep.subr.bf16.mxu0 0
      %4783 = vmatpush1.bf16.msra.mxu0 %v4017
      %4784 = vmatprep.subr.bf16.mxu0 0
      %4785 = vmatpush1.bf16.msra.mxu0 %v4018
      %4786 = vmatprep.mubr.bf16.mxu0 %v2142
      %4787 = vmatmul.mubr.bf16.gmra.mrb[0].mxu0 %v2141
      %v4788 = vpop.f32.mrb[0].mxu0
      %v4789 = vadd.f32 %v4748, %v4788
      %v4790 = vpop.f32.mrb[0].mxu0
      %v4791 = vpop.f32.mrb[0].mxu0
      %v4792 = vadd.f32 %v4751, %v4791
      %v4793 = vpop.f32.mrb[0].mxu0
      %4794 = vdwg.mxu0
      %4795 = vmatprep.subr.bf16.mxu0 0
      %4796 = vmatpush1.bf16.msra.mxu0 %v4019
      %4797 = vmatprep.subr.bf16.mxu0 0
      %4798 = vmatpush1.bf16.msra.mxu0 %v4020
      %4799 = vmatprep.subr.bf16.mxu0 0
      %4800 = vmatpush1.bf16.msra.mxu0 %v4021
      %4801 = vmatprep.subr.bf16.mxu0 0
      %4802 = vmatpush1.bf16.msra.mxu0 %v4022
      %4803 = vmatprep.subr.bf16.mxu0 0
      %4804 = vmatpush1.bf16.msra.mxu0 %v4023
      %4805 = vmatprep.subr.bf16.mxu0 0
      %4806 = vmatpush1.bf16.msra.mxu0 %v4024
      %4807 = vmatprep.subr.bf16.mxu0 0
      %4808 = vmatpush1.bf16.msra.mxu0 %v4025
      %4809 = vmatprep.subr.bf16.mxu0 0
      %4810 = vmatpush1.bf16.msra.mxu0 %v4026
      %4811 = vmatprep.subr.bf16.mxu0 0
      %4812 = vmatpush1.bf16.msra.mxu0 %v4027
      %4813 = vmatprep.subr.bf16.mxu0 0
      %4814 = vmatpush1.bf16.msra.mxu0 %v4028
      %4815 = vmatprep.subr.bf16.mxu0 0
      %4816 = vmatpush1.bf16.msra.mxu0 %v4029
      %4817 = vmatprep.subr.bf16.mxu0 0
      %4818 = vmatpush1.bf16.msra.mxu0 %v4030
      %4819 = vmatprep.subr.bf16.mxu0 0
      %4820 = vmatpush1.bf16.msra.mxu0 %v4031
      %4821 = vmatprep.subr.bf16.mxu0 0
      %4822 = vmatpush1.bf16.msra.mxu0 %v4032
      %4823 = vmatprep.subr.bf16.mxu0 0
      %4824 = vmatpush1.bf16.msra.mxu0 %v4033
      %4825 = vmatprep.subr.bf16.mxu0 0
      %4826 = vmatpush1.bf16.msra.mxu0 %v4034
      %4827 = vmatprep.mubr.bf16.mxu0 %v2144
      %4828 = vmatmul.mubr.bf16.gmra.mrb[0].mxu0 %v2143
      %v4829 = vpop.f32.mrb[0].mxu0
      %v4830 = vadd.f32 %v4789, %v4829
      %v4831 = vpop.f32.mrb[0].mxu0
      %v4832 = vpop.f32.mrb[0].mxu0
      %v4833 = vadd.f32 %v4792, %v4832
      %v4834 = vpop.f32.mrb[0].mxu0
      %4835 = vdwg.mxu0
      %4836 = vmatprep.subr.bf16.mxu0 0
      %4837 = vmatpush1.bf16.msra.mxu0 %v4035
      %4838 = vmatprep.subr.bf16.mxu0 0
      %4839 = vmatpush1.bf16.msra.mxu0 %v4036
      %4840 = vmatprep.subr.bf16.mxu0 0
      %4841 = vmatpush1.bf16.msra.mxu0 %v4037
      %4842 = vmatprep.subr.bf16.mxu0 0
      %4843 = vmatpush1.bf16.msra.mxu0 %v4038
      %4844 = vmatprep.subr.bf16.mxu0 0
      %4845 = vmatpush1.bf16.msra.mxu0 %v4039
      %4846 = vmatprep.subr.bf16.mxu0 0
      %4847 = vmatpush1.bf16.msra.mxu0 %v4040
      %4848 = vmatprep.subr.bf16.mxu0 0
      %4849 = vmatpush1.bf16.msra.mxu0 %v4041
      %4850 = vmatprep.subr.bf16.mxu0 0
      %4851 = vmatpush1.bf16.msra.mxu0 %v4042
      %4852 = vmatprep.subr.bf16.mxu0 0
      %4853 = vmatpush1.bf16.msra.mxu0 %v4043
      %4854 = vmatprep.subr.bf16.mxu0 0
      %4855 = vmatpush1.bf16.msra.mxu0 %v4044
      %4856 = vmatprep.subr.bf16.mxu0 0
      %4857 = vmatpush1.bf16.msra.mxu0 %v4045
      %4858 = vmatprep.subr.bf16.mxu0 0
      %4859 = vmatpush1.bf16.msra.mxu0 %v4046
      %4860 = vmatprep.subr.bf16.mxu0 0
      %4861 = vmatpush1.bf16.msra.mxu0 %v4047
      %4862 = vmatprep.subr.bf16.mxu0 0
      %4863 = vmatpush1.bf16.msra.mxu0 %v4048
      %4864 = vmatprep.subr.bf16.mxu0 0
      %4865 = vmatpush1.bf16.msra.mxu0 %v4049
      %4866 = vmatprep.subr.bf16.mxu0 0
      %4867 = vmatpush1.bf16.msra.mxu0 %v4050
      %4868 = vmatprep.mubr.bf16.mxu0 %v2146
      %4869 = vmatmul.mubr.bf16.gmra.mrb[0].mxu0 %v2145
      %v4870 = vpop.f32.mrb[0].mxu0
      %v4871 = vadd.f32 %v4830, %v4870
      %v4872 = vpop.f32.mrb[0].mxu0
      %v4873 = vpop.f32.mrb[0].mxu0
      %v4874 = vadd.f32 %v4833, %v4873
      %v4875 = vpop.f32.mrb[0].mxu0
      %4876 = vdwg.mxu0
      %4877 = vmatprep.subr.bf16.mxu0 0
      %4878 = vmatpush1.bf16.msra.mxu0 %v4051
      %4879 = vmatprep.subr.bf16.mxu0 0
      %4880 = vmatpush1.bf16.msra.mxu0 %v4052
      %4881 = vmatprep.subr.bf16.mxu0 0
      %4882 = vmatpush1.bf16.msra.mxu0 %v4053
      %4883 = vmatprep.subr.bf16.mxu0 0
      %4884 = vmatpush1.bf16.msra.mxu0 %v4054
      %4885 = vmatprep.subr.bf16.mxu0 0
      %4886 = vmatpush1.bf16.msra.mxu0 %v4055
      %4887 = vmatprep.subr.bf16.mxu0 0
      %4888 = vmatpush1.bf16.msra.mxu0 %v4056
      %4889 = vmatprep.subr.bf16.mxu0 0
      %4890 = vmatpush1.bf16.msra.mxu0 %v4057
      %4891 = vmatprep.subr.bf16.mxu0 0
      %4892 = vmatpush1.bf16.msra.mxu0 %v4058
      %4893 = vmatprep.subr.bf16.mxu0 0
      %4894 = vmatpush1.bf16.msra.mxu0 %v4059
      %4895 = vmatprep.subr.bf16.mxu0 0
      %4896 = vmatpush1.bf16.msra.mxu0 %v4060
      %4897 = vmatprep.subr.bf16.mxu0 0
      %4898 = vmatpush1.bf16.msra.mxu0 %v4061
      %4899 = vmatprep.subr.bf16.mxu0 0
      %4900 = vmatpush1.bf16.msra.mxu0 %v4062
      %4901 = vmatprep.subr.bf16.mxu0 0
      %4902 = vmatpush1.bf16.msra.mxu0 %v4063
      %4903 = vmatprep.subr.bf16.mxu0 0
      %4904 = vmatpush1.bf16.msra.mxu0 %v4064
      %4905 = vmatprep.subr.bf16.mxu0 0
      %4906 = vmatpush1.bf16.msra.mxu0 %v4065
      %4907 = vmatprep.subr.bf16.mxu0 0
      %4908 = vmatpush1.bf16.msra.mxu0 %v4066
      %4909 = vmatprep.mubr.bf16.mxu0 %v2148
      %4910 = vmatmul.mubr.bf16.gmra.mrb[0].mxu0 %v2147
      %v4911 = vpop.f32.mrb[0].mxu0
      %v4912 = vadd.f32 %v4871, %v4911
      %v4913 = vpop.f32.mrb[0].mxu0
      %v4914 = vpop.f32.mrb[0].mxu0
      %v4915 = vadd.f32 %v4874, %v4914
      %v4916 = vpop.f32.mrb[0].mxu0
      %4917 = vdwg.mxu0
      %4918 = vmatprep.subr.bf16.mxu0 0
      %4919 = vmatpush1.bf16.msra.mxu0 %v4067
      %4920 = vmatprep.subr.bf16.mxu0 0
      %4921 = vmatpush1.bf16.msra.mxu0 %v4068
      %4922 = vmatprep.subr.bf16.mxu0 0
      %4923 = vmatpush1.bf16.msra.mxu0 %v4069
      %4924 = vmatprep.subr.bf16.mxu0 0
      %4925 = vmatpush1.bf16.msra.mxu0 %v4070
      %4926 = vmatprep.subr.bf16.mxu0 0
      %4927 = vmatpush1.bf16.msra.mxu0 %v4071
      %4928 = vmatprep.subr.bf16.mxu0 0
      %4929 = vmatpush1.bf16.msra.mxu0 %v4072
      %4930 = vmatprep.subr.bf16.mxu0 0
      %4931 = vmatpush1.bf16.msra.mxu0 %v4073
      %4932 = vmatprep.subr.bf16.mxu0 0
      %4933 = vmatpush1.bf16.msra.mxu0 %v4074
      %4934 = vmatprep.subr.bf16.mxu0 0
      %4935 = vmatpush1.bf16.msra.mxu0 %v4075
      %4936 = vmatprep.subr.bf16.mxu0 0
      %4937 = vmatpush1.bf16.msra.mxu0 %v4076
      %4938 = vmatprep.subr.bf16.mxu0 0
      %4939 = vmatpush1.bf16.msra.mxu0 %v4077
      %4940 = vmatprep.subr.bf16.mxu0 0
      %4941 = vmatpush1.bf16.msra.mxu0 %v4078
      %4942 = vmatprep.subr.bf16.mxu0 0
      %4943 = vmatpush1.bf16.msra.mxu0 %v4079
      %4944 = vmatprep.subr.bf16.mxu0 0
      %4945 = vmatpush1.bf16.msra.mxu0 %v4080
      %4946 = vmatprep.subr.bf16.mxu0 0
      %4947 = vmatpush1.bf16.msra.mxu0 %v4081
      %4948 = vmatprep.subr.bf16.mxu0 0
      %4949 = vmatpush1.bf16.msra.mxu0 %v4082
      %4950 = vmatprep.mubr.bf16.mxu0 %v2150
      %4951 = vmatmul.mubr.bf16.gmra.mrb[0].mxu0 %v2149
      %v4952 = vpop.f32.mrb[0].mxu0
      %v4953 = vadd.f32 %v4912, %v4952
      %v4954 = vpop.f32.mrb[0].mxu0
      %v4955 = vpop.f32.mrb[0].mxu0
      %v4956 = vadd.f32 %v4915, %v4955
      %v4957 = vpop.f32.mrb[0].mxu0
      %4958 = vdwg.mxu0
      %4959 = vmatprep.subr.bf16.mxu0 0
      %4960 = vmatpush1.bf16.msra.mxu0 %v4083
      %4961 = vmatprep.subr.bf16.mxu0 0
      %4962 = vmatpush1.bf16.msra.mxu0 %v4084
      %4963 = vmatprep.subr.bf16.mxu0 0
      %4964 = vmatpush1.bf16.msra.mxu0 %v4085
      %4965 = vmatprep.subr.bf16.mxu0 0
      %4966 = vmatpush1.bf16.msra.mxu0 %v4086
      %4967 = vmatprep.subr.bf16.mxu0 0
      %4968 = vmatpush1.bf16.msra.mxu0 %v4087
      %4969 = vmatprep.subr.bf16.mxu0 0
      %4970 = vmatpush1.bf16.msra.mxu0 %v4088
      %4971 = vmatprep.subr.bf16.mxu0 0
      %4972 = vmatpush1.bf16.msra.mxu0 %v4089
      %4973 = vmatprep.subr.bf16.mxu0 0
      %4974 = vmatpush1.bf16.msra.mxu0 %v4090
      %4975 = vmatprep.subr.bf16.mxu0 0
      %4976 = vmatpush1.bf16.msra.mxu0 %v4091
      %4977 = vmatprep.subr.bf16.mxu0 0
      %4978 = vmatpush1.bf16.msra.mxu0 %v4092
      %4979 = vmatprep.subr.bf16.mxu0 0
      %4980 = vmatpush1.bf16.msra.mxu0 %v4093
      %4981 = vmatprep.subr.bf16.mxu0 0
      %4982 = vmatpush1.bf16.msra.mxu0 %v4094
      %4983 = vmatprep.subr.bf16.mxu0 0
      %4984 = vmatpush1.bf16.msra.mxu0 %v4095
      %4985 = vmatprep.subr.bf16.mxu0 0
      %4986 = vmatpush1.bf16.msra.mxu0 %v4096
      %4987 = vmatprep.subr.bf16.mxu0 0
      %4988 = vmatpush1.bf16.msra.mxu0 %v4097
      %4989 = vmatprep.subr.bf16.mxu0 0
      %4990 = vmatpush1.bf16.msra.mxu0 %v4098
      %4991 = vmatprep.mubr.bf16.mxu0 %v2152
      %4992 = vmatmul.mubr.bf16.gmra.mrb[0].mxu0 %v2151
      %v4993 = vpop.f32.mrb[0].mxu0
      %v4994 = vadd.f32 %v4953, %v4993
      %v4995 = vpop.f32.mrb[0].mxu0
      %v4996 = vpop.f32.mrb[0].mxu0
      %v4997 = vadd.f32 %v4956, %v4996
      %v4998 = vpop.f32.mrb[0].mxu0
      %4999 = vdwg.mxu0
      %5000 = vmatprep.subr.bf16.mxu0 0
      %5001 = vmatpush1.bf16.msra.mxu0 %v4099
      %5002 = vmatprep.subr.bf16.mxu0 0
      %5003 = vmatpush1.bf16.msra.mxu0 %v4100
      %5004 = vmatprep.subr.bf16.mxu0 0
      %5005 = vmatpush1.bf16.msra.mxu0 %v4101
      %5006 = vmatprep.subr.bf16.mxu0 0
      %5007 = vmatpush1.bf16.msra.mxu0 %v4102
      %5008 = vmatprep.subr.bf16.mxu0 0
      %5009 = vmatpush1.bf16.msra.mxu0 %v4103
      %5010 = vmatprep.subr.bf16.mxu0 0
      %5011 = vmatpush1.bf16.msra.mxu0 %v4104
      %5012 = vmatprep.subr.bf16.mxu0 0
      %5013 = vmatpush1.bf16.msra.mxu0 %v4105
      %5014 = vmatprep.subr.bf16.mxu0 0
      %5015 = vmatpush1.bf16.msra.mxu0 %v4106
      %5016 = vmatprep.subr.bf16.mxu0 0
      %5017 = vmatpush1.bf16.msra.mxu0 %v4107
      %5018 = vmatprep.subr.bf16.mxu0 0
      %5019 = vmatpush1.bf16.msra.mxu0 %v4108
      %5020 = vmatprep.subr.bf16.mxu0 0
      %5021 = vmatpush1.bf16.msra.mxu0 %v4109
      %5022 = vmatprep.subr.bf16.mxu0 0
      %5023 = vmatpush1.bf16.msra.mxu0 %v4110
      %5024 = vmatprep.subr.bf16.mxu0 0
      %5025 = vmatpush1.bf16.msra.mxu0 %v4111
      %5026 = vmatprep.subr.bf16.mxu0 0
      %5027 = vmatpush1.bf16.msra.mxu0 %v4112
      %5028 = vmatprep.subr.bf16.mxu0 0
      %5029 = vmatpush1.bf16.msra.mxu0 %v4113
      %5030 = vmatprep.subr.bf16.mxu0 0
      %5031 = vmatpush1.bf16.msra.mxu0 %v4114
      %5032 = vmatprep.mubr.bf16.mxu0 %v2154
      %5033 = vmatmul.mubr.bf16.gmra.mrb[0].mxu0 %v2153
      %v5034 = vpop.f32.mrb[0].mxu0
      %v5035 = vadd.f32 %v4994, %v5034
      %v5036 = vpop.f32.mrb[0].mxu0
      %v5037 = vpop.f32.mrb[0].mxu0
      %v5038 = vadd.f32 %v4997, %v5037
      %v5039 = vpop.f32.mrb[0].mxu0
      %5040 = vdwg.mxu0
      %5041 = vmatprep.subr.bf16.mxu0 0
      %5042 = vmatpush1.bf16.msra.mxu0 %v4115
      %5043 = vmatprep.subr.bf16.mxu0 0
      %5044 = vmatpush1.bf16.msra.mxu0 %v4116
      %5045 = vmatprep.subr.bf16.mxu0 0
      %5046 = vmatpush1.bf16.msra.mxu0 %v4117
      %5047 = vmatprep.subr.bf16.mxu0 0
      %5048 = vmatpush1.bf16.msra.mxu0 %v4118
      %5049 = vmatprep.subr.bf16.mxu0 0
      %5050 = vmatpush1.bf16.msra.mxu0 %v4119
      %5051 = vmatprep.subr.bf16.mxu0 0
      %5052 = vmatpush1.bf16.msra.mxu0 %v4120
      %5053 = vmatprep.subr.bf16.mxu0 0
      %5054 = vmatpush1.bf16.msra.mxu0 %v4121
      %5055 = vmatprep.subr.bf16.mxu0 0
      %5056 = vmatpush1.bf16.msra.mxu0 %v4122
      %5057 = vmatprep.subr.bf16.mxu0 0
      %5058 = vmatpush1.bf16.msra.mxu0 %v4123
      %5059 = vmatprep.subr.bf16.mxu0 0
      %5060 = vmatpush1.bf16.msra.mxu0 %v4124
      %5061 = vmatprep.subr.bf16.mxu0 0
      %5062 = vmatpush1.bf16.msra.mxu0 %v4125
      %5063 = vmatprep.subr.bf16.mxu0 0
      %5064 = vmatpush1.bf16.msra.mxu0 %v4126
      %5065 = vmatprep.subr.bf16.mxu0 0
      %5066 = vmatpush1.bf16.msra.mxu0 %v4127
      %5067 = vmatprep.subr.bf16.mxu0 0
      %5068 = vmatpush1.bf16.msra.mxu0 %v4128
      %5069 = vmatprep.subr.bf16.mxu0 0
      %5070 = vmatpush1.bf16.msra.mxu0 %v4129
      %5071 = vmatprep.subr.bf16.mxu0 0
      %5072 = vmatpush1.bf16.msra.mxu0 %v4130
      %5073 = vmatprep.mubr.bf16.mxu0 %v2156
      %5074 = vmatmul.mubr.bf16.gmra.mrb[0].mxu0 %v2155
      %v5075 = vpop.f32.mrb[0].mxu0
      %v5076 = vadd.f32 %v5035, %v5075
      %v5077 = vpop.f32.mrb[0].mxu0
      %v5078 = vpop.f32.mrb[0].mxu0
      %v5079 = vadd.f32 %v5038, %v5078
      %v5080 = vpop.f32.mrb[0].mxu0
      %5081 = vdwg.mxu0
      %5082 = vmatprep.subr.bf16.mxu0 0
      %5083 = vmatpush1.bf16.msra.mxu0 %v4131
      %5084 = vmatprep.subr.bf16.mxu0 0
      %5085 = vmatpush1.bf16.msra.mxu0 %v4132
      %5086 = vmatprep.subr.bf16.mxu0 0
      %5087 = vmatpush1.bf16.msra.mxu0 %v4133
      %5088 = vmatprep.subr.bf16.mxu0 0
      %5089 = vmatpush1.bf16.msra.mxu0 %v4134
      %5090 = vmatprep.subr.bf16.mxu0 0
      %5091 = vmatpush1.bf16.msra.mxu0 %v4135
      %5092 = vmatprep.subr.bf16.mxu0 0
      %5093 = vmatpush1.bf16.msra.mxu0 %v4136
      %5094 = vmatprep.subr.bf16.mxu0 0
      %5095 = vmatpush1.bf16.msra.mxu0 %v4137
      %5096 = vmatprep.subr.bf16.mxu0 0
      %5097 = vmatpush1.bf16.msra.mxu0 %v4138
      %5098 = vmatprep.subr.bf16.mxu0 0
      %5099 = vmatpush1.bf16.msra.mxu0 %v4139
      %5100 = vmatprep.subr.bf16.mxu0 0
      %5101 = vmatpush1.bf16.msra.mxu0 %v4140
      %5102 = vmatprep.subr.bf16.mxu0 0
      %5103 = vmatpush1.bf16.msra.mxu0 %v4141
      %5104 = vmatprep.subr.bf16.mxu0 0
      %5105 = vmatpush1.bf16.msra.mxu0 %v4142
      %5106 = vmatprep.subr.bf16.mxu0 0
      %5107 = vmatpush1.bf16.msra.mxu0 %v4143
      %5108 = vmatprep.subr.bf16.mxu0 0
      %5109 = vmatpush1.bf16.msra.mxu0 %v4144
      %5110 = vmatprep.subr.bf16.mxu0 0
      %5111 = vmatpush1.bf16.msra.mxu0 %v4145
      %5112 = vmatprep.subr.bf16.mxu0 0
      %5113 = vmatpush1.bf16.msra.mxu0 %v4146
      %5114 = vmatprep.mubr.bf16.mxu0 %v2158
      %5115 = vmatmul.mubr.bf16.gmra.mrb[0].mxu0 %v2157
      %v5116 = vpop.f32.mrb[0].mxu0
      %v5117 = vadd.f32 %v5076, %v5116
      %v5118 = vpop.f32.mrb[0].mxu0
      %v5119 = vpop.f32.mrb[0].mxu0
      %v5120 = vadd.f32 %v5079, %v5119
      %v5121 = vpop.f32.mrb[0].mxu0
      %5122 = vdwg.mxu0
      %5123 = vmatprep.subr.bf16.mxu0 0
      %5124 = vmatpush1.bf16.msra.mxu0 %v4147
      %5125 = vmatprep.subr.bf16.mxu0 0
      %5126 = vmatpush1.bf16.msra.mxu0 %v4148
      %5127 = vmatprep.subr.bf16.mxu0 0
      %5128 = vmatpush1.bf16.msra.mxu0 %v4149
      %5129 = vmatprep.subr.bf16.mxu0 0
      %5130 = vmatpush1.bf16.msra.mxu0 %v4150
      %5131 = vmatprep.subr.bf16.mxu0 0
      %5132 = vmatpush1.bf16.msra.mxu0 %v4151
      %5133 = vmatprep.subr.bf16.mxu0 0
      %5134 = vmatpush1.bf16.msra.mxu0 %v4152
      %5135 = vmatprep.subr.bf16.mxu0 0
      %5136 = vmatpush1.bf16.msra.mxu0 %v4153
      %5137 = vmatprep.subr.bf16.mxu0 0
      %5138 = vmatpush1.bf16.msra.mxu0 %v4154
      %5139 = vmatprep.subr.bf16.mxu0 0
      %5140 = vmatpush1.bf16.msra.mxu0 %v4155
      %5141 = vmatprep.subr.bf16.mxu0 0
      %5142 = vmatpush1.bf16.msra.mxu0 %v4156
      %5143 = vmatprep.subr.bf16.mxu0 0
      %5144 = vmatpush1.bf16.msra.mxu0 %v4157
      %5145 = vmatprep.subr.bf16.mxu0 0
      %5146 = vmatpush1.bf16.msra.mxu0 %v4158
      %5147 = vmatprep.subr.bf16.mxu0 0
      %5148 = vmatpush1.bf16.msra.mxu0 %v4159
      %5149 = vmatprep.subr.bf16.mxu0 0
      %5150 = vmatpush1.bf16.msra.mxu0 %v4160
      %5151 = vmatprep.subr.bf16.mxu0 0
      %5152 = vmatpush1.bf16.msra.mxu0 %v4161
      %5153 = vmatprep.subr.bf16.mxu0 0
      %5154 = vmatpush1.bf16.msra.mxu0 %v4162
      %5155 = vmatprep.mubr.bf16.mxu0 %v2160
      %5156 = vmatmul.mubr.bf16.gmra.mrb[0].mxu0 %v2159
      %v5157 = vpop.f32.mrb[0].mxu0
      %v5158 = vadd.f32 %v5117, %v5157
      %v5159 = vpop.f32.mrb[0].mxu0
      %v5160 = vpop.f32.mrb[0].mxu0
      %v5161 = vadd.f32 %v5120, %v5160
      %v5162 = vpop.f32.mrb[0].mxu0
      %5163 = vdwg.mxu0
      %5164 = vmatprep.subr.bf16.mxu0 0
      %5165 = vmatpush1.bf16.msra.mxu0 %v4163
      %5166 = vmatprep.subr.bf16.mxu0 0
      %5167 = vmatpush1.bf16.msra.mxu0 %v4164
      %5168 = vmatprep.subr.bf16.mxu0 0
      %5169 = vmatpush1.bf16.msra.mxu0 %v4165
      %5170 = vmatprep.subr.bf16.mxu0 0
      %5171 = vmatpush1.bf16.msra.mxu0 %v4166
      %5172 = vmatprep.subr.bf16.mxu0 0
      %5173 = vmatpush1.bf16.msra.mxu0 %v4167
      %5174 = vmatprep.subr.bf16.mxu0 0
      %5175 = vmatpush1.bf16.msra.mxu0 %v4168
      %5176 = vmatprep.subr.bf16.mxu0 0
      %5177 = vmatpush1.bf16.msra.mxu0 %v4169
      %5178 = vmatprep.subr.bf16.mxu0 0
      %5179 = vmatpush1.bf16.msra.mxu0 %v4170
      %5180 = vmatprep.subr.bf16.mxu0 0
      %5181 = vmatpush1.bf16.msra.mxu0 %v4171
      %5182 = vmatprep.subr.bf16.mxu0 0
      %5183 = vmatpush1.bf16.msra.mxu0 %v4172
      %5184 = vmatprep.subr.bf16.mxu0 0
      %5185 = vmatpush1.bf16.msra.mxu0 %v4173
      %5186 = vmatprep.subr.bf16.mxu0 0
      %5187 = vmatpush1.bf16.msra.mxu0 %v4174
      %5188 = vmatprep.subr.bf16.mxu0 0
      %5189 = vmatpush1.bf16.msra.mxu0 %v4175
      %5190 = vmatprep.subr.bf16.mxu0 0
      %5191 = vmatpush1.bf16.msra.mxu0 %v4176
      %5192 = vmatprep.subr.bf16.mxu0 0
      %5193 = vmatpush1.bf16.msra.mxu0 %v4177
      %5194 = vmatprep.subr.bf16.mxu0 0
      %5195 = vmatpush1.bf16.msra.mxu0 %v4178
      %5196 = vmatprep.mubr.bf16.mxu0 %v2162
      %5197 = vmatmul.mubr.bf16.gmra.mrb[0].mxu0 %v2161
      %v5198 = vpop.f32.mrb[0].mxu0
      %v5199 = vadd.f32 %v5158, %v5198
      %v5200 = vpop.f32.mrb[0].mxu0
      %v5201 = vpop.f32.mrb[0].mxu0
      %v5202 = vadd.f32 %v5161, %v5201
      %v5203 = vpop.f32.mrb[0].mxu0
      %5204 = vdwg.mxu0
      %5205 = vrot.lane.b32.xlu0 %v5199, 64
      %v5206 = vpop.permute.xlu0 %5205
      %5207 = vrot.lane.b32.xlu0 %v5202, 64
      %v5208 = vpop.permute.xlu0 %5207
      %v5209 = vmax.f32 %v5199, %v5206
      %v5210 = vmax.f32 %v5202, %v5208
      %5211 = vrot.lane.b32.xlu0 %v5209, 32
      %v5212 = vpop.permute.xlu0 %5211
      %5213 = vrot.lane.b32.xlu0 %v5210, 32
      %v5214 = vpop.permute.xlu0 %5213
      %v5215 = vmax.f32 %v5209, %v5212
      %v5216 = vmax.f32 %v5210, %v5214
      %v5217 = vld [vmem:[%s5] sm:$0x1]
      %v5219 = vlaneseq
      %v5220 = vshrl.u32 %v5219, 7
      %v5221 = vsub.s32 0, %v5220
      %v5222 = vrot.slane %v5217, %v5221
      %v5224 = vmul.f32 %v5215, %v5222
      %v5225 = vmul.f32 %v5216, %v5222
      %v5226 = vld [vmem:[%s6] sm:$0x1]
      %v5228 = vlaneseq
      %v5229 = vshrl.u32 %v5228, 7
      %v5230 = vsub.s32 0, %v5229
      %v5231 = vrot.slane %v5226, %v5230
      %v5233 = vadd.f32 %v5224, %v5231
      %v5234 = vadd.f32 %v5225, %v5231
      %vm5235 = vcmp.gt.f32.partialorder %v5233, 0.0
      %vm5236 = vcmp.gt.f32.partialorder %v5234, 0.0
      %v5237 = vmin.f32 %v5233, 0.0
      %v5238 = vmin.f32 %v5234, 0.0
      %v5239 = vmul.f32 %v5237, 1.442695
      %v5240 = vpow.pop %v5239
      %v5241 = vmul.f32 %v5238, 1.442695
      %v5242 = vpow.pop %v5241
      %v5243 = vsub.f32 %v5240, 1.0
      %v5244 = vsub.f32 %v5242, 1.0
      %v5245 = vsel %vm5235, %v5233, %v5243
      %v5246 = vsel %vm5236, %v5234, %v5244
      %v5247 = vld [vmem:[%s7] sm:$0xff]
      %v5248 = vld [vmem:[%s7 + $0x8] sm:$0xff]
      %v5249 = vld [vmem:[%s7 + $0x10] sm:$0xff]
      %v5250 = vld [vmem:[%s7 + $0x18] sm:$0xff]
      %v5251 = vld [vmem:[%s7 + $0x20] sm:$0xff]
      %v5252 = vld [vmem:[%s7 + $0x28] sm:$0xff]
      %v5253 = vld [vmem:[%s7 + $0x30] sm:$0xff]
      %v5254 = vld [vmem:[%s7 + $0x38] sm:$0xff]
      %v5255 = vld [vmem:[%s7 + $0x40] sm:$0xff]
      %v5256 = vld [vmem:[%s7 + $0x48] sm:$0xff]
      %v5257 = vld [vmem:[%s7 + $0x50] sm:$0xff]
      %v5258 = vld [vmem:[%s7 + $0x58] sm:$0xff]
      %v5259 = vld [vmem:[%s7 + $0x60] sm:$0xff]
      %v5260 = vld [vmem:[%s7 + $0x68] sm:$0xff]
      %v5261 = vld [vmem:[%s7 + $0x70] sm:$0xff]
      %v5262 = vld [vmem:[%s7 + $0x78] sm:$0xff]
      %v5263 = vld [vmem:[%s8] sm:$0x1]
      %v5265 = vlaneseq
      %v5266 = vshrl.u32 %v5265, 7
      %v5267 = vsub.s32 0, %v5266
      %v5268 = vrot.slane %v5263, %v5267
      %5270 = vmatprep.subr.mxu0 0.0
      %5271 = vmatpush1.msra.mxu0 %v5247
      %5272 = vmatprep.subr.mxu0 0.0
      %5273 = vmatpush1.msra.mxu0 %v5248
      %5274 = vmatprep.subr.mxu0 0.0
      %5275 = vmatpush1.msra.mxu0 %v5249
      %5276 = vmatprep.subr.mxu0 0.0
      %5277 = vmatpush1.msra.mxu0 %v5250
      %5278 = vmatprep.subr.mxu0 0.0
      %5279 = vmatpush1.msra.mxu0 %v5251
      %5280 = vmatprep.subr.mxu0 0.0
      %5281 = vmatpush1.msra.mxu0 %v5252
      %5282 = vmatprep.subr.mxu0 0.0
      %5283 = vmatpush1.msra.mxu0 %v5253
      %5284 = vmatprep.subr.mxu0 0.0
      %5285 = vmatpush1.msra.mxu0 %v5254
      %5286 = vmatprep.subr.mxu0 0.0
      %5287 = vmatpush1.msra.mxu0 %v5255
      %5288 = vmatprep.subr.mxu0 0.0
      %5289 = vmatpush1.msra.mxu0 %v5256
      %5290 = vmatprep.subr.mxu0 0.0
      %5291 = vmatpush1.msra.mxu0 %v5257
      %5292 = vmatprep.subr.mxu0 0.0
      %5293 = vmatpush1.msra.mxu0 %v5258
      %5294 = vmatprep.subr.mxu0 0.0
      %5295 = vmatpush1.msra.mxu0 %v5259
      %5296 = vmatprep.subr.mxu0 0.0
      %5297 = vmatpush1.msra.mxu0 %v5260
      %5298 = vmatprep.subr.mxu0 0.0
      %5299 = vmatpush1.msra.mxu0 %v5261
      %5300 = vmatprep.subr.mxu0 0.0
      %5301 = vmatpush1.msra.mxu0 %v5262
      %5302 = vmatprep.subr.mxu0 0.0
      %5303 = vmatpush1.msra.mxu0 0.0
      %5304 = vmatprep.subr.mxu0 0.0
      %5305 = vmatpush1.msra.mxu0 0.0
      %5306 = vmatprep.subr.mxu0 0.0
      %5307 = vmatpush1.msra.mxu0 0.0
      %5308 = vmatprep.subr.mxu0 0.0
      %5309 = vmatpush1.msra.mxu0 0.0
      %5310 = vmatprep.subr.mxu0 0.0
      %5311 = vmatpush1.msra.mxu0 0.0
      %5312 = vmatprep.subr.mxu0 0.0
      %5313 = vmatpush1.msra.mxu0 0.0
      %5314 = vmatprep.subr.mxu0 0.0
      %5315 = vmatpush1.msra.mxu0 0.0
      %5316 = vmatprep.subr.mxu0 0.0
      %5317 = vmatpush1.msra.mxu0 0.0
      %5318 = vmatprep.subr.mxu0 0.0
      %5319 = vmatpush1.msra.mxu0 0.0
      %5320 = vmatprep.subr.mxu0 0.0
      %5321 = vmatpush1.msra.mxu0 0.0
      %5322 = vmatprep.subr.mxu0 0.0
      %5323 = vmatpush1.msra.mxu0 0.0
      %5324 = vmatprep.subr.mxu0 0.0
      %5325 = vmatpush1.msra.mxu0 0.0
      %5326 = vmatprep.subr.mxu0 0.0
      %5327 = vmatpush1.msra.mxu0 0.0
      %5328 = vmatprep.subr.mxu0 0.0
      %5329 = vmatpush1.msra.mxu0 0.0
      %5330 = vmatprep.subr.mxu0 0.0
      %5331 = vmatpush1.msra.mxu0 0.0
      %5332 = vmatprep.subr.mxu0 0.0
      %5333 = vmatpush1.msra.mxu0 0.0
      %5334 = vmatprep.mubr.f32.mxu0 0.0
      %5335 = vmatmul.mubr.f32.gmra.mrb[0].mxu0 %v5245
      %v5336 = vpop.f32.mrb[0].mxu0
      %v5337 = vadd.f32 %v5268, %v5336
      %v5338 = vpop.f32.mrb[0].mxu0
      %5339 = vmatprep.mubr.f32.mxu0 0.0
      %5340 = vmatmul.mubr.f32.gmra.mrb[0].mxu0 %v5246
      %v5341 = vpop.f32.mrb[0].mxu0
      %v5342 = vadd.f32 %v5268, %v5341
      %v5343 = vpop.f32.mrb[0].mxu0
      %5344 = vdwg.mxu0
      %vm5345 = vcmp.gt.f32.partialorder %v5337, 0.0
      %vm5346 = vcmp.gt.f32.partialorder %v5342, 0.0
      %v5347 = vmin.f32 %v5337, 0.0
      %v5348 = vmin.f32 %v5342, 0.0
      %v5349 = vmul.f32 %v5347, 1.442695
      %v5350 = vpow.pop %v5349
      %v5351 = vmul.f32 %v5348, 1.442695
      %v5352 = vpow.pop %v5351
      %v5353 = vsub.f32 %v5350, 1.0
      %v5354 = vsub.f32 %v5352, 1.0
      %v5355 = vsel %vm5345, %v5337, %v5353
      %v5356 = vsel %vm5346, %v5342, %v5354
      %v5357 = vld [vmem:[%s9] sm:$0xff]
      %v5358 = vld [vmem:[%s9 + $0x8] sm:$0xff]
      %v5359 = vld [vmem:[%s9 + $0x10] sm:$0xff]
      %v5360 = vld [vmem:[%s9 + $0x18] sm:$0xff]
      %v5361 = vld [vmem:[%s9 + $0x20] sm:$0xff]
      %v5362 = vld [vmem:[%s9 + $0x28] sm:$0xff]
      %v5363 = vld [vmem:[%s9 + $0x30] sm:$0xff]
      %v5364 = vld [vmem:[%s9 + $0x38] sm:$0xff]
      %v5365 = vld [vmem:[%s9 + $0x40] sm:$0xff]
      %v5366 = vld [vmem:[%s9 + $0x48] sm:$0xff]
      %v5367 = vld [vmem:[%s9 + $0x50] sm:$0xff]
      %v5368 = vld [vmem:[%s9 + $0x58] sm:$0xff]
      %v5369 = vld [vmem:[%s9 + $0x60] sm:$0xff]
      %v5370 = vld [vmem:[%s9 + $0x68] sm:$0xff]
      %v5371 = vld [vmem:[%s9 + $0x70] sm:$0xff]
      %v5372 = vld [vmem:[%s9 + $0x78] sm:$0xff]
      %v5373 = vld [vmem:[%s10] sm:$0x1]
      %v5375 = vlaneseq
      %v5376 = vshrl.u32 %v5375, 7
      %v5377 = vsub.s32 0, %v5376
      %v5378 = vrot.slane %v5373, %v5377
      %5380 = vmatprep.subr.mxu0 0.0
      %5381 = vmatpush1.msra.mxu0 %v5357
      %5382 = vmatprep.subr.mxu0 0.0
      %5383 = vmatpush1.msra.mxu0 %v5358
      %5384 = vmatprep.subr.mxu0 0.0
      %5385 = vmatpush1.msra.mxu0 %v5359
      %5386 = vmatprep.subr.mxu0 0.0
      %5387 = vmatpush1.msra.mxu0 %v5360
      %5388 = vmatprep.subr.mxu0 0.0
      %5389 = vmatpush1.msra.mxu0 %v5361
      %5390 = vmatprep.subr.mxu0 0.0
      %5391 = vmatpush1.msra.mxu0 %v5362
      %5392 = vmatprep.subr.mxu0 0.0
      %5393 = vmatpush1.msra.mxu0 %v5363
      %5394 = vmatprep.subr.mxu0 0.0
      %5395 = vmatpush1.msra.mxu0 %v5364
      %5396 = vmatprep.subr.mxu0 0.0
      %5397 = vmatpush1.msra.mxu0 %v5365
      %5398 = vmatprep.subr.mxu0 0.0
      %5399 = vmatpush1.msra.mxu0 %v5366
      %5400 = vmatprep.subr.mxu0 0.0
      %5401 = vmatpush1.msra.mxu0 %v5367
      %5402 = vmatprep.subr.mxu0 0.0
      %5403 = vmatpush1.msra.mxu0 %v5368
      %5404 = vmatprep.subr.mxu0 0.0
      %5405 = vmatpush1.msra.mxu0 %v5369
      %5406 = vmatprep.subr.mxu0 0.0
      %5407 = vmatpush1.msra.mxu0 %v5370
      %5408 = vmatprep.subr.mxu0 0.0
      %5409 = vmatpush1.msra.mxu0 %v5371
      %5410 = vmatprep.subr.mxu0 0.0
      %5411 = vmatpush1.msra.mxu0 %v5372
      %5412 = vmatprep.subr.mxu0 0.0
      %5413 = vmatpush1.msra.mxu0 0.0
      %5414 = vmatprep.subr.mxu0 0.0
      %5415 = vmatpush1.msra.mxu0 0.0
      %5416 = vmatprep.subr.mxu0 0.0
      %5417 = vmatpush1.msra.mxu0 0.0
      %5418 = vmatprep.subr.mxu0 0.0
      %5419 = vmatpush1.msra.mxu0 0.0
      %5420 = vmatprep.subr.mxu0 0.0
      %5421 = vmatpush1.msra.mxu0 0.0
      %5422 = vmatprep.subr.mxu0 0.0
      %5423 = vmatpush1.msra.mxu0 0.0
      %5424 = vmatprep.subr.mxu0 0.0
      %5425 = vmatpush1.msra.mxu0 0.0
      %5426 = vmatprep.subr.mxu0 0.0
      %5427 = vmatpush1.msra.mxu0 0.0
      %5428 = vmatprep.subr.mxu0 0.0
      %5429 = vmatpush1.msra.mxu0 0.0
      %5430 = vmatprep.subr.mxu0 0.0
      %5431 = vmatpush1.msra.mxu0 0.0
      %5432 = vmatprep.subr.mxu0 0.0
      %5433 = vmatpush1.msra.mxu0 0.0
      %5434 = vmatprep.subr.mxu0 0.0
      %5435 = vmatpush1.msra.mxu0 0.0
      %5436 = vmatprep.subr.mxu0 0.0
      %5437 = vmatpush1.msra.mxu0 0.0
      %5438 = vmatprep.subr.mxu0 0.0
      %5439 = vmatpush1.msra.mxu0 0.0
      %5440 = vmatprep.subr.mxu0 0.0
      %5441 = vmatpush1.msra.mxu0 0.0
      %5442 = vmatprep.subr.mxu0 0.0
      %5443 = vmatpush1.msra.mxu0 0.0
      %5444 = vmatprep.mubr.f32.mxu0 0.0
      %5445 = vmatmul.mubr.f32.gmra.mrb[0].mxu0 %v5355
      %v5446 = vpop.f32.mrb[0].mxu0
      %v5447 = vadd.f32 %v5378, %v5446
      %v5448 = vpop.f32.mrb[0].mxu0
      %5449 = vmatprep.mubr.f32.mxu0 0.0
      %5450 = vmatmul.mubr.f32.gmra.mrb[0].mxu0 %v5356
      %v5451 = vpop.f32.mrb[0].mxu0
      %v5452 = vadd.f32 %v5378, %v5451
      %v5453 = vpop.f32.mrb[0].mxu0
      %5454 = vdwg.mxu0
      %5455 = vst [vmem:[%s386] sm:$0xff] %v5447
      %5456 = vst [vmem:[%s386 + $0x8] sm:$0xff] %v5452
      %s5457 = smul.u32 2, %s22
      %p5458 = scmp.lt.s32.totalorder %s5457, 3
      %s5459 = scalar_select %p5458, %s5457, 3
      %s5460 = smul.addr %s5459, 8
      %s5461 = scalar_lea.vmem %s11, %s5460
      // Predicated region
      $region65: #{conv_forward.1} parent=63 // pred_check
        %p5462 = pneg %p276
      $region66: #{conv_forward.1} parent=63 // pred_check_branch
        %5464 = sbr.rel (%p5462) target = $region68
      $region67: #{conv_forward.1} parent=63 // pred_region
        %s5465 = smul.u32 2, %s22
      $region68: #{conv_forward.1} parent=63 // pred_fallthru
        _
    $region64: #{conv_forward.1} parent=5 // pred_fallthru
      _
    %p5466 = scmp.le.s32.totalorder 2, %s17
    // Predicated region
    $region69: #{conv_forward.1} parent=5 // pred_check
      %p5467 = pneg %p5466
    $region70: #{conv_forward.1} parent=5 // pred_check_branch
      %5469 = sbr.rel (%p5467) target = $region72
    $region71: #{conv_forward.1} parent=5 // pred_region
      %s5470 = ssub.s32 %s17, 2
      // Predicated region
      $region73: #{conv_forward.1} parent=71 // pred_check
        %p5471 = pneg %p282
      $region74: #{conv_forward.1} parent=71 // pred_check_branch
        %5473 = sbr.rel (%p5471) target = $region76
      $region75: #{conv_forward.1} parent=71 // pred_region
        %s5474 = smul.u32 2, %s23
        %p5475 = scmp.lt.s32.totalorder %s5474, 3
        %s5476 = scalar_select %p5475, %s5474, 3
        %s5477 = smul.addr %s5476, 8
        %s5478 = scalar_lea.vmem %s11, %s5477
      $region76: #{conv_forward.1} parent=71 // pred_fallthru
        _
    $region72: #{conv_forward.1} parent=5 // pred_fallthru
      _
  $region6: #{conv_forward.1} parent=0 // loop_footer
    %s21 = sadd.s32 1, %s17
  $region7: #{conv_forward.1} parent=0 // loop_footer_branch
    %16 = sbr.rel target = $region3
  $region8: #{conv_forward.1} parent=0 // loop_exit
    _

</llo_original>
